<compile_context>
chip_gen: v5e
topology: v5e:2x2
jax: 0.10.0
libtpu: 0.0.40
codegen_flags: <defaults>
</compile_context>

<pallas_src>
import math

import jax
import jax.numpy as jnp
import numpy as np
from jax.experimental import pallas as pl
from jax.experimental.pallas import tpu as pltpu

N_LAYERS = 12
N_HEADS = 12
INPUT_DIM = N_LAYERS * N_HEADS              # 144
ARCHITECTURE = [512, 256, 128, 64, 32]
OUTPUT_DIM = 1
DROPOUT_P = 0.0                             # p=0.0 -> identity at inference


def _round_up(x, m):
    return ((x + m - 1) // m) * m


# ---------------------------------------------------------------------------
# Host-side packing helpers (pure data preparation, done once per model).
# ---------------------------------------------------------------------------
def _build_pair_select(r, p_pad, c_block, rr, dtype=jnp.float32):
    """(p_pad, c_block*rr) 0/1 matrix.  Row k of the base (p_pad, rr) part picks
    mean[a,b] + mean[b,a] for the k-th upper-triangle pair (a < b,
    torch/np.triu_indices order); tiling it c_block times along the lane axis
    lets ONE MXU matmul against the (LH, c_block*rr) accumulator fuse the
    column-block reduce + symmetrisation + pair gather.  Pad rows are zero."""
    iu, ju = jnp.triu_indices(r, k=1)
    p = int(iu.shape[0])
    rows = jnp.arange(p)
    sel = jnp.zeros((p_pad, rr), dtype)
    sel = sel.at[rows, iu * r + ju].add(1.0)
    sel = sel.at[rows, ju * r + iu].add(1.0)
    return jnp.tile(sel, (1, c_block))


def _pack_mlp_params(params, weight_dtype=jnp.bfloat16):
    """Pack all (W, b) pairs into one bf16 weight buffer + one f32 bias buffer
    so the kernel sees 2 resident DMA streams instead of 12."""
    ns = [w.shape[1] for w, _ in params]
    n_max = max(ns)                              # 512 (lane-aligned)
    k_tot = sum(w.shape[0] for w, _ in params)   # 1136 (sublane-aligned)
    w_pack = jnp.zeros((k_tot, n_max), weight_dtype)
    b_pack = jnp.zeros((_round_up(len(params), 8), n_max), jnp.float32)
    layer_slices = []
    r0 = 0
    for i, (w, b) in enumerate(params):
        k, n = w.shape
        w_pack = w_pack.at[r0:r0 + k, :n].set(w.astype(weight_dtype))
        b_pack = b_pack.at[i, :n].set(b.reshape(-1).astype(jnp.float32))
        layer_slices.append((r0, k, n))
        r0 += k
    return w_pack, b_pack, layer_slices


def _vmem_budget_bytes():
    """~75% of per-core physical VMEM (v5e/v6e: 128 MiB -> 96; v7x: 64 -> 48)."""
    try:
        cap = int(pltpu.get_tpu_info().vmem_capacity_bytes)
    except Exception:
        cap = 64 * 1024 * 1024                  # conservative (v7x) fallback
    return (cap * 3) // 4


def _pick_c_block(c, lh, rr, in_itemsize, p_pad, vmem_budget, lane_unit):
    """Largest column block s.t. (a) c_block*rr keeps the lane axis 128-aligned,
    (b) the streamed input block is ~4 MiB (>=85% of the HBM roofline per the
    tile-size sweep), (c) all c_block-scaled buffers (double-buffered input +
    f32 accumulator + resident tiled selection matrix) stay under ~60% of the
    generation-aware VMEM budget."""
    c_ceil = _round_up(max(c, lane_unit), lane_unit)
    per_col = lh * rr * (2 * in_itemsize + 4) + 2 * p_pad * rr * 4
    by_stream = max(1, (4 * 1024 * 1024) // (lh * rr * in_itemsize))
    by_vmem = max(1, int(0.6 * vmem_budget) // per_col)
    cb = min(by_stream, by_vmem, c_ceil)
    cb = max(lane_unit, (cb // lane_unit) * lane_unit)
    return min(cb, c_ceil)


# ---------------------------------------------------------------------------
# Fused kernel: streamed column accumulation -> (reduce+symm+select) matmul
#               -> MLP head, all in one pallas_call.
# ---------------------------------------------------------------------------
def _make_fused_kernel(inv_c, layer_slices):
    n_lin = len(layer_slices)

    def kernel(attn_ref, sel_ref, w_ref, b_ref, out_ref, acc_ref):
        ci = pl.program_id(0)

        @pl.when(ci == 0)
        def _init():
            acc_ref[...] = jnp.zeros_like(acc_ref)

        # Steady state: pure elementwise VPU add on a lane-dense
        # (LH, c_block*R*R) tile; upcast from the native bf16 stream in VMEM.
        # The cross-column reduce is deferred into the finalize matmul.
        acc_ref[...] += attn_ref[...].astype(jnp.float32)

        @pl.when(ci == pl.num_programs(0) - 1)
        def _finalize():
            # One small MXU matmul fuses: column reduce over the block axis,
            # symmetrisation (m + m^T) and upper-triangle pair gather:
            #   emb[p, f] = inv_C * sum_q sel_tiled[p, q] * acc[f, q]
            emb = jax.lax.dot_general(
                sel_ref[...], acc_ref[...],
                dimension_numbers=(((1,), (1,)), ((), ())),
                preferred_element_type=jnp.float32) * inv_c     # (P_pad, LH) f32
            h = emb                                             # f32 activations
            for i, (r0, k_in, n_out) in enumerate(layer_slices):
                w = w_ref[r0:r0 + k_in, 0:n_out]                # bf16 (k_in, n_out)
                b = b_ref[i:i + 1, 0:n_out]                     # f32  (1, n_out)
                h = jnp.dot(h, w, preferred_element_type=jnp.float32) + b
                if i < n_lin - 1:
                    h = jnp.maximum(h, 0.0)                     # ReLU; dropout p=0
            out_ref[...] = h.astype(out_ref.dtype)

    return kernel


def finetune_msa_forward(col_attentions, batch_size, params, *, c_block=None):
    """col_attentions: (1, L, H, C, R, R), in the backbone's native dtype."""
    attn = col_attentions[0]                                  # (L, H, C, R, R)
    l, nh, c, r, r2 = attn.shape
    assert r == r2 == batch_size
    lh, rr = l * nh, r * r

    p = r * (r - 1) // 2
    p_pad = max(8, _round_up(p, 8))

    w_pack, b_pack, layer_slices = _pack_mlp_params(params)
    out_dim = layer_slices[-1][2]

    vmem_budget = _vmem_budget_bytes()
    lane_unit = max(1, 128 // math.gcd(rr, 128))              # keeps c_block*rr % 128 == 0
    if c_block is None:
        c_block = _pick_c_block(c, lh, rr, attn.dtype.itemsize, p_pad,
                                vmem_budget, lane_unit)
    assert c_block % lane_unit == 0, "c_block must keep the lane axis 128-aligned"

    # Pad the column axis to a clean multiple of c_block (zero columns add
    # nothing to the sum; the mean divides by the true C).  No-op when aligned.
    c_pad = _round_up(c, c_block)
    attn_flat = attn.reshape(lh, c, rr)                       # free reshape
    if c_pad != c:
        attn_flat = jnp.pad(attn_flat, ((0, 0), (0, c_pad - c), (0, 0)))
    attn2d = attn_flat.reshape(lh, c_pad * rr)                # lane-dense, free reshape

    sel_tiled = _build_pair_select(r, p_pad, c_block, rr)     # (P_pad, c_block*rr) f32
    grid = (c_pad // c_block,)

    # Explicit, buffer-derived VMEM sizing (double-buffered stream + f32 acc +
    # resident sel/weights/bias), clamped to the generation-aware budget.
    in_block_bytes = lh * c_block * rr * attn2d.dtype.itemsize
    acc_bytes = lh * c_block * rr * 4
    resident_bytes = 2 * (sel_tiled.size * 4 + w_pack.size * 2
                          + b_pack.size * 4 + p_pad * out_dim * 4)
    vmem_need = 2 * in_block_bytes + acc_bytes + resident_bytes
    vmem_limit = int(min(max(2 * vmem_need, 16 * 1024 * 1024), vmem_budget))

    flops = int(lh * c_pad * rr                                       # streamed adds
                + 2 * p_pad * lh * c_block * rr                       # fused reduce/sym/select
                + 2 * p_pad * sum(k * n for _, k, n in layer_slices))  # MLP
    bytes_accessed = int(attn2d.size * attn2d.dtype.itemsize
                         + sel_tiled.size * sel_tiled.dtype.itemsize
                         + w_pack.size * w_pack.dtype.itemsize
                         + b_pack.size * b_pack.dtype.itemsize
                         + p_pad * out_dim * 4)

    out = pl.pallas_call(
        _make_fused_kernel(1.0 / float(c), layer_slices),
        out_shape=jax.ShapeDtypeStruct((p_pad, out_dim), jnp.float32),
        grid_spec=pltpu.PrefetchScalarGridSpec(
            num_scalar_prefetch=0,
            grid=grid,
            in_specs=[
                pl.BlockSpec((lh, c_block * rr), lambda k: (0, k)),   # streamed (pipelined)
                pl.BlockSpec(sel_tiled.shape, lambda k: (0, 0)),      # resident
                pl.BlockSpec(w_pack.shape, lambda k: (0, 0)),         # resident
                pl.BlockSpec(b_pack.shape, lambda k: (0, 0)),         # resident
            ],
            out_specs=pl.BlockSpec((p_pad, out_dim), lambda k: (0, 0)),
            scratch_shapes=[pltpu.VMEM((lh, c_block * rr), jnp.float32)],  # f32 accumulator
        ),
        compiler_params=pltpu.CompilerParams(
            dimension_semantics=("arbitrary",),          # column axis = reduction
            vmem_limit_bytes=vmem_limit,
        ),
        cost_estimate=pl.CostEstimate(
            flops=flops, transcendentals=0, bytes_accessed=bytes_accessed),
    )(attn2d, sel_tiled, w_pack, b_pack)

    return out[:p]                                       # drop pad rows -> (P, 1)


# ---------------------------------------------------------------------------
# Pure-JAX reference (mirrors the PyTorch module) and parameter init.
# ---------------------------------------------------------------------------
def _reference_forward(col_attentions, batch_size, params):
    attn = col_attentions[0].astype(jnp.float32)          # (L, H, C, R, R)
    mean = attn.mean(axis=2)                              # (L, H, R, R)
    symm = mean + jnp.swapaxes(mean, -1, -2)
    iu, ju = jnp.triu_indices(batch_size, k=1)
    upper = symm[..., iu, ju]                             # (L, H, P)
    l, nh = upper.shape[0], upper.shape[1]
    emb = jnp.transpose(upper, (2, 0, 1)).reshape(-1, l * nh)
    h = emb
    for i, (w, b) in enumerate(params):
        h = h @ w + b
        if i < len(params) - 1:
            h = jnp.maximum(h, 0.0)
    return h


def init_params(key):
    """nn.Linear-shaped params stored transposed as (in, out), f32."""
    sizes = [INPUT_DIM] + ARCHITECTURE + [OUTPUT_DIM]
    params = []
    for i in range(len(sizes) - 1):
        key, wk, bk = jax.random.split(key, 3)
        w = jax.random.normal(wk, (sizes[i], sizes[i + 1]), jnp.float32)
        w = w / jnp.sqrt(jnp.float32(sizes[i]))
        b = 0.01 * jax.random.normal(bk, (1, sizes[i + 1]), jnp.float32)
        params.append((w, b))
    return params


if __name__ == "__main__":
    key = jax.random.PRNGKey(0)
    k_attn, k_params = jax.random.split(key)

    R = 8     # batch_size: number of aligned sequences in the MSA family
    C = 16    # number of MSA columns (alignment length)

    # Synthetic ESM MSA-1b column attentions in the backbone's low-precision
    # dtype -- the kernel upcasts inside VMEM (halves the dominant HBM read).
    logits = jax.random.normal(k_attn, (1, N_LAYERS, N_HEADS, C, R, R), jnp.float32)
    col_attentions = jax.nn.softmax(logits, axis=-1).astype(jnp.bfloat16)

    params = init_params(k_params)
    ref = _reference_forward(col_attentions, R, params)

    # Primary config: auto-sized c_block -> single lane-dense block for C=16.
    out = finetune_msa_forward(col_attentions, R, params)
    jax.block_until_ready(out)
    assert out.shape == (R * (R - 1) // 2, OUTPUT_DIM)
    # Tolerance documents the precision contract: bf16 MLP weights (activations
    # stay f32), so deviation from the f32 reference is bf16-quantization bound.
    np.testing.assert_allclose(np.asarray(out), np.asarray(ref), rtol=0.1, atol=0.08)

    # Multi-step config: exercises the pipelined 2-step column accumulation.
    out2 = finetune_msa_forward(col_attentions, R, params, c_block=8)
    jax.block_until_ready(out2)
    np.testing.assert_allclose(np.asarray(out2), np.asarray(ref), rtol=0.1, atol=0.08)

    print("KERNEL_OK")
</pallas_src>

<mosaic_0001>
module attributes {stable_mosaic.version = 11 : i64} {
  func.func @kernel(%arg0: i32, %arg1: memref<144x1024xbf16, #tpu.memory_space<vmem>>, %arg2: memref<32x1024xf32, #tpu.memory_space<vmem>>, %arg3: memref<1136x512xbf16, #tpu.memory_space<vmem>>, %arg4: memref<8x512xf32, #tpu.memory_space<vmem>>, %arg5: memref<32x1xf32, #tpu.memory_space<vmem>>, %arg6: memref<144x1024xf32, #tpu.memory_space<vmem>>) attributes {dimension_semantics = [#tpu.dimension_semantics<arbitrary>], iteration_bounds = array<i64: 1>, scalar_prefetch = 0 : i64, scratch_operands = 1 : i64, tpu.core_type = #tpu.core_type<tc>, window_params = [{transform_indices = @transform_0, window_bounds = array<i64: 144, 1024>}, {pipeline_mode = #tpu.pipeline_mode<synchronous>, transform_indices = @transform_1, window_bounds = array<i64: 32, 1024>}, {pipeline_mode = #tpu.pipeline_mode<synchronous>, transform_indices = @transform_2, window_bounds = array<i64: 1136, 512>}, {pipeline_mode = #tpu.pipeline_mode<synchronous>, transform_indices = @transform_3, window_bounds = array<i64: 8, 512>}, {pipeline_mode = #tpu.pipeline_mode<synchronous>, transform_indices = @transform_4, window_bounds = array<i64: 32, 1>}]} {
    %c0_i32 = arith.constant 0 : i32
    %0 = arith.cmpi eq, %arg0, %c0_i32 : i32
    %1 = arith.extui %0 : i1 to i32
    %c0_i32_0 = arith.constant 0 : i32
    %2 = arith.cmpi ne, %1, %c0_i32_0 : i32
    scf.if %2 {
      %cst = arith.constant 0.000000e+00 : f32
      %11 = vector.broadcast %cst : f32 to vector<144x1024xf32>
      %c0_8 = arith.constant 0 : index
      %c0_9 = arith.constant 0 : index
      %12 = vector.load %arg6[%c0_8, %c0_9] : memref<144x1024xf32, #tpu.memory_space<vmem>>, vector<144x1024xf32>
      tpu.vector_store %arg6[%c0_8, %c0_9], %11 {strides = array<i32>} : memref<144x1024xf32, #tpu.memory_space<vmem>>, vector<144x1024xf32>,
    } else {
    }
    %c0 = arith.constant 0 : index
    %c0_1 = arith.constant 0 : index
    %3 = vector.load %arg6[%c0, %c0_1] : memref<144x1024xf32, #tpu.memory_space<vmem>>, vector<144x1024xf32>
    %c0_2 = arith.constant 0 : index
    %c0_3 = arith.constant 0 : index
    %4 = vector.load %arg1[%c0_2, %c0_3] : memref<144x1024xbf16, #tpu.memory_space<vmem>>, vector<144x1024xbf16>
    %5 = arith.extf %4 : vector<144x1024xbf16> to vector<144x1024xf32>
    %6 = arith.addf %3, %5 : vector<144x1024xf32>
    %c0_4 = arith.constant 0 : index
    %c0_5 = arith.constant 0 : index
    %7 = vector.load %arg6[%c0_4, %c0_5] : memref<144x1024xf32, #tpu.memory_space<vmem>>, vector<144x1024xf32>
    tpu.vector_store %arg6[%c0_4, %c0_5], %6 {strides = array<i32>} : memref<144x1024xf32, #tpu.memory_space<vmem>>, vector<144x1024xf32>,
    %c0_i32_6 = arith.constant 0 : i32
    %8 = arith.cmpi eq, %arg0, %c0_i32_6 : i32
    %9 = arith.extui %8 : i1 to i32
    %c0_i32_7 = arith.constant 0 : i32
    %10 = arith.cmpi ne, %9, %c0_i32_7 : i32
    scf.if %10 {
      %c0_8 = arith.constant 0 : index
      %c0_9 = arith.constant 0 : index
      %11 = vector.load %arg2[%c0_8, %c0_9] : memref<32x1024xf32, #tpu.memory_space<vmem>>, vector<32x1024xf32>
      %c0_10 = arith.constant 0 : index
      %c0_11 = arith.constant 0 : index
      %12 = vector.load %arg6[%c0_10, %c0_11] : memref<144x1024xf32, #tpu.memory_space<vmem>>, vector<144x1024xf32>
      %cst = arith.constant dense<0.000000e+00> : vector<32x144xf32>
      %13 = tpu.matmul %11, %12, %cst {dimension_numbers = #tpu.dot_dimension_numbers<[1], [1], [0], [0], [0, 0, 1, 0], [], []>} : vector<32x1024xf32>, vector<144x1024xf32>, vector<32x144xf32> -> vector<32x144xf32>
      %cst_12 = arith.constant 6.250000e-02 : f32
      %14 = vector.broadcast %cst_12 : f32 to vector<32x144xf32>
      %15 = arith.mulf %13, %14 : vector<32x144xf32>
      %c0_13 = arith.constant 0 : index
      %c0_14 = arith.constant 0 : index
      %16 = vector.load %arg3[%c0_13, %c0_14] : memref<1136x512xbf16, #tpu.memory_space<vmem>>, vector<144x512xbf16>
      %c0_15 = arith.constant 0 : index
      %c0_16 = arith.constant 0 : index
      %17 = vector.load %arg4[%c0_15, %c0_16] : memref<8x512xf32, #tpu.memory_space<vmem>>, vector<1x512xf32>
      %cst_17 = arith.constant dense<0.000000e+00> : vector<32x512xf32>
      %18 = tpu.matmul %15, %16, %cst_17 {dimension_numbers = #tpu.dot_dimension_numbers<[1], [0], [0], [1], [0, 0, 1, 1], [], []>} : vector<32x144xf32>, vector<144x512xbf16>, vector<32x512xf32> -> vector<32x512xf32>
      %19 = vector.broadcast %17 : vector<1x512xf32> to vector<32x512xf32>
      %20 = arith.addf %18, %19 : vector<32x512xf32>
      %cst_18 = arith.constant 0.000000e+00 : f32
      %21 = vector.broadcast %cst_18 : f32 to vector<32x512xf32>
      %22 = arith.maximumf %20, %21 : vector<32x512xf32>
      %c144 = arith.constant 144 : index
      %c0_19 = arith.constant 0 : index
      %23 = vector.load %arg3[%c144, %c0_19] : memref<1136x512xbf16, #tpu.memory_space<vmem>>, vector<512x256xbf16>
      %c1 = arith.constant 1 : index
      %c0_20 = arith.constant 0 : index
      %24 = vector.load %arg4[%c1, %c0_20] : memref<8x512xf32, #tpu.memory_space<vmem>>, vector<1x256xf32>
      %cst_21 = arith.constant dense<0.000000e+00> : vector<32x256xf32>
      %25 = tpu.matmul %22, %23, %cst_21 {dimension_numbers = #tpu.dot_dimension_numbers<[1], [0], [0], [1], [0, 0, 1, 1], [], []>} : vector<32x512xf32>, vector<512x256xbf16>, vector<32x256xf32> -> vector<32x256xf32>
      %26 = vector.broadcast %24 : vector<1x256xf32> to vector<32x256xf32>
      %27 = arith.addf %25, %26 : vector<32x256xf32>
      %cst_22 = arith.constant 0.000000e+00 : f32
      %28 = vector.broadcast %cst_22 : f32 to vector<32x256xf32>
      %29 = arith.maximumf %27, %28 : vector<32x256xf32>
      %c656 = arith.constant 656 : index
      %c0_23 = arith.constant 0 : index
      %30 = vector.load %arg3[%c656, %c0_23] : memref<1136x512xbf16, #tpu.memory_space<vmem>>, vector<256x128xbf16>
      %c2 = arith.constant 2 : index
      %c0_24 = arith.constant 0 : index
      %31 = vector.load %arg4[%c2, %c0_24] : memref<8x512xf32, #tpu.memory_space<vmem>>, vector<1x128xf32>
      %cst_25 = arith.constant dense<0.000000e+00> : vector<32x128xf32>
      %32 = tpu.matmul %29, %30, %cst_25 {dimension_numbers = #tpu.dot_dimension_numbers<[1], [0], [0], [1], [0, 0, 1, 1], [], []>} : vector<32x256xf32>, vector<256x128xbf16>, vector<32x128xf32> -> vector<32x128xf32>
      %33 = vector.broadcast %31 : vector<1x128xf32> to vector<32x128xf32>
      %34 = arith.addf %32, %33 : vector<32x128xf32>
      %cst_26 = arith.constant 0.000000e+00 : f32
      %35 = vector.broadcast %cst_26 : f32 to vector<32x128xf32>
      %36 = arith.maximumf %34, %35 : vector<32x128xf32>
      %c912 = arith.constant 912 : index
      %c0_27 = arith.constant 0 : index
      %37 = vector.load %arg3[%c912, %c0_27] : memref<1136x512xbf16, #tpu.memory_space<vmem>>, vector<128x64xbf16>
      %c3 = arith.constant 3 : index
      %c0_28 = arith.constant 0 : index
      %38 = vector.load %arg4[%c3, %c0_28] : memref<8x512xf32, #tpu.memory_space<vmem>>, vector<1x64xf32>
      %cst_29 = arith.constant dense<0.000000e+00> : vector<32x64xf32>
      %39 = tpu.matmul %36, %37, %cst_29 {dimension_numbers = #tpu.dot_dimension_numbers<[1], [0], [0], [1], [0, 0, 1, 1], [], []>} : vector<32x128xf32>, vector<128x64xbf16>, vector<32x64xf32> -> vector<32x64xf32>
      %40 = vector.broadcast %38 : vector<1x64xf32> to vector<32x64xf32>
      %41 = arith.addf %39, %40 : vector<32x64xf32>
      %cst_30 = arith.constant 0.000000e+00 : f32
      %42 = vector.broadcast %cst_30 : f32 to vector<32x64xf32>
      %43 = arith.maximumf %41, %42 : vector<32x64xf32>
      %c1040 = arith.constant 1040 : index
      %c0_31 = arith.constant 0 : index
      %44 = vector.load %arg3[%c1040, %c0_31] : memref<1136x512xbf16, #tpu.memory_space<vmem>>, vector<64x32xbf16>
      %c4 = arith.constant 4 : index
      %c0_32 = arith.constant 0 : index
      %45 = vector.load %arg4[%c4, %c0_32] : memref<8x512xf32, #tpu.memory_space<vmem>>, vector<1x32xf32>
      %cst_33 = arith.constant dense<0.000000e+00> : vector<32x32xf32>
      %46 = tpu.matmul %43, %44, %cst_33 {dimension_numbers = #tpu.dot_dimension_numbers<[1], [0], [0], [1], [0, 0, 1, 1], [], []>} : vector<32x64xf32>, vector<64x32xbf16>, vector<32x32xf32> -> vector<32x32xf32>
      %47 = vector.broadcast %45 : vector<1x32xf32> to vector<32x32xf32>
      %48 = arith.addf %46, %47 : vector<32x32xf32>
      %cst_34 = arith.constant 0.000000e+00 : f32
      %49 = vector.broadcast %cst_34 : f32 to vector<32x32xf32>
      %50 = arith.maximumf %48, %49 : vector<32x32xf32>
      %c1104 = arith.constant 1104 : index
      %c0_35 = arith.constant 0 : index
      %51 = vector.load %arg3[%c1104, %c0_35] : memref<1136x512xbf16, #tpu.memory_space<vmem>>, vector<32x1xbf16>
      %c5 = arith.constant 5 : index
      %c0_36 = arith.constant 0 : index
      %52 = vector.load %arg4[%c5, %c0_36] : memref<8x512xf32, #tpu.memory_space<vmem>>, vector<1x1xf32>
      %cst_37 = arith.constant dense<0.000000e+00> : vector<32x1xf32>
      %53 = tpu.matmul %50, %51, %cst_37 {dimension_numbers = #tpu.dot_dimension_numbers<[1], [0], [0], [1], [0, 0, 1, 1], [], []>} : vector<32x32xf32>, vector<32x1xbf16>, vector<32x1xf32> -> vector<32x1xf32>
      %54 = vector.broadcast %52 : vector<1x1xf32> to vector<32x1xf32>
      %55 = arith.addf %53, %54 : vector<32x1xf32>
      %c0_38 = arith.constant 0 : index
      %c0_39 = arith.constant 0 : index
      %56 = vector.load %arg5[%c0_38, %c0_39] : memref<32x1xf32, #tpu.memory_space<vmem>>, vector<32x1xf32>
      tpu.vector_store %arg5[%c0_38, %c0_39], %55 {strides = array<i32>} : memref<32x1xf32, #tpu.memory_space<vmem>>, vector<32x1xf32>,
    } else {
    }
    return
  }
  func.func @transform_0(%arg0: i32) -> (i32, i32) {
    %c0_i32 = arith.constant 0 : i32
    %c0_i32_0 = arith.constant 0 : i32
    return %c0_i32, %arg0 : i32, i32
  }
  func.func @transform_1(%arg0: i32) -> (i32, i32) {
    %c0_i32 = arith.constant 0 : i32
    %c0_i32_0 = arith.constant 0 : i32
    %c0_i32_1 = arith.constant 0 : i32
    return %c0_i32, %c0_i32_0 : i32, i32
  }
  func.func @transform_2(%arg0: i32) -> (i32, i32) {
    %c0_i32 = arith.constant 0 : i32
    %c0_i32_0 = arith.constant 0 : i32
    %c0_i32_1 = arith.constant 0 : i32
    return %c0_i32, %c0_i32_0 : i32, i32
  }
  func.func @transform_3(%arg0: i32) -> (i32, i32) {
    %c0_i32 = arith.constant 0 : i32
    %c0_i32_0 = arith.constant 0 : i32
    %c0_i32_1 = arith.constant 0 : i32
    return %c0_i32, %c0_i32_0 : i32, i32
  }
  func.func @transform_4(%arg0: i32) -> (i32, i32) {
    %c0_i32 = arith.constant 0 : i32
    %c0_i32_0 = arith.constant 0 : i32
    %c0_i32_1 = arith.constant 0 : i32
    return %c0_i32, %c0_i32_0 : i32, i32
  }
}

</mosaic_0001>

<llo_original>
// kernel: tpu_custom_call.1
$region0: #{tpu_custom_call.1}
  #allocation0 [shape = 'u32[]', space=smem, size = 0x4, offset = 0x4, fixed_abs, tag = 'smem constant byte address 0x4 - core index']
  #allocation1 [shape = 'u32[72,128]{1,0:T(1,128)}', space=vmem, size = 0x9000, scoped, tag = 'internal scratch']
  #allocation2 [shape = 'f32[144,1024]{1,0:T(8,128)}', space=vmem, size = 0x90000, scoped, tag = 'scratch operand']
  %s0 = inlined_call_operand.hbm [shape: bf16[144,1024], index: 0, kind: input, shape index: {}]
  %s1 = inlined_call_operand.hbm [shape: f32[32,1024], index: 1, kind: input, shape index: {}]
  %s2 = inlined_call_operand.hbm [shape: bf16[1136,512], index: 2, kind: input, shape index: {}]
  %s3 = inlined_call_operand.hbm [shape: f32[8,512], index: 3, kind: input, shape index: {}]
  %s4 = inlined_call_operand.vmem [shape: f32[32,1], index: 4, kind: output, shape index: {}]
  %s5 = sld [smem:[#allocation0]]
  $region50: #{tpu_custom_call.1} parent=0
    _
  %s7 = ssub.s32 1, %s5
  %s8 = scalar_select 0, %s7, %s5
  $region1: #{tpu_custom_call.1} parent=0
    #allocation3 [shape = 'u8[294912]{0}', space=vmem, size = 0x48000, scoped, tag = 'input window, operand 0, single buffered']
    #allocation4 [shape = 's32[1]{0}', space=sflag, size = 0x4, scoped, tag = 'scoped memory for tpu_custom_call.1']
    #allocation5 [shape = 'u8[131072]{0}', space=vmem, size = 0x20000, scoped, tag = 'input window, operand 1, single buffered']
    #allocation6 [shape = 's32[1]{0}', space=sflag, size = 0x4, scoped, tag = 'scoped memory for tpu_custom_call.1']
    #allocation7 [shape = 'u8[1163264]{0}', space=vmem, size = 0x11c000, scoped, tag = 'input window, operand 2, single buffered']
    #allocation8 [shape = 'u8[16384]{0}', space=vmem, size = 0x4000, scoped, tag = 'input window, operand 3, single buffered']
    #allocation9 [shape = 's32[1]{0}', space=sflag, size = 0x4, scoped, tag = 'scoped memory for tpu_custom_call.1']
    %9 = vsyncpa [#allocation4], 0
    %10 = vsyncpa [#allocation6], 0
    %11 = vsyncpa [#allocation9], 0
    // Predicated region
    $region2: #{tpu_custom_call.1} parent=1 // pred_check
      _
    $region3: #{tpu_custom_call.1} parent=1 // pred_check_branch
      %13 = sbr.rel (0) target = $region5
    $region4: #{tpu_custom_call.1} parent=1 // pred_region
      %15 = vsyncadd [#allocation4], 0
      %s16 = sshll.u32 %s0, 4
      %s17 = int_to_ptr.hbm [resolvable:$true] %s16
      %s18 = sshll.u32 [#allocation3], 4
      %s19 = int_to_ptr.vmem [resolvable:$true] %s18
      %24 = dma.hbm_to_vmem [thread:$0]  %s17, 9216, %s19, [#allocation4], 512, 512, 32
    $region5: #{tpu_custom_call.1} parent=1 // pred_fallthru
      _
    // Predicated region
    $region6: #{tpu_custom_call.1} parent=1 // pred_check
      _
    $region7: #{tpu_custom_call.1} parent=1 // pred_check_branch
      %26 = sbr.rel (0) target = $region9
    $region8: #{tpu_custom_call.1} parent=1 // pred_region
      %28 = vsyncadd [#allocation6], 0
      %s29 = sshll.u32 %s1, 4
      %s30 = int_to_ptr.hbm [resolvable:$true] %s29
      %s31 = sshll.u32 [#allocation5], 4
      %s32 = int_to_ptr.vmem [resolvable:$true] %s31
      %37 = dma.hbm_to_vmem [thread:$0]  %s30, 4096, %s32, [#allocation6], 1024, 1024, 64
    $region9: #{tpu_custom_call.1} parent=1 // pred_fallthru
      _
    // Predicated region
    $region10: #{tpu_custom_call.1} parent=1 // pred_check
      _
    $region11: #{tpu_custom_call.1} parent=1 // pred_check_branch
      %39 = sbr.rel (0) target = $region13
    $region12: #{tpu_custom_call.1} parent=1 // pred_region
      %41 = vsyncadd [#allocation6], 0
      %s42 = sshll.u32 %s2, 4
      %s43 = int_to_ptr.hbm [resolvable:$true] %s42
      %s44 = sshll.u32 [#allocation7], 4
      %s45 = int_to_ptr.vmem [resolvable:$true] %s44
      %50 = dma.hbm_to_vmem [thread:$0]  %s43, 36352, %s45, [#allocation6], 256, 256, 16
    $region13: #{tpu_custom_call.1} parent=1 // pred_fallthru
      _
    // Predicated region
    $region14: #{tpu_custom_call.1} parent=1 // pred_check
      _
    $region15: #{tpu_custom_call.1} parent=1 // pred_check_branch
      %52 = sbr.rel (0) target = $region17
    $region16: #{tpu_custom_call.1} parent=1 // pred_region
      %54 = vsyncadd [#allocation9], 0
      %s56 = sshll.u32 %s3, 4
      %s57 = int_to_ptr.hbm [resolvable:$true] %s56
      %s58 = sshll.u32 [#allocation8], 4
      %s59 = int_to_ptr.vmem [resolvable:$true] %s58
      %61 = dma.hbm_to_vmem [thread:$0]  %s57, 512, %s59, [#allocation9]
    $region17: #{tpu_custom_call.1} parent=1 // pred_fallthru
      _
    // Predicated region
    $region18: #{tpu_custom_call.1} parent=1 // pred_check
      _
    $region19: #{tpu_custom_call.1} parent=1 // pred_check_branch
      %63 = sbr.rel (0) target = $region21
    $region20: #{tpu_custom_call.1} parent=1 // pred_region
      %65 = dma.done [#allocation4], 9216
    $region21: #{tpu_custom_call.1} parent=1 // pred_fallthru
      _
    // Predicated region
    $region22: #{tpu_custom_call.1} parent=1 // pred_check
      _
    $region23: #{tpu_custom_call.1} parent=1 // pred_check_branch
      %67 = sbr.rel (0) target = $region25
    $region24: #{tpu_custom_call.1} parent=1 // pred_region
      %69 = dma.done [#allocation6], 4096
    $region25: #{tpu_custom_call.1} parent=1 // pred_fallthru
      _
    // Predicated region
    $region26: #{tpu_custom_call.1} parent=1 // pred_check
      _
    $region27: #{tpu_custom_call.1} parent=1 // pred_check_branch
      %71 = sbr.rel (0) target = $region29
    $region28: #{tpu_custom_call.1} parent=1 // pred_region
      %73 = dma.done [#allocation6], 36352
    $region29: #{tpu_custom_call.1} parent=1 // pred_fallthru
      _
    // Predicated region
    $region30: #{tpu_custom_call.1} parent=1 // pred_check
      _
    $region31: #{tpu_custom_call.1} parent=1 // pred_check_branch
      %75 = sbr.rel (0) target = $region33
    $region32: #{tpu_custom_call.1} parent=1 // pred_region
      %77 = dma.done [#allocation9], 512
    $region33: #{tpu_custom_call.1} parent=1 // pred_fallthru
      _
    %p79 = scmp.eq.s32.totalorder 0, 0
    // Predicated region
    $region34: #{tpu_custom_call.1} parent=1 // pred_check
      %p80 = pneg %p79
    $region35: #{tpu_custom_call.1} parent=1 // pred_check_branch
      %82 = sbr.rel (%p80) target = $region37
    $region36: #{tpu_custom_call.1} parent=1 // pred_region
      %83 = vst [vmem:[#allocation2] sm:$0xff] 0.0
      %84 = vst [vmem:[#allocation2 + $0x8] sm:$0xff] 0.0
      %85 = vst [vmem:[#allocation2 + $0x10] sm:$0xff] 0.0
      %86 = vst [vmem:[#allocation2 + $0x18] sm:$0xff] 0.0
      %87 = vst [vmem:[#allocation2 + $0x20] sm:$0xff] 0.0
      %88 = vst [vmem:[#allocation2 + $0x28] sm:$0xff] 0.0
      %89 = vst [vmem:[#allocation2 + $0x30] sm:$0xff] 0.0
      %90 = vst [vmem:[#allocation2 + $0x38] sm:$0xff] 0.0
      %91 = vst [vmem:[#allocation2 + $0x40] sm:$0xff] 0.0
      %92 = vst [vmem:[#allocation2 + $0x48] sm:$0xff] 0.0
      %93 = vst [vmem:[#allocation2 + $0x50] sm:$0xff] 0.0
      %94 = vst [vmem:[#allocation2 + $0x58] sm:$0xff] 0.0
      %95 = vst [vmem:[#allocation2 + $0x60] sm:$0xff] 0.0
      %96 = vst [vmem:[#allocation2 + $0x68] sm:$0xff] 0.0
      %97 = vst [vmem:[#allocation2 + $0x70] sm:$0xff] 0.0
      %98 = vst [vmem:[#allocation2 + $0x78] sm:$0xff] 0.0
      %99 = vst [vmem:[#allocation2 + $0x80] sm:$0xff] 0.0
      %100 = vst [vmem:[#allocation2 + $0x88] sm:$0xff] 0.0
      %101 = vst [vmem:[#allocation2 + $0x90] sm:$0xff] 0.0
      %102 = vst [vmem:[#allocation2 + $0x98] sm:$0xff] 0.0
      %103 = vst [vmem:[#allocation2 + $0xa0] sm:$0xff] 0.0
      %104 = vst [vmem:[#allocation2 + $0xa8] sm:$0xff] 0.0
      %105 = vst [vmem:[#allocation2 + $0xb0] sm:$0xff] 0.0
      %106 = vst [vmem:[#allocation2 + $0xb8] sm:$0xff] 0.0
      %107 = vst [vmem:[#allocation2 + $0xc0] sm:$0xff] 0.0
      %108 = vst [vmem:[#allocation2 + $0xc8] sm:$0xff] 0.0
      %109 = vst [vmem:[#allocation2 + $0xd0] sm:$0xff] 0.0
      %110 = vst [vmem:[#allocation2 + $0xd8] sm:$0xff] 0.0
      %111 = vst [vmem:[#allocation2 + $0xe0] sm:$0xff] 0.0
      %112 = vst [vmem:[#allocation2 + $0xe8] sm:$0xff] 0.0
      %113 = vst [vmem:[#allocation2 + $0xf0] sm:$0xff] 0.0
      %114 = vst [vmem:[#allocation2 + $0xf8] sm:$0xff] 0.0
      %115 = vst [vmem:[#allocation2 + $0x100] sm:$0xff] 0.0
      %116 = vst [vmem:[#allocation2 + $0x108] sm:$0xff] 0.0
      %117 = vst [vmem:[#allocation2 + $0x110] sm:$0xff] 0.0
      %118 = vst [vmem:[#allocation2 + $0x118] sm:$0xff] 0.0
      %119 = vst [vmem:[#allocation2 + $0x120] sm:$0xff] 0.0
      %120 = vst [vmem:[#allocation2 + $0x128] sm:$0xff] 0.0
      %121 = vst [vmem:[#allocation2 + $0x130] sm:$0xff] 0.0
      %122 = vst [vmem:[#allocation2 + $0x138] sm:$0xff] 0.0
      %123 = vst [vmem:[#allocation2 + $0x140] sm:$0xff] 0.0
      %124 = vst [vmem:[#allocation2 + $0x148] sm:$0xff] 0.0
      %125 = vst [vmem:[#allocation2 + $0x150] sm:$0xff] 0.0
      %126 = vst [vmem:[#allocation2 + $0x158] sm:$0xff] 0.0
      %127 = vst [vmem:[#allocation2 + $0x160] sm:$0xff] 0.0
      %128 = vst [vmem:[#allocation2 + $0x168] sm:$0xff] 0.0
      %129 = vst [vmem:[#allocation2 + $0x170] sm:$0xff] 0.0
      %130 = vst [vmem:[#allocation2 + $0x178] sm:$0xff] 0.0
      %131 = vst [vmem:[#allocation2 + $0x180] sm:$0xff] 0.0
      %132 = vst [vmem:[#allocation2 + $0x188] sm:$0xff] 0.0
      %133 = vst [vmem:[#allocation2 + $0x190] sm:$0xff] 0.0
      %134 = vst [vmem:[#allocation2 + $0x198] sm:$0xff] 0.0
      %135 = vst [vmem:[#allocation2 + $0x1a0] sm:$0xff] 0.0
      %136 = vst [vmem:[#allocation2 + $0x1a8] sm:$0xff] 0.0
      %137 = vst [vmem:[#allocation2 + $0x1b0] sm:$0xff] 0.0
      %138 = vst [vmem:[#allocation2 + $0x1b8] sm:$0xff] 0.0
      %139 = vst [vmem:[#allocation2 + $0x1c0] sm:$0xff] 0.0
      %140 = vst [vmem:[#allocation2 + $0x1c8] sm:$0xff] 0.0
      %141 = vst [vmem:[#allocation2 + $0x1d0] sm:$0xff] 0.0
      %142 = vst [vmem:[#allocation2 + $0x1d8] sm:$0xff] 0.0
      %143 = vst [vmem:[#allocation2 + $0x1e0] sm:$0xff] 0.0
      %144 = vst [vmem:[#allocation2 + $0x1e8] sm:$0xff] 0.0
      %145 = vst [vmem:[#allocation2 + $0x1f0] sm:$0xff] 0.0
      %146 = vst [vmem:[#allocation2 + $0x1f8] sm:$0xff] 0.0
      %147 = vst [vmem:[#allocation2 + $0x200] sm:$0xff] 0.0
      %148 = vst [vmem:[#allocation2 + $0x208] sm:$0xff] 0.0
      %149 = vst [vmem:[#allocation2 + $0x210] sm:$0xff] 0.0
      %150 = vst [vmem:[#allocation2 + $0x218] sm:$0xff] 0.0
      %151 = vst [vmem:[#allocation2 + $0x220] sm:$0xff] 0.0
      %152 = vst [vmem:[#allocation2 + $0x228] sm:$0xff] 0.0
      %153 = vst [vmem:[#allocation2 + $0x230] sm:$0xff] 0.0
      %154 = vst [vmem:[#allocation2 + $0x238] sm:$0xff] 0.0
      %155 = vst [vmem:[#allocation2 + $0x240] sm:$0xff] 0.0
      %156 = vst [vmem:[#allocation2 + $0x248] sm:$0xff] 0.0
      %157 = vst [vmem:[#allocation2 + $0x250] sm:$0xff] 0.0
      %158 = vst [vmem:[#allocation2 + $0x258] sm:$0xff] 0.0
      %159 = vst [vmem:[#allocation2 + $0x260] sm:$0xff] 0.0
      %160 = vst [vmem:[#allocation2 + $0x268] sm:$0xff] 0.0
      %161 = vst [vmem:[#allocation2 + $0x270] sm:$0xff] 0.0
      %162 = vst [vmem:[#allocation2 + $0x278] sm:$0xff] 0.0
      %163 = vst [vmem:[#allocation2 + $0x280] sm:$0xff] 0.0
      %164 = vst [vmem:[#allocation2 + $0x288] sm:$0xff] 0.0
      %165 = vst [vmem:[#allocation2 + $0x290] sm:$0xff] 0.0
      %166 = vst [vmem:[#allocation2 + $0x298] sm:$0xff] 0.0
      %167 = vst [vmem:[#allocation2 + $0x2a0] sm:$0xff] 0.0
      %168 = vst [vmem:[#allocation2 + $0x2a8] sm:$0xff] 0.0
      %169 = vst [vmem:[#allocation2 + $0x2b0] sm:$0xff] 0.0
      %170 = vst [vmem:[#allocation2 + $0x2b8] sm:$0xff] 0.0
      %171 = vst [vmem:[#allocation2 + $0x2c0] sm:$0xff] 0.0
      %172 = vst [vmem:[#allocation2 + $0x2c8] sm:$0xff] 0.0
      %173 = vst [vmem:[#allocation2 + $0x2d0] sm:$0xff] 0.0
      %174 = vst [vmem:[#allocation2 + $0x2d8] sm:$0xff] 0.0
      %175 = vst [vmem:[#allocation2 + $0x2e0] sm:$0xff] 0.0
      %176 = vst [vmem:[#allocation2 + $0x2e8] sm:$0xff] 0.0
      %177 = vst [vmem:[#allocation2 + $0x2f0] sm:$0xff] 0.0
      %178 = vst [vmem:[#allocation2 + $0x2f8] sm:$0xff] 0.0
      %179 = vst [vmem:[#allocation2 + $0x300] sm:$0xff] 0.0
      %180 = vst [vmem:[#allocation2 + $0x308] sm:$0xff] 0.0
      %181 = vst [vmem:[#allocation2 + $0x310] sm:$0xff] 0.0
      %182 = vst [vmem:[#allocation2 + $0x318] sm:$0xff] 0.0
      %183 = vst [vmem:[#allocation2 + $0x320] sm:$0xff] 0.0
      %184 = vst [vmem:[#allocation2 + $0x328] sm:$0xff] 0.0
      %185 = vst [vmem:[#allocation2 + $0x330] sm:$0xff] 0.0
      %186 = vst [vmem:[#allocation2 + $0x338] sm:$0xff] 0.0
      %187 = vst [vmem:[#allocation2 + $0x340] sm:$0xff] 0.0
      %188 = vst [vmem:[#allocation2 + $0x348] sm:$0xff] 0.0
      %189 = vst [vmem:[#allocation2 + $0x350] sm:$0xff] 0.0
      %190 = vst [vmem:[#allocation2 + $0x358] sm:$0xff] 0.0
      %191 = vst [vmem:[#allocation2 + $0x360] sm:$0xff] 0.0
      %192 = vst [vmem:[#allocation2 + $0x368] sm:$0xff] 0.0
      %193 = vst [vmem:[#allocation2 + $0x370] sm:$0xff] 0.0
      %194 = vst [vmem:[#allocation2 + $0x378] sm:$0xff] 0.0
      %195 = vst [vmem:[#allocation2 + $0x380] sm:$0xff] 0.0
      %196 = vst [vmem:[#allocation2 + $0x388] sm:$0xff] 0.0
      %197 = vst [vmem:[#allocation2 + $0x390] sm:$0xff] 0.0
      %198 = vst [vmem:[#allocation2 + $0x398] sm:$0xff] 0.0
      %199 = vst [vmem:[#allocation2 + $0x3a0] sm:$0xff] 0.0
      %200 = vst [vmem:[#allocation2 + $0x3a8] sm:$0xff] 0.0
      %201 = vst [vmem:[#allocation2 + $0x3b0] sm:$0xff] 0.0
      %202 = vst [vmem:[#allocation2 + $0x3b8] sm:$0xff] 0.0
      %203 = vst [vmem:[#allocation2 + $0x3c0] sm:$0xff] 0.0
      %204 = vst [vmem:[#allocation2 + $0x3c8] sm:$0xff] 0.0
      %205 = vst [vmem:[#allocation2 + $0x3d0] sm:$0xff] 0.0
      %206 = vst [vmem:[#allocation2 + $0x3d8] sm:$0xff] 0.0
      %207 = vst [vmem:[#allocation2 + $0x3e0] sm:$0xff] 0.0
      %208 = vst [vmem:[#allocation2 + $0x3e8] sm:$0xff] 0.0
      %209 = vst [vmem:[#allocation2 + $0x3f0] sm:$0xff] 0.0
      %210 = vst [vmem:[#allocation2 + $0x3f8] sm:$0xff] 0.0
      %211 = vst [vmem:[#allocation2 + $0x400] sm:$0xff] 0.0
      %212 = vst [vmem:[#allocation2 + $0x408] sm:$0xff] 0.0
      %213 = vst [vmem:[#allocation2 + $0x410] sm:$0xff] 0.0
      %214 = vst [vmem:[#allocation2 + $0x418] sm:$0xff] 0.0
      %215 = vst [vmem:[#allocation2 + $0x420] sm:$0xff] 0.0
      %216 = vst [vmem:[#allocation2 + $0x428] sm:$0xff] 0.0
      %217 = vst [vmem:[#allocation2 + $0x430] sm:$0xff] 0.0
      %218 = vst [vmem:[#allocation2 + $0x438] sm:$0xff] 0.0
      %219 = vst [vmem:[#allocation2 + $0x440] sm:$0xff] 0.0
      %220 = vst [vmem:[#allocation2 + $0x448] sm:$0xff] 0.0
      %221 = vst [vmem:[#allocation2 + $0x450] sm:$0xff] 0.0
      %222 = vst [vmem:[#allocation2 + $0x458] sm:$0xff] 0.0
      %223 = vst [vmem:[#allocation2 + $0x460] sm:$0xff] 0.0
      %224 = vst [vmem:[#allocation2 + $0x468] sm:$0xff] 0.0
      %225 = vst [vmem:[#allocation2 + $0x470] sm:$0xff] 0.0
      %226 = vst [vmem:[#allocation2 + $0x478] sm:$0xff] 0.0
    $region37: #{tpu_custom_call.1} parent=1 // pred_fallthru
      _
    %v227 = vld [vmem:[#allocation2] sm:$0xff]
    %v228 = vld [vmem:[#allocation2 + $0x8] sm:$0xff]
    %v229 = vld [vmem:[#allocation2 + $0x10] sm:$0xff]
    %v230 = vld [vmem:[#allocation2 + $0x18] sm:$0xff]
    %v231 = vld [vmem:[#allocation2 + $0x20] sm:$0xff]
    %v232 = vld [vmem:[#allocation2 + $0x28] sm:$0xff]
    %v233 = vld [vmem:[#allocation2 + $0x30] sm:$0xff]
    %v234 = vld [vmem:[#allocation2 + $0x38] sm:$0xff]
    %v235 = vld [vmem:[#allocation2 + $0x40] sm:$0xff]
    %v236 = vld [vmem:[#allocation2 + $0x48] sm:$0xff]
    %v237 = vld [vmem:[#allocation2 + $0x50] sm:$0xff]
    %v238 = vld [vmem:[#allocation2 + $0x58] sm:$0xff]
    %v239 = vld [vmem:[#allocation2 + $0x60] sm:$0xff]
    %v240 = vld [vmem:[#allocation2 + $0x68] sm:$0xff]
    %v241 = vld [vmem:[#allocation2 + $0x70] sm:$0xff]
    %v242 = vld [vmem:[#allocation2 + $0x78] sm:$0xff]
    %v243 = vld [vmem:[#allocation2 + $0x80] sm:$0xff]
    %v244 = vld [vmem:[#allocation2 + $0x88] sm:$0xff]
    %v245 = vld [vmem:[#allocation2 + $0x90] sm:$0xff]
    %v246 = vld [vmem:[#allocation2 + $0x98] sm:$0xff]
    %v247 = vld [vmem:[#allocation2 + $0xa0] sm:$0xff]
    %v248 = vld [vmem:[#allocation2 + $0xa8] sm:$0xff]
    %v249 = vld [vmem:[#allocation2 + $0xb0] sm:$0xff]
    %v250 = vld [vmem:[#allocation2 + $0xb8] sm:$0xff]
    %v251 = vld [vmem:[#allocation2 + $0xc0] sm:$0xff]
    %v252 = vld [vmem:[#allocation2 + $0xc8] sm:$0xff]
    %v253 = vld [vmem:[#allocation2 + $0xd0] sm:$0xff]
    %v254 = vld [vmem:[#allocation2 + $0xd8] sm:$0xff]
    %v255 = vld [vmem:[#allocation2 + $0xe0] sm:$0xff]
    %v256 = vld [vmem:[#allocation2 + $0xe8] sm:$0xff]
    %v257 = vld [vmem:[#allocation2 + $0xf0] sm:$0xff]
    %v258 = vld [vmem:[#allocation2 + $0xf8] sm:$0xff]
    %v259 = vld [vmem:[#allocation2 + $0x100] sm:$0xff]
    %v260 = vld [vmem:[#allocation2 + $0x108] sm:$0xff]
    %v261 = vld [vmem:[#allocation2 + $0x110] sm:$0xff]
    %v262 = vld [vmem:[#allocation2 + $0x118] sm:$0xff]
    %v263 = vld [vmem:[#allocation2 + $0x120] sm:$0xff]
    %v264 = vld [vmem:[#allocation2 + $0x128] sm:$0xff]
    %v265 = vld [vmem:[#allocation2 + $0x130] sm:$0xff]
    %v266 = vld [vmem:[#allocation2 + $0x138] sm:$0xff]
    %v267 = vld [vmem:[#allocation2 + $0x140] sm:$0xff]
    %v268 = vld [vmem:[#allocation2 + $0x148] sm:$0xff]
    %v269 = vld [vmem:[#allocation2 + $0x150] sm:$0xff]
    %v270 = vld [vmem:[#allocation2 + $0x158] sm:$0xff]
    %v271 = vld [vmem:[#allocation2 + $0x160] sm:$0xff]
    %v272 = vld [vmem:[#allocation2 + $0x168] sm:$0xff]
    %v273 = vld [vmem:[#allocation2 + $0x170] sm:$0xff]
    %v274 = vld [vmem:[#allocation2 + $0x178] sm:$0xff]
    %v275 = vld [vmem:[#allocation2 + $0x180] sm:$0xff]
    %v276 = vld [vmem:[#allocation2 + $0x188] sm:$0xff]
    %v277 = vld [vmem:[#allocation2 + $0x190] sm:$0xff]
    %v278 = vld [vmem:[#allocation2 + $0x198] sm:$0xff]
    %v279 = vld [vmem:[#allocation2 + $0x1a0] sm:$0xff]
    %v280 = vld [vmem:[#allocation2 + $0x1a8] sm:$0xff]
    %v281 = vld [vmem:[#allocation2 + $0x1b0] sm:$0xff]
    %v282 = vld [vmem:[#allocation2 + $0x1b8] sm:$0xff]
    %v283 = vld [vmem:[#allocation2 + $0x1c0] sm:$0xff]
    %v284 = vld [vmem:[#allocation2 + $0x1c8] sm:$0xff]
    %v285 = vld [vmem:[#allocation2 + $0x1d0] sm:$0xff]
    %v286 = vld [vmem:[#allocation2 + $0x1d8] sm:$0xff]
    %v287 = vld [vmem:[#allocation2 + $0x1e0] sm:$0xff]
    %v288 = vld [vmem:[#allocation2 + $0x1e8] sm:$0xff]
    %v289 = vld [vmem:[#allocation2 + $0x1f0] sm:$0xff]
    %v290 = vld [vmem:[#allocation2 + $0x1f8] sm:$0xff]
    %v291 = vld [vmem:[#allocation2 + $0x200] sm:$0xff]
    %v292 = vld [vmem:[#allocation2 + $0x208] sm:$0xff]
    %v293 = vld [vmem:[#allocation2 + $0x210] sm:$0xff]
    %v294 = vld [vmem:[#allocation2 + $0x218] sm:$0xff]
    %v295 = vld [vmem:[#allocation2 + $0x220] sm:$0xff]
    %v296 = vld [vmem:[#allocation2 + $0x228] sm:$0xff]
    %v297 = vld [vmem:[#allocation2 + $0x230] sm:$0xff]
    %v298 = vld [vmem:[#allocation2 + $0x238] sm:$0xff]
    %v299 = vld [vmem:[#allocation2 + $0x240] sm:$0xff]
    %v300 = vld [vmem:[#allocation2 + $0x248] sm:$0xff]
    %v301 = vld [vmem:[#allocation2 + $0x250] sm:$0xff]
    %v302 = vld [vmem:[#allocation2 + $0x258] sm:$0xff]
    %v303 = vld [vmem:[#allocation2 + $0x260] sm:$0xff]
    %v304 = vld [vmem:[#allocation2 + $0x268] sm:$0xff]
    %v305 = vld [vmem:[#allocation2 + $0x270] sm:$0xff]
    %v306 = vld [vmem:[#allocation2 + $0x278] sm:$0xff]
    %v307 = vld [vmem:[#allocation2 + $0x280] sm:$0xff]
    %v308 = vld [vmem:[#allocation2 + $0x288] sm:$0xff]
    %v309 = vld [vmem:[#allocation2 + $0x290] sm:$0xff]
    %v310 = vld [vmem:[#allocation2 + $0x298] sm:$0xff]
    %v311 = vld [vmem:[#allocation2 + $0x2a0] sm:$0xff]
    %v312 = vld [vmem:[#allocation2 + $0x2a8] sm:$0xff]
    %v313 = vld [vmem:[#allocation2 + $0x2b0] sm:$0xff]
    %v314 = vld [vmem:[#allocation2 + $0x2b8] sm:$0xff]
    %v315 = vld [vmem:[#allocation2 + $0x2c0] sm:$0xff]
    %v316 = vld [vmem:[#allocation2 + $0x2c8] sm:$0xff]
    %v317 = vld [vmem:[#allocation2 + $0x2d0] sm:$0xff]
    %v318 = vld [vmem:[#allocation2 + $0x2d8] sm:$0xff]
    %v319 = vld [vmem:[#allocation2 + $0x2e0] sm:$0xff]
    %v320 = vld [vmem:[#allocation2 + $0x2e8] sm:$0xff]
    %v321 = vld [vmem:[#allocation2 + $0x2f0] sm:$0xff]
    %v322 = vld [vmem:[#allocation2 + $0x2f8] sm:$0xff]
    %v323 = vld [vmem:[#allocation2 + $0x300] sm:$0xff]
    %v324 = vld [vmem:[#allocation2 + $0x308] sm:$0xff]
    %v325 = vld [vmem:[#allocation2 + $0x310] sm:$0xff]
    %v326 = vld [vmem:[#allocation2 + $0x318] sm:$0xff]
    %v327 = vld [vmem:[#allocation2 + $0x320] sm:$0xff]
    %v328 = vld [vmem:[#allocation2 + $0x328] sm:$0xff]
    %v329 = vld [vmem:[#allocation2 + $0x330] sm:$0xff]
    %v330 = vld [vmem:[#allocation2 + $0x338] sm:$0xff]
    %v331 = vld [vmem:[#allocation2 + $0x340] sm:$0xff]
    %v332 = vld [vmem:[#allocation2 + $0x348] sm:$0xff]
    %v333 = vld [vmem:[#allocation2 + $0x350] sm:$0xff]
    %v334 = vld [vmem:[#allocation2 + $0x358] sm:$0xff]
    %v335 = vld [vmem:[#allocation2 + $0x360] sm:$0xff]
    %v336 = vld [vmem:[#allocation2 + $0x368] sm:$0xff]
    %v337 = vld [vmem:[#allocation2 + $0x370] sm:$0xff]
    %v338 = vld [vmem:[#allocation2 + $0x378] sm:$0xff]
    %v339 = vld [vmem:[#allocation2 + $0x380] sm:$0xff]
    %v340 = vld [vmem:[#allocation2 + $0x388] sm:$0xff]
    %v341 = vld [vmem:[#allocation2 + $0x390] sm:$0xff]
    %v342 = vld [vmem:[#allocation2 + $0x398] sm:$0xff]
    %v343 = vld [vmem:[#allocation2 + $0x3a0] sm:$0xff]
    %v344 = vld [vmem:[#allocation2 + $0x3a8] sm:$0xff]
    %v345 = vld [vmem:[#allocation2 + $0x3b0] sm:$0xff]
    %v346 = vld [vmem:[#allocation2 + $0x3b8] sm:$0xff]
    %v347 = vld [vmem:[#allocation2 + $0x3c0] sm:$0xff]
    %v348 = vld [vmem:[#allocation2 + $0x3c8] sm:$0xff]
    %v349 = vld [vmem:[#allocation2 + $0x3d0] sm:$0xff]
    %v350 = vld [vmem:[#allocation2 + $0x3d8] sm:$0xff]
    %v351 = vld [vmem:[#allocation2 + $0x3e0] sm:$0xff]
    %v352 = vld [vmem:[#allocation2 + $0x3e8] sm:$0xff]
    %v353 = vld [vmem:[#allocation2 + $0x3f0] sm:$0xff]
    %v354 = vld [vmem:[#allocation2 + $0x3f8] sm:$0xff]
    %v355 = vld [vmem:[#allocation2 + $0x400] sm:$0xff]
    %v356 = vld [vmem:[#allocation2 + $0x408] sm:$0xff]
    %v357 = vld [vmem:[#allocation2 + $0x410] sm:$0xff]
    %v358 = vld [vmem:[#allocation2 + $0x418] sm:$0xff]
    %v359 = vld [vmem:[#allocation2 + $0x420] sm:$0xff]
    %v360 = vld [vmem:[#allocation2 + $0x428] sm:$0xff]
    %v361 = vld [vmem:[#allocation2 + $0x430] sm:$0xff]
    %v362 = vld [vmem:[#allocation2 + $0x438] sm:$0xff]
    %v363 = vld [vmem:[#allocation2 + $0x440] sm:$0xff]
    %v364 = vld [vmem:[#allocation2 + $0x448] sm:$0xff]
    %v365 = vld [vmem:[#allocation2 + $0x450] sm:$0xff]
    %v366 = vld [vmem:[#allocation2 + $0x458] sm:$0xff]
    %v367 = vld [vmem:[#allocation2 + $0x460] sm:$0xff]
    %v368 = vld [vmem:[#allocation2 + $0x468] sm:$0xff]
    %v369 = vld [vmem:[#allocation2 + $0x470] sm:$0xff]
    %v370 = vld [vmem:[#allocation2 + $0x478] sm:$0xff]
    %v371 = vld [vmem:[#allocation3] sm:$0xff]
    %v372 = vld [vmem:[#allocation3 + $0x8] sm:$0xff]
    %v373 = vld [vmem:[#allocation3 + $0x10] sm:$0xff]
    %v374 = vld [vmem:[#allocation3 + $0x18] sm:$0xff]
    %v375 = vld [vmem:[#allocation3 + $0x20] sm:$0xff]
    %v376 = vld [vmem:[#allocation3 + $0x28] sm:$0xff]
    %v377 = vld [vmem:[#allocation3 + $0x30] sm:$0xff]
    %v378 = vld [vmem:[#allocation3 + $0x38] sm:$0xff]
    %v379 = vld [vmem:[#allocation3 + $0x40] sm:$0xff]
    %v380 = vld [vmem:[#allocation3 + $0x48] sm:$0xff]
    %v381 = vld [vmem:[#allocation3 + $0x50] sm:$0xff]
    %v382 = vld [vmem:[#allocation3 + $0x58] sm:$0xff]
    %v383 = vld [vmem:[#allocation3 + $0x60] sm:$0xff]
    %v384 = vld [vmem:[#allocation3 + $0x68] sm:$0xff]
    %v385 = vld [vmem:[#allocation3 + $0x70] sm:$0xff]
    %v386 = vld [vmem:[#allocation3 + $0x78] sm:$0xff]
    %v387 = vld [vmem:[#allocation3 + $0x80] sm:$0xff]
    %v388 = vld [vmem:[#allocation3 + $0x88] sm:$0xff]
    %v389 = vld [vmem:[#allocation3 + $0x90] sm:$0xff]
    %v390 = vld [vmem:[#allocation3 + $0x98] sm:$0xff]
    %v391 = vld [vmem:[#allocation3 + $0xa0] sm:$0xff]
    %v392 = vld [vmem:[#allocation3 + $0xa8] sm:$0xff]
    %v393 = vld [vmem:[#allocation3 + $0xb0] sm:$0xff]
    %v394 = vld [vmem:[#allocation3 + $0xb8] sm:$0xff]
    %v395 = vld [vmem:[#allocation3 + $0xc0] sm:$0xff]
    %v396 = vld [vmem:[#allocation3 + $0xc8] sm:$0xff]
    %v397 = vld [vmem:[#allocation3 + $0xd0] sm:$0xff]
    %v398 = vld [vmem:[#allocation3 + $0xd8] sm:$0xff]
    %v399 = vld [vmem:[#allocation3 + $0xe0] sm:$0xff]
    %v400 = vld [vmem:[#allocation3 + $0xe8] sm:$0xff]
    %v401 = vld [vmem:[#allocation3 + $0xf0] sm:$0xff]
    %v402 = vld [vmem:[#allocation3 + $0xf8] sm:$0xff]
    %v403 = vld [vmem:[#allocation3 + $0x100] sm:$0xff]
    %v404 = vld [vmem:[#allocation3 + $0x108] sm:$0xff]
    %v405 = vld [vmem:[#allocation3 + $0x110] sm:$0xff]
    %v406 = vld [vmem:[#allocation3 + $0x118] sm:$0xff]
    %v407 = vld [vmem:[#allocation3 + $0x120] sm:$0xff]
    %v408 = vld [vmem:[#allocation3 + $0x128] sm:$0xff]
    %v409 = vld [vmem:[#allocation3 + $0x130] sm:$0xff]
    %v410 = vld [vmem:[#allocation3 + $0x138] sm:$0xff]
    %v411 = vld [vmem:[#allocation3 + $0x140] sm:$0xff]
    %v412 = vld [vmem:[#allocation3 + $0x148] sm:$0xff]
    %v413 = vld [vmem:[#allocation3 + $0x150] sm:$0xff]
    %v414 = vld [vmem:[#allocation3 + $0x158] sm:$0xff]
    %v415 = vld [vmem:[#allocation3 + $0x160] sm:$0xff]
    %v416 = vld [vmem:[#allocation3 + $0x168] sm:$0xff]
    %v417 = vld [vmem:[#allocation3 + $0x170] sm:$0xff]
    %v418 = vld [vmem:[#allocation3 + $0x178] sm:$0xff]
    %v419 = vld [vmem:[#allocation3 + $0x180] sm:$0xff]
    %v420 = vld [vmem:[#allocation3 + $0x188] sm:$0xff]
    %v421 = vld [vmem:[#allocation3 + $0x190] sm:$0xff]
    %v422 = vld [vmem:[#allocation3 + $0x198] sm:$0xff]
    %v423 = vld [vmem:[#allocation3 + $0x1a0] sm:$0xff]
    %v424 = vld [vmem:[#allocation3 + $0x1a8] sm:$0xff]
    %v425 = vld [vmem:[#allocation3 + $0x1b0] sm:$0xff]
    %v426 = vld [vmem:[#allocation3 + $0x1b8] sm:$0xff]
    %v427 = vld [vmem:[#allocation3 + $0x1c0] sm:$0xff]
    %v428 = vld [vmem:[#allocation3 + $0x1c8] sm:$0xff]
    %v429 = vld [vmem:[#allocation3 + $0x1d0] sm:$0xff]
    %v430 = vld [vmem:[#allocation3 + $0x1d8] sm:$0xff]
    %v431 = vld [vmem:[#allocation3 + $0x1e0] sm:$0xff]
    %v432 = vld [vmem:[#allocation3 + $0x1e8] sm:$0xff]
    %v433 = vld [vmem:[#allocation3 + $0x1f0] sm:$0xff]
    %v434 = vld [vmem:[#allocation3 + $0x1f8] sm:$0xff]
    %v435 = vld [vmem:[#allocation3 + $0x200] sm:$0xff]
    %v436 = vld [vmem:[#allocation3 + $0x208] sm:$0xff]
    %v437 = vld [vmem:[#allocation3 + $0x210] sm:$0xff]
    %v438 = vld [vmem:[#allocation3 + $0x218] sm:$0xff]
    %v439 = vld [vmem:[#allocation3 + $0x220] sm:$0xff]
    %v440 = vld [vmem:[#allocation3 + $0x228] sm:$0xff]
    %v441 = vld [vmem:[#allocation3 + $0x230] sm:$0xff]
    %v442 = vld [vmem:[#allocation3 + $0x238] sm:$0xff]
    %v443 = vunpack.c.l.bf16 %v371
    %v444 = vunpack.c.h.bf16 %v371
    %v445 = vunpack.c.l.bf16 %v372
    %v446 = vunpack.c.h.bf16 %v372
    %v447 = vunpack.c.l.bf16 %v373
    %v448 = vunpack.c.h.bf16 %v373
    %v449 = vunpack.c.l.bf16 %v374
    %v450 = vunpack.c.h.bf16 %v374
    %v451 = vunpack.c.l.bf16 %v375
    %v452 = vunpack.c.h.bf16 %v375
    %v453 = vunpack.c.l.bf16 %v376
    %v454 = vunpack.c.h.bf16 %v376
    %v455 = vunpack.c.l.bf16 %v377
    %v456 = vunpack.c.h.bf16 %v377
    %v457 = vunpack.c.l.bf16 %v378
    %v458 = vunpack.c.h.bf16 %v378
    %v459 = vunpack.c.l.bf16 %v379
    %v460 = vunpack.c.h.bf16 %v379
    %v461 = vunpack.c.l.bf16 %v380
    %v462 = vunpack.c.h.bf16 %v380
    %v463 = vunpack.c.l.bf16 %v381
    %v464 = vunpack.c.h.bf16 %v381
    %v465 = vunpack.c.l.bf16 %v382
    %v466 = vunpack.c.h.bf16 %v382
    %v467 = vunpack.c.l.bf16 %v383
    %v468 = vunpack.c.h.bf16 %v383
    %v469 = vunpack.c.l.bf16 %v384
    %v470 = vunpack.c.h.bf16 %v384
    %v471 = vunpack.c.l.bf16 %v385
    %v472 = vunpack.c.h.bf16 %v385
    %v473 = vunpack.c.l.bf16 %v386
    %v474 = vunpack.c.h.bf16 %v386
    %v475 = vunpack.c.l.bf16 %v387
    %v476 = vunpack.c.h.bf16 %v387
    %v477 = vunpack.c.l.bf16 %v388
    %v478 = vunpack.c.h.bf16 %v388
    %v479 = vunpack.c.l.bf16 %v389
    %v480 = vunpack.c.h.bf16 %v389
    %v481 = vunpack.c.l.bf16 %v390
    %v482 = vunpack.c.h.bf16 %v390
    %v483 = vunpack.c.l.bf16 %v391
    %v484 = vunpack.c.h.bf16 %v391
    %v485 = vunpack.c.l.bf16 %v392
    %v486 = vunpack.c.h.bf16 %v392
    %v487 = vunpack.c.l.bf16 %v393
    %v488 = vunpack.c.h.bf16 %v393
    %v489 = vunpack.c.l.bf16 %v394
    %v490 = vunpack.c.h.bf16 %v394
    %v491 = vunpack.c.l.bf16 %v395
    %v492 = vunpack.c.h.bf16 %v395
    %v493 = vunpack.c.l.bf16 %v396
    %v494 = vunpack.c.h.bf16 %v396
    %v495 = vunpack.c.l.bf16 %v397
    %v496 = vunpack.c.h.bf16 %v397
    %v497 = vunpack.c.l.bf16 %v398
    %v498 = vunpack.c.h.bf16 %v398
    %v499 = vunpack.c.l.bf16 %v399
    %v500 = vunpack.c.h.bf16 %v399
    %v501 = vunpack.c.l.bf16 %v400
    %v502 = vunpack.c.h.bf16 %v400
    %v503 = vunpack.c.l.bf16 %v401
    %v504 = vunpack.c.h.bf16 %v401
    %v505 = vunpack.c.l.bf16 %v402
    %v506 = vunpack.c.h.bf16 %v402
    %v507 = vunpack.c.l.bf16 %v403
    %v508 = vunpack.c.h.bf16 %v403
    %v509 = vunpack.c.l.bf16 %v404
    %v510 = vunpack.c.h.bf16 %v404
    %v511 = vunpack.c.l.bf16 %v405
    %v512 = vunpack.c.h.bf16 %v405
    %v513 = vunpack.c.l.bf16 %v406
    %v514 = vunpack.c.h.bf16 %v406
    %v515 = vunpack.c.l.bf16 %v407
    %v516 = vunpack.c.h.bf16 %v407
    %v517 = vunpack.c.l.bf16 %v408
    %v518 = vunpack.c.h.bf16 %v408
    %v519 = vunpack.c.l.bf16 %v409
    %v520 = vunpack.c.h.bf16 %v409
    %v521 = vunpack.c.l.bf16 %v410
    %v522 = vunpack.c.h.bf16 %v410
    %v523 = vunpack.c.l.bf16 %v411
    %v524 = vunpack.c.h.bf16 %v411
    %v525 = vunpack.c.l.bf16 %v412
    %v526 = vunpack.c.h.bf16 %v412
    %v527 = vunpack.c.l.bf16 %v413
    %v528 = vunpack.c.h.bf16 %v413
    %v529 = vunpack.c.l.bf16 %v414
    %v530 = vunpack.c.h.bf16 %v414
    %v531 = vunpack.c.l.bf16 %v415
    %v532 = vunpack.c.h.bf16 %v415
    %v533 = vunpack.c.l.bf16 %v416
    %v534 = vunpack.c.h.bf16 %v416
    %v535 = vunpack.c.l.bf16 %v417
    %v536 = vunpack.c.h.bf16 %v417
    %v537 = vunpack.c.l.bf16 %v418
    %v538 = vunpack.c.h.bf16 %v418
    %v539 = vunpack.c.l.bf16 %v419
    %v540 = vunpack.c.h.bf16 %v419
    %v541 = vunpack.c.l.bf16 %v420
    %v542 = vunpack.c.h.bf16 %v420
    %v543 = vunpack.c.l.bf16 %v421
    %v544 = vunpack.c.h.bf16 %v421
    %v545 = vunpack.c.l.bf16 %v422
    %v546 = vunpack.c.h.bf16 %v422
    %v547 = vunpack.c.l.bf16 %v423
    %v548 = vunpack.c.h.bf16 %v423
    %v549 = vunpack.c.l.bf16 %v424
    %v550 = vunpack.c.h.bf16 %v424
    %v551 = vunpack.c.l.bf16 %v425
    %v552 = vunpack.c.h.bf16 %v425
    %v553 = vunpack.c.l.bf16 %v426
    %v554 = vunpack.c.h.bf16 %v426
    %v555 = vunpack.c.l.bf16 %v427
    %v556 = vunpack.c.h.bf16 %v427
    %v557 = vunpack.c.l.bf16 %v428
    %v558 = vunpack.c.h.bf16 %v428
    %v559 = vunpack.c.l.bf16 %v429
    %v560 = vunpack.c.h.bf16 %v429
    %v561 = vunpack.c.l.bf16 %v430
    %v562 = vunpack.c.h.bf16 %v430
    %v563 = vunpack.c.l.bf16 %v431
    %v564 = vunpack.c.h.bf16 %v431
    %v565 = vunpack.c.l.bf16 %v432
    %v566 = vunpack.c.h.bf16 %v432
    %v567 = vunpack.c.l.bf16 %v433
    %v568 = vunpack.c.h.bf16 %v433
    %v569 = vunpack.c.l.bf16 %v434
    %v570 = vunpack.c.h.bf16 %v434
    %v571 = vunpack.c.l.bf16 %v435
    %v572 = vunpack.c.h.bf16 %v435
    %v573 = vunpack.c.l.bf16 %v436
    %v574 = vunpack.c.h.bf16 %v436
    %v575 = vunpack.c.l.bf16 %v437
    %v576 = vunpack.c.h.bf16 %v437
    %v577 = vunpack.c.l.bf16 %v438
    %v578 = vunpack.c.h.bf16 %v438
    %v579 = vunpack.c.l.bf16 %v439
    %v580 = vunpack.c.h.bf16 %v439
    %v581 = vunpack.c.l.bf16 %v440
    %v582 = vunpack.c.h.bf16 %v440
    %v583 = vunpack.c.l.bf16 %v441
    %v584 = vunpack.c.h.bf16 %v441
    %v585 = vunpack.c.l.bf16 %v442
    %v586 = vunpack.c.h.bf16 %v442
    %v587 = vadd.f32 %v227, %v443
    %v588 = vadd.f32 %v228, %v444
    %v589 = vadd.f32 %v229, %v445
    %v590 = vadd.f32 %v230, %v446
    %v591 = vadd.f32 %v231, %v447
    %v592 = vadd.f32 %v232, %v448
    %v593 = vadd.f32 %v233, %v449
    %v594 = vadd.f32 %v234, %v450
    %v595 = vadd.f32 %v235, %v451
    %v596 = vadd.f32 %v236, %v452
    %v597 = vadd.f32 %v237, %v453
    %v598 = vadd.f32 %v238, %v454
    %v599 = vadd.f32 %v239, %v455
    %v600 = vadd.f32 %v240, %v456
    %v601 = vadd.f32 %v241, %v457
    %v602 = vadd.f32 %v242, %v458
    %v603 = vadd.f32 %v243, %v459
    %v604 = vadd.f32 %v244, %v460
    %v605 = vadd.f32 %v245, %v461
    %v606 = vadd.f32 %v246, %v462
    %v607 = vadd.f32 %v247, %v463
    %v608 = vadd.f32 %v248, %v464
    %v609 = vadd.f32 %v249, %v465
    %v610 = vadd.f32 %v250, %v466
    %v611 = vadd.f32 %v251, %v467
    %v612 = vadd.f32 %v252, %v468
    %v613 = vadd.f32 %v253, %v469
    %v614 = vadd.f32 %v254, %v470
    %v615 = vadd.f32 %v255, %v471
    %v616 = vadd.f32 %v256, %v472
    %v617 = vadd.f32 %v257, %v473
    %v618 = vadd.f32 %v258, %v474
    %v619 = vadd.f32 %v259, %v475
    %v620 = vadd.f32 %v260, %v476
    %v621 = vadd.f32 %v261, %v477
    %v622 = vadd.f32 %v262, %v478
    %v623 = vadd.f32 %v263, %v479
    %v624 = vadd.f32 %v264, %v480
    %v625 = vadd.f32 %v265, %v481
    %v626 = vadd.f32 %v266, %v482
    %v627 = vadd.f32 %v267, %v483
    %v628 = vadd.f32 %v268, %v484
    %v629 = vadd.f32 %v269, %v485
    %v630 = vadd.f32 %v270, %v486
    %v631 = vadd.f32 %v271, %v487
    %v632 = vadd.f32 %v272, %v488
    %v633 = vadd.f32 %v273, %v489
    %v634 = vadd.f32 %v274, %v490
    %v635 = vadd.f32 %v275, %v491
    %v636 = vadd.f32 %v276, %v492
    %v637 = vadd.f32 %v277, %v493
    %v638 = vadd.f32 %v278, %v494
    %v639 = vadd.f32 %v279, %v495
    %v640 = vadd.f32 %v280, %v496
    %v641 = vadd.f32 %v281, %v497
    %v642 = vadd.f32 %v282, %v498
    %v643 = vadd.f32 %v283, %v499
    %v644 = vadd.f32 %v284, %v500
    %v645 = vadd.f32 %v285, %v501
    %v646 = vadd.f32 %v286, %v502
    %v647 = vadd.f32 %v287, %v503
    %v648 = vadd.f32 %v288, %v504
    %v649 = vadd.f32 %v289, %v505
    %v650 = vadd.f32 %v290, %v506
    %v651 = vadd.f32 %v291, %v507
    %v652 = vadd.f32 %v292, %v508
    %v653 = vadd.f32 %v293, %v509
    %v654 = vadd.f32 %v294, %v510
    %v655 = vadd.f32 %v295, %v511
    %v656 = vadd.f32 %v296, %v512
    %v657 = vadd.f32 %v297, %v513
    %v658 = vadd.f32 %v298, %v514
    %v659 = vadd.f32 %v299, %v515
    %v660 = vadd.f32 %v300, %v516
    %v661 = vadd.f32 %v301, %v517
    %v662 = vadd.f32 %v302, %v518
    %v663 = vadd.f32 %v303, %v519
    %v664 = vadd.f32 %v304, %v520
    %v665 = vadd.f32 %v305, %v521
    %v666 = vadd.f32 %v306, %v522
    %v667 = vadd.f32 %v307, %v523
    %v668 = vadd.f32 %v308, %v524
    %v669 = vadd.f32 %v309, %v525
    %v670 = vadd.f32 %v310, %v526
    %v671 = vadd.f32 %v311, %v527
    %v672 = vadd.f32 %v312, %v528
    %v673 = vadd.f32 %v313, %v529
    %v674 = vadd.f32 %v314, %v530
    %v675 = vadd.f32 %v315, %v531
    %v676 = vadd.f32 %v316, %v532
    %v677 = vadd.f32 %v317, %v533
    %v678 = vadd.f32 %v318, %v534
    %v679 = vadd.f32 %v319, %v535
    %v680 = vadd.f32 %v320, %v536
    %v681 = vadd.f32 %v321, %v537
    %v682 = vadd.f32 %v322, %v538
    %v683 = vadd.f32 %v323, %v539
    %v684 = vadd.f32 %v324, %v540
    %v685 = vadd.f32 %v325, %v541
    %v686 = vadd.f32 %v326, %v542
    %v687 = vadd.f32 %v327, %v543
    %v688 = vadd.f32 %v328, %v544
    %v689 = vadd.f32 %v329, %v545
    %v690 = vadd.f32 %v330, %v546
    %v691 = vadd.f32 %v331, %v547
    %v692 = vadd.f32 %v332, %v548
    %v693 = vadd.f32 %v333, %v549
    %v694 = vadd.f32 %v334, %v550
    %v695 = vadd.f32 %v335, %v551
    %v696 = vadd.f32 %v336, %v552
    %v697 = vadd.f32 %v337, %v553
    %v698 = vadd.f32 %v338, %v554
    %v699 = vadd.f32 %v339, %v555
    %v700 = vadd.f32 %v340, %v556
    %v701 = vadd.f32 %v341, %v557
    %v702 = vadd.f32 %v342, %v558
    %v703 = vadd.f32 %v343, %v559
    %v704 = vadd.f32 %v344, %v560
    %v705 = vadd.f32 %v345, %v561
    %v706 = vadd.f32 %v346, %v562
    %v707 = vadd.f32 %v347, %v563
    %v708 = vadd.f32 %v348, %v564
    %v709 = vadd.f32 %v349, %v565
    %v710 = vadd.f32 %v350, %v566
    %v711 = vadd.f32 %v351, %v567
    %v712 = vadd.f32 %v352, %v568
    %v713 = vadd.f32 %v353, %v569
    %v714 = vadd.f32 %v354, %v570
    %v715 = vadd.f32 %v355, %v571
    %v716 = vadd.f32 %v356, %v572
    %v717 = vadd.f32 %v357, %v573
    %v718 = vadd.f32 %v358, %v574
    %v719 = vadd.f32 %v359, %v575
    %v720 = vadd.f32 %v360, %v576
    %v721 = vadd.f32 %v361, %v577
    %v722 = vadd.f32 %v362, %v578
    %v723 = vadd.f32 %v363, %v579
    %v724 = vadd.f32 %v364, %v580
    %v725 = vadd.f32 %v365, %v581
    %v726 = vadd.f32 %v366, %v582
    %v727 = vadd.f32 %v367, %v583
    %v728 = vadd.f32 %v368, %v584
    %v729 = vadd.f32 %v369, %v585
    %v730 = vadd.f32 %v370, %v586
    %731 = vst [vmem:[#allocation2] sm:$0xff] %v587
    %732 = vst [vmem:[#allocation2 + $0x8] sm:$0xff] %v588
    %733 = vst [vmem:[#allocation2 + $0x10] sm:$0xff] %v589
    %734 = vst [vmem:[#allocation2 + $0x18] sm:$0xff] %v590
    %735 = vst [vmem:[#allocation2 + $0x20] sm:$0xff] %v591
    %736 = vst [vmem:[#allocation2 + $0x28] sm:$0xff] %v592
    %737 = vst [vmem:[#allocation2 + $0x30] sm:$0xff] %v593
    %738 = vst [vmem:[#allocation2 + $0x38] sm:$0xff] %v594
    %739 = vst [vmem:[#allocation2 + $0x40] sm:$0xff] %v595
    %740 = vst [vmem:[#allocation2 + $0x48] sm:$0xff] %v596
    %741 = vst [vmem:[#allocation2 + $0x50] sm:$0xff] %v597
    %742 = vst [vmem:[#allocation2 + $0x58] sm:$0xff] %v598
    %743 = vst [vmem:[#allocation2 + $0x60] sm:$0xff] %v599
    %744 = vst [vmem:[#allocation2 + $0x68] sm:$0xff] %v600
    %745 = vst [vmem:[#allocation2 + $0x70] sm:$0xff] %v601
    %746 = vst [vmem:[#allocation2 + $0x78] sm:$0xff] %v602
    %747 = vst [vmem:[#allocation2 + $0x80] sm:$0xff] %v603
    %748 = vst [vmem:[#allocation2 + $0x88] sm:$0xff] %v604
    %749 = vst [vmem:[#allocation2 + $0x90] sm:$0xff] %v605
    %750 = vst [vmem:[#allocation2 + $0x98] sm:$0xff] %v606
    %751 = vst [vmem:[#allocation2 + $0xa0] sm:$0xff] %v607
    %752 = vst [vmem:[#allocation2 + $0xa8] sm:$0xff] %v608
    %753 = vst [vmem:[#allocation2 + $0xb0] sm:$0xff] %v609
    %754 = vst [vmem:[#allocation2 + $0xb8] sm:$0xff] %v610
    %755 = vst [vmem:[#allocation2 + $0xc0] sm:$0xff] %v611
    %756 = vst [vmem:[#allocation2 + $0xc8] sm:$0xff] %v612
    %757 = vst [vmem:[#allocation2 + $0xd0] sm:$0xff] %v613
    %758 = vst [vmem:[#allocation2 + $0xd8] sm:$0xff] %v614
    %759 = vst [vmem:[#allocation2 + $0xe0] sm:$0xff] %v615
    %760 = vst [vmem:[#allocation2 + $0xe8] sm:$0xff] %v616
    %761 = vst [vmem:[#allocation2 + $0xf0] sm:$0xff] %v617
    %762 = vst [vmem:[#allocation2 + $0xf8] sm:$0xff] %v618
    %763 = vst [vmem:[#allocation2 + $0x100] sm:$0xff] %v619
    %764 = vst [vmem:[#allocation2 + $0x108] sm:$0xff] %v620
    %765 = vst [vmem:[#allocation2 + $0x110] sm:$0xff] %v621
    %766 = vst [vmem:[#allocation2 + $0x118] sm:$0xff] %v622
    %767 = vst [vmem:[#allocation2 + $0x120] sm:$0xff] %v623
    %768 = vst [vmem:[#allocation2 + $0x128] sm:$0xff] %v624
    %769 = vst [vmem:[#allocation2 + $0x130] sm:$0xff] %v625
    %770 = vst [vmem:[#allocation2 + $0x138] sm:$0xff] %v626
    %771 = vst [vmem:[#allocation2 + $0x140] sm:$0xff] %v627
    %772 = vst [vmem:[#allocation2 + $0x148] sm:$0xff] %v628
    %773 = vst [vmem:[#allocation2 + $0x150] sm:$0xff] %v629
    %774 = vst [vmem:[#allocation2 + $0x158] sm:$0xff] %v630
    %775 = vst [vmem:[#allocation2 + $0x160] sm:$0xff] %v631
    %776 = vst [vmem:[#allocation2 + $0x168] sm:$0xff] %v632
    %777 = vst [vmem:[#allocation2 + $0x170] sm:$0xff] %v633
    %778 = vst [vmem:[#allocation2 + $0x178] sm:$0xff] %v634
    %779 = vst [vmem:[#allocation2 + $0x180] sm:$0xff] %v635
    %780 = vst [vmem:[#allocation2 + $0x188] sm:$0xff] %v636
    %781 = vst [vmem:[#allocation2 + $0x190] sm:$0xff] %v637
    %782 = vst [vmem:[#allocation2 + $0x198] sm:$0xff] %v638
    %783 = vst [vmem:[#allocation2 + $0x1a0] sm:$0xff] %v639
    %784 = vst [vmem:[#allocation2 + $0x1a8] sm:$0xff] %v640
    %785 = vst [vmem:[#allocation2 + $0x1b0] sm:$0xff] %v641
    %786 = vst [vmem:[#allocation2 + $0x1b8] sm:$0xff] %v642
    %787 = vst [vmem:[#allocation2 + $0x1c0] sm:$0xff] %v643
    %788 = vst [vmem:[#allocation2 + $0x1c8] sm:$0xff] %v644
    %789 = vst [vmem:[#allocation2 + $0x1d0] sm:$0xff] %v645
    %790 = vst [vmem:[#allocation2 + $0x1d8] sm:$0xff] %v646
    %791 = vst [vmem:[#allocation2 + $0x1e0] sm:$0xff] %v647
    %792 = vst [vmem:[#allocation2 + $0x1e8] sm:$0xff] %v648
    %793 = vst [vmem:[#allocation2 + $0x1f0] sm:$0xff] %v649
    %794 = vst [vmem:[#allocation2 + $0x1f8] sm:$0xff] %v650
    %795 = vst [vmem:[#allocation2 + $0x200] sm:$0xff] %v651
    %796 = vst [vmem:[#allocation2 + $0x208] sm:$0xff] %v652
    %797 = vst [vmem:[#allocation2 + $0x210] sm:$0xff] %v653
    %798 = vst [vmem:[#allocation2 + $0x218] sm:$0xff] %v654
    %799 = vst [vmem:[#allocation2 + $0x220] sm:$0xff] %v655
    %800 = vst [vmem:[#allocation2 + $0x228] sm:$0xff] %v656
    %801 = vst [vmem:[#allocation2 + $0x230] sm:$0xff] %v657
    %802 = vst [vmem:[#allocation2 + $0x238] sm:$0xff] %v658
    %803 = vst [vmem:[#allocation2 + $0x240] sm:$0xff] %v659
    %804 = vst [vmem:[#allocation2 + $0x248] sm:$0xff] %v660
    %805 = vst [vmem:[#allocation2 + $0x250] sm:$0xff] %v661
    %806 = vst [vmem:[#allocation2 + $0x258] sm:$0xff] %v662
    %807 = vst [vmem:[#allocation2 + $0x260] sm:$0xff] %v663
    %808 = vst [vmem:[#allocation2 + $0x268] sm:$0xff] %v664
    %809 = vst [vmem:[#allocation2 + $0x270] sm:$0xff] %v665
    %810 = vst [vmem:[#allocation2 + $0x278] sm:$0xff] %v666
    %811 = vst [vmem:[#allocation2 + $0x280] sm:$0xff] %v667
    %812 = vst [vmem:[#allocation2 + $0x288] sm:$0xff] %v668
    %813 = vst [vmem:[#allocation2 + $0x290] sm:$0xff] %v669
    %814 = vst [vmem:[#allocation2 + $0x298] sm:$0xff] %v670
    %815 = vst [vmem:[#allocation2 + $0x2a0] sm:$0xff] %v671
    %816 = vst [vmem:[#allocation2 + $0x2a8] sm:$0xff] %v672
    %817 = vst [vmem:[#allocation2 + $0x2b0] sm:$0xff] %v673
    %818 = vst [vmem:[#allocation2 + $0x2b8] sm:$0xff] %v674
    %819 = vst [vmem:[#allocation2 + $0x2c0] sm:$0xff] %v675
    %820 = vst [vmem:[#allocation2 + $0x2c8] sm:$0xff] %v676
    %821 = vst [vmem:[#allocation2 + $0x2d0] sm:$0xff] %v677
    %822 = vst [vmem:[#allocation2 + $0x2d8] sm:$0xff] %v678
    %823 = vst [vmem:[#allocation2 + $0x2e0] sm:$0xff] %v679
    %824 = vst [vmem:[#allocation2 + $0x2e8] sm:$0xff] %v680
    %825 = vst [vmem:[#allocation2 + $0x2f0] sm:$0xff] %v681
    %826 = vst [vmem:[#allocation2 + $0x2f8] sm:$0xff] %v682
    %827 = vst [vmem:[#allocation2 + $0x300] sm:$0xff] %v683
    %828 = vst [vmem:[#allocation2 + $0x308] sm:$0xff] %v684
    %829 = vst [vmem:[#allocation2 + $0x310] sm:$0xff] %v685
    %830 = vst [vmem:[#allocation2 + $0x318] sm:$0xff] %v686
    %831 = vst [vmem:[#allocation2 + $0x320] sm:$0xff] %v687
    %832 = vst [vmem:[#allocation2 + $0x328] sm:$0xff] %v688
    %833 = vst [vmem:[#allocation2 + $0x330] sm:$0xff] %v689
    %834 = vst [vmem:[#allocation2 + $0x338] sm:$0xff] %v690
    %835 = vst [vmem:[#allocation2 + $0x340] sm:$0xff] %v691
    %836 = vst [vmem:[#allocation2 + $0x348] sm:$0xff] %v692
    %837 = vst [vmem:[#allocation2 + $0x350] sm:$0xff] %v693
    %838 = vst [vmem:[#allocation2 + $0x358] sm:$0xff] %v694
    %839 = vst [vmem:[#allocation2 + $0x360] sm:$0xff] %v695
    %840 = vst [vmem:[#allocation2 + $0x368] sm:$0xff] %v696
    %841 = vst [vmem:[#allocation2 + $0x370] sm:$0xff] %v697
    %842 = vst [vmem:[#allocation2 + $0x378] sm:$0xff] %v698
    %843 = vst [vmem:[#allocation2 + $0x380] sm:$0xff] %v699
    %844 = vst [vmem:[#allocation2 + $0x388] sm:$0xff] %v700
    %845 = vst [vmem:[#allocation2 + $0x390] sm:$0xff] %v701
    %846 = vst [vmem:[#allocation2 + $0x398] sm:$0xff] %v702
    %847 = vst [vmem:[#allocation2 + $0x3a0] sm:$0xff] %v703
    %848 = vst [vmem:[#allocation2 + $0x3a8] sm:$0xff] %v704
    %849 = vst [vmem:[#allocation2 + $0x3b0] sm:$0xff] %v705
    %850 = vst [vmem:[#allocation2 + $0x3b8] sm:$0xff] %v706
    %851 = vst [vmem:[#allocation2 + $0x3c0] sm:$0xff] %v707
    %852 = vst [vmem:[#allocation2 + $0x3c8] sm:$0xff] %v708
    %853 = vst [vmem:[#allocation2 + $0x3d0] sm:$0xff] %v709
    %854 = vst [vmem:[#allocation2 + $0x3d8] sm:$0xff] %v710
    %855 = vst [vmem:[#allocation2 + $0x3e0] sm:$0xff] %v711
    %856 = vst [vmem:[#allocation2 + $0x3e8] sm:$0xff] %v712
    %857 = vst [vmem:[#allocation2 + $0x3f0] sm:$0xff] %v713
    %858 = vst [vmem:[#allocation2 + $0x3f8] sm:$0xff] %v714
    %859 = vst [vmem:[#allocation2 + $0x400] sm:$0xff] %v715
    %860 = vst [vmem:[#allocation2 + $0x408] sm:$0xff] %v716
    %861 = vst [vmem:[#allocation2 + $0x410] sm:$0xff] %v717
    %862 = vst [vmem:[#allocation2 + $0x418] sm:$0xff] %v718
    %863 = vst [vmem:[#allocation2 + $0x420] sm:$0xff] %v719
    %864 = vst [vmem:[#allocation2 + $0x428] sm:$0xff] %v720
    %865 = vst [vmem:[#allocation2 + $0x430] sm:$0xff] %v721
    %866 = vst [vmem:[#allocation2 + $0x438] sm:$0xff] %v722
    %867 = vst [vmem:[#allocation2 + $0x440] sm:$0xff] %v723
    %868 = vst [vmem:[#allocation2 + $0x448] sm:$0xff] %v724
    %869 = vst [vmem:[#allocation2 + $0x450] sm:$0xff] %v725
    %870 = vst [vmem:[#allocation2 + $0x458] sm:$0xff] %v726
    %871 = vst [vmem:[#allocation2 + $0x460] sm:$0xff] %v727
    %872 = vst [vmem:[#allocation2 + $0x468] sm:$0xff] %v728
    %873 = vst [vmem:[#allocation2 + $0x470] sm:$0xff] %v729
    %874 = vst [vmem:[#allocation2 + $0x478] sm:$0xff] %v730
    // Predicated region
    $region38: #{tpu_custom_call.1} parent=1 // pred_check
      %p875 = pneg %p79
    $region39: #{tpu_custom_call.1} parent=1 // pred_check_branch
      %877 = sbr.rel (%p875) target = $region41
    $region40: #{tpu_custom_call.1} parent=1 // pred_region
      %v878 = vld [vmem:[#allocation5] sm:$0xff]
      %v879 = vld [vmem:[#allocation5 + $0x8] sm:$0xff]
      %v880 = vld [vmem:[#allocation5 + $0x10] sm:$0xff]
      %v881 = vld [vmem:[#allocation5 + $0x18] sm:$0xff]
      %v882 = vld [vmem:[#allocation5 + $0x20] sm:$0xff]
      %v883 = vld [vmem:[#allocation5 + $0x28] sm:$0xff]
      %v884 = vld [vmem:[#allocation5 + $0x30] sm:$0xff]
      %v885 = vld [vmem:[#allocation5 + $0x38] sm:$0xff]
      %v886 = vld [vmem:[#allocation5 + $0x40] sm:$0xff]
      %v887 = vld [vmem:[#allocation5 + $0x48] sm:$0xff]
      %v888 = vld [vmem:[#allocation5 + $0x50] sm:$0xff]
      %v889 = vld [vmem:[#allocation5 + $0x58] sm:$0xff]
      %v890 = vld [vmem:[#allocation5 + $0x60] sm:$0xff]
      %v891 = vld [vmem:[#allocation5 + $0x68] sm:$0xff]
      %v892 = vld [vmem:[#allocation5 + $0x70] sm:$0xff]
      %v893 = vld [vmem:[#allocation5 + $0x78] sm:$0xff]
      %v894 = vld [vmem:[#allocation5 + $0x80] sm:$0xff]
      %v895 = vld [vmem:[#allocation5 + $0x88] sm:$0xff]
      %v896 = vld [vmem:[#allocation5 + $0x90] sm:$0xff]
      %v897 = vld [vmem:[#allocation5 + $0x98] sm:$0xff]
      %v898 = vld [vmem:[#allocation5 + $0xa0] sm:$0xff]
      %v899 = vld [vmem:[#allocation5 + $0xa8] sm:$0xff]
      %v900 = vld [vmem:[#allocation5 + $0xb0] sm:$0xff]
      %v901 = vld [vmem:[#allocation5 + $0xb8] sm:$0xff]
      %v902 = vld [vmem:[#allocation5 + $0xc0] sm:$0xff]
      %v903 = vld [vmem:[#allocation5 + $0xc8] sm:$0xff]
      %v904 = vld [vmem:[#allocation5 + $0xd0] sm:$0xff]
      %v905 = vld [vmem:[#allocation5 + $0xd8] sm:$0xff]
      %v906 = vld [vmem:[#allocation5 + $0xe0] sm:$0xff]
      %v907 = vld [vmem:[#allocation5 + $0xe8] sm:$0xff]
      %v908 = vld [vmem:[#allocation5 + $0xf0] sm:$0xff]
      %v909 = vld [vmem:[#allocation5 + $0xf8] sm:$0xff]
      %v910 = vld [vmem:[#allocation2] sm:$0xff]
      %v911 = vld [vmem:[#allocation2 + $0x8] sm:$0xff]
      %v912 = vld [vmem:[#allocation2 + $0x10] sm:$0xff]
      %v913 = vld [vmem:[#allocation2 + $0x18] sm:$0xff]
      %v914 = vld [vmem:[#allocation2 + $0x20] sm:$0xff]
      %v915 = vld [vmem:[#allocation2 + $0x28] sm:$0xff]
      %v916 = vld [vmem:[#allocation2 + $0x30] sm:$0xff]
      %v917 = vld [vmem:[#allocation2 + $0x38] sm:$0xff]
      %v918 = vld [vmem:[#allocation2 + $0x40] sm:$0xff]
      %v919 = vld [vmem:[#allocation2 + $0x48] sm:$0xff]
      %v920 = vld [vmem:[#allocation2 + $0x50] sm:$0xff]
      %v921 = vld [vmem:[#allocation2 + $0x58] sm:$0xff]
      %v922 = vld [vmem:[#allocation2 + $0x60] sm:$0xff]
      %v923 = vld [vmem:[#allocation2 + $0x68] sm:$0xff]
      %v924 = vld [vmem:[#allocation2 + $0x70] sm:$0xff]
      %v925 = vld [vmem:[#allocation2 + $0x78] sm:$0xff]
      %v926 = vld [vmem:[#allocation2 + $0x80] sm:$0xff]
      %v927 = vld [vmem:[#allocation2 + $0x88] sm:$0xff]
      %v928 = vld [vmem:[#allocation2 + $0x90] sm:$0xff]
      %v929 = vld [vmem:[#allocation2 + $0x98] sm:$0xff]
      %v930 = vld [vmem:[#allocation2 + $0xa0] sm:$0xff]
      %v931 = vld [vmem:[#allocation2 + $0xa8] sm:$0xff]
      %v932 = vld [vmem:[#allocation2 + $0xb0] sm:$0xff]
      %v933 = vld [vmem:[#allocation2 + $0xb8] sm:$0xff]
      %v934 = vld [vmem:[#allocation2 + $0xc0] sm:$0xff]
      %v935 = vld [vmem:[#allocation2 + $0xc8] sm:$0xff]
      %v936 = vld [vmem:[#allocation2 + $0xd0] sm:$0xff]
      %v937 = vld [vmem:[#allocation2 + $0xd8] sm:$0xff]
      %v938 = vld [vmem:[#allocation2 + $0xe0] sm:$0xff]
      %v939 = vld [vmem:[#allocation2 + $0xe8] sm:$0xff]
      %v940 = vld [vmem:[#allocation2 + $0xf0] sm:$0xff]
      %v941 = vld [vmem:[#allocation2 + $0xf8] sm:$0xff]
      %v942 = vld [vmem:[#allocation2 + $0x100] sm:$0xff]
      %v943 = vld [vmem:[#allocation2 + $0x108] sm:$0xff]
      %v944 = vld [vmem:[#allocation2 + $0x110] sm:$0xff]
      %v945 = vld [vmem:[#allocation2 + $0x118] sm:$0xff]
      %v946 = vld [vmem:[#allocation2 + $0x120] sm:$0xff]
      %v947 = vld [vmem:[#allocation2 + $0x128] sm:$0xff]
      %v948 = vld [vmem:[#allocation2 + $0x130] sm:$0xff]
      %v949 = vld [vmem:[#allocation2 + $0x138] sm:$0xff]
      %v950 = vld [vmem:[#allocation2 + $0x140] sm:$0xff]
      %v951 = vld [vmem:[#allocation2 + $0x148] sm:$0xff]
      %v952 = vld [vmem:[#allocation2 + $0x150] sm:$0xff]
      %v953 = vld [vmem:[#allocation2 + $0x158] sm:$0xff]
      %v954 = vld [vmem:[#allocation2 + $0x160] sm:$0xff]
      %v955 = vld [vmem:[#allocation2 + $0x168] sm:$0xff]
      %v956 = vld [vmem:[#allocation2 + $0x170] sm:$0xff]
      %v957 = vld [vmem:[#allocation2 + $0x178] sm:$0xff]
      %v958 = vld [vmem:[#allocation2 + $0x180] sm:$0xff]
      %v959 = vld [vmem:[#allocation2 + $0x188] sm:$0xff]
      %v960 = vld [vmem:[#allocation2 + $0x190] sm:$0xff]
      %v961 = vld [vmem:[#allocation2 + $0x198] sm:$0xff]
      %v962 = vld [vmem:[#allocation2 + $0x1a0] sm:$0xff]
      %v963 = vld [vmem:[#allocation2 + $0x1a8] sm:$0xff]
      %v964 = vld [vmem:[#allocation2 + $0x1b0] sm:$0xff]
      %v965 = vld [vmem:[#allocation2 + $0x1b8] sm:$0xff]
      %v966 = vld [vmem:[#allocation2 + $0x1c0] sm:$0xff]
      %v967 = vld [vmem:[#allocation2 + $0x1c8] sm:$0xff]
      %v968 = vld [vmem:[#allocation2 + $0x1d0] sm:$0xff]
      %v969 = vld [vmem:[#allocation2 + $0x1d8] sm:$0xff]
      %v970 = vld [vmem:[#allocation2 + $0x1e0] sm:$0xff]
      %v971 = vld [vmem:[#allocation2 + $0x1e8] sm:$0xff]
      %v972 = vld [vmem:[#allocation2 + $0x1f0] sm:$0xff]
      %v973 = vld [vmem:[#allocation2 + $0x1f8] sm:$0xff]
      %v974 = vld [vmem:[#allocation2 + $0x200] sm:$0xff]
      %v975 = vld [vmem:[#allocation2 + $0x208] sm:$0xff]
      %v976 = vld [vmem:[#allocation2 + $0x210] sm:$0xff]
      %v977 = vld [vmem:[#allocation2 + $0x218] sm:$0xff]
      %v978 = vld [vmem:[#allocation2 + $0x220] sm:$0xff]
      %v979 = vld [vmem:[#allocation2 + $0x228] sm:$0xff]
      %v980 = vld [vmem:[#allocation2 + $0x230] sm:$0xff]
      %v981 = vld [vmem:[#allocation2 + $0x238] sm:$0xff]
      %v982 = vld [vmem:[#allocation2 + $0x240] sm:$0xff]
      %v983 = vld [vmem:[#allocation2 + $0x248] sm:$0xff]
      %v984 = vld [vmem:[#allocation2 + $0x250] sm:$0xff]
      %v985 = vld [vmem:[#allocation2 + $0x258] sm:$0xff]
      %v986 = vld [vmem:[#allocation2 + $0x260] sm:$0xff]
      %v987 = vld [vmem:[#allocation2 + $0x268] sm:$0xff]
      %v988 = vld [vmem:[#allocation2 + $0x270] sm:$0xff]
      %v989 = vld [vmem:[#allocation2 + $0x278] sm:$0xff]
      %v990 = vld [vmem:[#allocation2 + $0x280] sm:$0xff]
      %v991 = vld [vmem:[#allocation2 + $0x288] sm:$0xff]
      %v992 = vld [vmem:[#allocation2 + $0x290] sm:$0xff]
      %v993 = vld [vmem:[#allocation2 + $0x298] sm:$0xff]
      %v994 = vld [vmem:[#allocation2 + $0x2a0] sm:$0xff]
      %v995 = vld [vmem:[#allocation2 + $0x2a8] sm:$0xff]
      %v996 = vld [vmem:[#allocation2 + $0x2b0] sm:$0xff]
      %v997 = vld [vmem:[#allocation2 + $0x2b8] sm:$0xff]
      %v998 = vld [vmem:[#allocation2 + $0x2c0] sm:$0xff]
      %v999 = vld [vmem:[#allocation2 + $0x2c8] sm:$0xff]
      %v1000 = vld [vmem:[#allocation2 + $0x2d0] sm:$0xff]
      %v1001 = vld [vmem:[#allocation2 + $0x2d8] sm:$0xff]
      %v1002 = vld [vmem:[#allocation2 + $0x2e0] sm:$0xff]
      %v1003 = vld [vmem:[#allocation2 + $0x2e8] sm:$0xff]
      %v1004 = vld [vmem:[#allocation2 + $0x2f0] sm:$0xff]
      %v1005 = vld [vmem:[#allocation2 + $0x2f8] sm:$0xff]
      %v1006 = vld [vmem:[#allocation2 + $0x300] sm:$0xff]
      %v1007 = vld [vmem:[#allocation2 + $0x308] sm:$0xff]
      %v1008 = vld [vmem:[#allocation2 + $0x310] sm:$0xff]
      %v1009 = vld [vmem:[#allocation2 + $0x318] sm:$0xff]
      %v1010 = vld [vmem:[#allocation2 + $0x320] sm:$0xff]
      %v1011 = vld [vmem:[#allocation2 + $0x328] sm:$0xff]
      %v1012 = vld [vmem:[#allocation2 + $0x330] sm:$0xff]
      %v1013 = vld [vmem:[#allocation2 + $0x338] sm:$0xff]
      %v1014 = vld [vmem:[#allocation2 + $0x340] sm:$0xff]
      %v1015 = vld [vmem:[#allocation2 + $0x348] sm:$0xff]
      %v1016 = vld [vmem:[#allocation2 + $0x350] sm:$0xff]
      %v1017 = vld [vmem:[#allocation2 + $0x358] sm:$0xff]
      %v1018 = vld [vmem:[#allocation2 + $0x360] sm:$0xff]
      %v1019 = vld [vmem:[#allocation2 + $0x368] sm:$0xff]
      %v1020 = vld [vmem:[#allocation2 + $0x370] sm:$0xff]
      %v1021 = vld [vmem:[#allocation2 + $0x378] sm:$0xff]
      %v1022 = vld [vmem:[#allocation2 + $0x380] sm:$0xff]
      %v1023 = vld [vmem:[#allocation2 + $0x388] sm:$0xff]
      %v1024 = vld [vmem:[#allocation2 + $0x390] sm:$0xff]
      %v1025 = vld [vmem:[#allocation2 + $0x398] sm:$0xff]
      %v1026 = vld [vmem:[#allocation2 + $0x3a0] sm:$0xff]
      %v1027 = vld [vmem:[#allocation2 + $0x3a8] sm:$0xff]
      %v1028 = vld [vmem:[#allocation2 + $0x3b0] sm:$0xff]
      %v1029 = vld [vmem:[#allocation2 + $0x3b8] sm:$0xff]
      %v1030 = vld [vmem:[#allocation2 + $0x3c0] sm:$0xff]
      %v1031 = vld [vmem:[#allocation2 + $0x3c8] sm:$0xff]
      %v1032 = vld [vmem:[#allocation2 + $0x3d0] sm:$0xff]
      %v1033 = vld [vmem:[#allocation2 + $0x3d8] sm:$0xff]
      %v1034 = vld [vmem:[#allocation2 + $0x3e0] sm:$0xff]
      %v1035 = vld [vmem:[#allocation2 + $0x3e8] sm:$0xff]
      %v1036 = vld [vmem:[#allocation2 + $0x3f0] sm:$0xff]
      %v1037 = vld [vmem:[#allocation2 + $0x3f8] sm:$0xff]
      %v1038 = vld [vmem:[#allocation2 + $0x400] sm:$0xff]
      %v1039 = vld [vmem:[#allocation2 + $0x408] sm:$0xff]
      %v1040 = vld [vmem:[#allocation2 + $0x410] sm:$0xff]
      %v1041 = vld [vmem:[#allocation2 + $0x418] sm:$0xff]
      %v1042 = vld [vmem:[#allocation2 + $0x420] sm:$0xff]
      %v1043 = vld [vmem:[#allocation2 + $0x428] sm:$0xff]
      %v1044 = vld [vmem:[#allocation2 + $0x430] sm:$0xff]
      %v1045 = vld [vmem:[#allocation2 + $0x438] sm:$0xff]
      %v1046 = vld [vmem:[#allocation2 + $0x440] sm:$0xff]
      %v1047 = vld [vmem:[#allocation2 + $0x448] sm:$0xff]
      %v1048 = vld [vmem:[#allocation2 + $0x450] sm:$0xff]
      %v1049 = vld [vmem:[#allocation2 + $0x458] sm:$0xff]
      %v1050 = vld [vmem:[#allocation2 + $0x460] sm:$0xff]
      %v1051 = vld [vmem:[#allocation2 + $0x468] sm:$0xff]
      %v1052 = vld [vmem:[#allocation2 + $0x470] sm:$0xff]
      %v1053 = vld [vmem:[#allocation2 + $0x478] sm:$0xff]
      %1054 = vmatpush.xpose.msra.mxu0 %v1030
      %1055 = vmatpush.xpose.msra.mxu0 %v1022
      %1056 = vmatpush.xpose.msra.mxu0 %v1014
      %1057 = vmatpush.xpose.msra.mxu0 %v1006
      %1058 = vmatpush.xpose.msra.mxu0 %v998
      %1059 = vmatpush.xpose.msra.mxu0 %v990
      %1060 = vmatpush.xpose.msra.mxu0 %v982
      %1061 = vmatpush.xpose.msra.mxu0 %v974
      %1062 = vmatpush.xpose.msra.mxu0 %v966
      %1063 = vmatpush.xpose.msra.mxu0 %v958
      %1064 = vmatpush.xpose.msra.mxu0 %v950
      %1065 = vmatpush.xpose.msra.mxu0 %v942
      %1066 = vmatpush.xpose.msra.mxu0 %v934
      %1067 = vmatpush.xpose.msra.mxu0 %v926
      %1068 = vmatpush.xpose.msra.mxu0 %v918
      %1069 = vmatpush.xpose.msra.mxu0 %v910
      %1070 = vmatmul.f32.gmra.mxu0 %v878
      %v1071 = vpop.f32.mrf.mxu0
      %v1072 = vadd.f32 0.0, %v1071
      %1073 = vmatmul.f32.gmra.mxu0 %v886
      %v1074 = vpop.f32.mrf.mxu0
      %v1075 = vadd.f32 0.0, %v1074
      %1076 = vmatmul.f32.gmra.mxu0 %v894
      %v1077 = vpop.f32.mrf.mxu0
      %v1078 = vadd.f32 0.0, %v1077
      %1079 = vmatmul.f32.gmra.mxu0 %v902
      %v1080 = vpop.f32.mrf.mxu0
      %v1081 = vadd.f32 0.0, %v1080
      %1082 = vdwg.mxu0
      %1083 = vmatpush.xpose.msra.mxu0 %v1031
      %1084 = vmatpush.xpose.msra.mxu0 %v1023
      %1085 = vmatpush.xpose.msra.mxu0 %v1015
      %1086 = vmatpush.xpose.msra.mxu0 %v1007
      %1087 = vmatpush.xpose.msra.mxu0 %v999
      %1088 = vmatpush.xpose.msra.mxu0 %v991
      %1089 = vmatpush.xpose.msra.mxu0 %v983
      %1090 = vmatpush.xpose.msra.mxu0 %v975
      %1091 = vmatpush.xpose.msra.mxu0 %v967
      %1092 = vmatpush.xpose.msra.mxu0 %v959
      %1093 = vmatpush.xpose.msra.mxu0 %v951
      %1094 = vmatpush.xpose.msra.mxu0 %v943
      %1095 = vmatpush.xpose.msra.mxu0 %v935
      %1096 = vmatpush.xpose.msra.mxu0 %v927
      %1097 = vmatpush.xpose.msra.mxu0 %v919
      %1098 = vmatpush.xpose.msra.mxu0 %v911
      %1099 = vmatmul.f32.gmra.mxu0 %v879
      %v1100 = vpop.f32.mrf.mxu0
      %v1101 = vadd.f32 %v1072, %v1100
      %1102 = vmatmul.f32.gmra.mxu0 %v887
      %v1103 = vpop.f32.mrf.mxu0
      %v1104 = vadd.f32 %v1075, %v1103
      %1105 = vmatmul.f32.gmra.mxu0 %v895
      %v1106 = vpop.f32.mrf.mxu0
      %v1107 = vadd.f32 %v1078, %v1106
      %1108 = vmatmul.f32.gmra.mxu0 %v903
      %v1109 = vpop.f32.mrf.mxu0
      %v1110 = vadd.f32 %v1081, %v1109
      %1111 = vdwg.mxu0
      %1112 = vmatpush.xpose.msra.mxu0 %v1032
      %1113 = vmatpush.xpose.msra.mxu0 %v1024
      %1114 = vmatpush.xpose.msra.mxu0 %v1016
      %1115 = vmatpush.xpose.msra.mxu0 %v1008
      %1116 = vmatpush.xpose.msra.mxu0 %v1000
      %1117 = vmatpush.xpose.msra.mxu0 %v992
      %1118 = vmatpush.xpose.msra.mxu0 %v984
      %1119 = vmatpush.xpose.msra.mxu0 %v976
      %1120 = vmatpush.xpose.msra.mxu0 %v968
      %1121 = vmatpush.xpose.msra.mxu0 %v960
      %1122 = vmatpush.xpose.msra.mxu0 %v952
      %1123 = vmatpush.xpose.msra.mxu0 %v944
      %1124 = vmatpush.xpose.msra.mxu0 %v936
      %1125 = vmatpush.xpose.msra.mxu0 %v928
      %1126 = vmatpush.xpose.msra.mxu0 %v920
      %1127 = vmatpush.xpose.msra.mxu0 %v912
      %1128 = vmatmul.f32.gmra.mxu0 %v880
      %v1129 = vpop.f32.mrf.mxu0
      %v1130 = vadd.f32 %v1101, %v1129
      %1131 = vmatmul.f32.gmra.mxu0 %v888
      %v1132 = vpop.f32.mrf.mxu0
      %v1133 = vadd.f32 %v1104, %v1132
      %1134 = vmatmul.f32.gmra.mxu0 %v896
      %v1135 = vpop.f32.mrf.mxu0
      %v1136 = vadd.f32 %v1107, %v1135
      %1137 = vmatmul.f32.gmra.mxu0 %v904
      %v1138 = vpop.f32.mrf.mxu0
      %v1139 = vadd.f32 %v1110, %v1138
      %1140 = vdwg.mxu0
      %1141 = vmatpush.xpose.msra.mxu0 %v1033
      %1142 = vmatpush.xpose.msra.mxu0 %v1025
      %1143 = vmatpush.xpose.msra.mxu0 %v1017
      %1144 = vmatpush.xpose.msra.mxu0 %v1009
      %1145 = vmatpush.xpose.msra.mxu0 %v1001
      %1146 = vmatpush.xpose.msra.mxu0 %v993
      %1147 = vmatpush.xpose.msra.mxu0 %v985
      %1148 = vmatpush.xpose.msra.mxu0 %v977
      %1149 = vmatpush.xpose.msra.mxu0 %v969
      %1150 = vmatpush.xpose.msra.mxu0 %v961
      %1151 = vmatpush.xpose.msra.mxu0 %v953
      %1152 = vmatpush.xpose.msra.mxu0 %v945
      %1153 = vmatpush.xpose.msra.mxu0 %v937
      %1154 = vmatpush.xpose.msra.mxu0 %v929
      %1155 = vmatpush.xpose.msra.mxu0 %v921
      %1156 = vmatpush.xpose.msra.mxu0 %v913
      %1157 = vmatmul.f32.gmra.mxu0 %v881
      %v1158 = vpop.f32.mrf.mxu0
      %v1159 = vadd.f32 %v1130, %v1158
      %1160 = vmatmul.f32.gmra.mxu0 %v889
      %v1161 = vpop.f32.mrf.mxu0
      %v1162 = vadd.f32 %v1133, %v1161
      %1163 = vmatmul.f32.gmra.mxu0 %v897
      %v1164 = vpop.f32.mrf.mxu0
      %v1165 = vadd.f32 %v1136, %v1164
      %1166 = vmatmul.f32.gmra.mxu0 %v905
      %v1167 = vpop.f32.mrf.mxu0
      %v1168 = vadd.f32 %v1139, %v1167
      %1169 = vdwg.mxu0
      %1170 = vmatpush.xpose.msra.mxu0 %v1034
      %1171 = vmatpush.xpose.msra.mxu0 %v1026
      %1172 = vmatpush.xpose.msra.mxu0 %v1018
      %1173 = vmatpush.xpose.msra.mxu0 %v1010
      %1174 = vmatpush.xpose.msra.mxu0 %v1002
      %1175 = vmatpush.xpose.msra.mxu0 %v994
      %1176 = vmatpush.xpose.msra.mxu0 %v986
      %1177 = vmatpush.xpose.msra.mxu0 %v978
      %1178 = vmatpush.xpose.msra.mxu0 %v970
      %1179 = vmatpush.xpose.msra.mxu0 %v962
      %1180 = vmatpush.xpose.msra.mxu0 %v954
      %1181 = vmatpush.xpose.msra.mxu0 %v946
      %1182 = vmatpush.xpose.msra.mxu0 %v938
      %1183 = vmatpush.xpose.msra.mxu0 %v930
      %1184 = vmatpush.xpose.msra.mxu0 %v922
      %1185 = vmatpush.xpose.msra.mxu0 %v914
      %1186 = vmatmul.f32.gmra.mxu0 %v882
      %v1187 = vpop.f32.mrf.mxu0
      %v1188 = vadd.f32 %v1159, %v1187
      %1189 = vmatmul.f32.gmra.mxu0 %v890
      %v1190 = vpop.f32.mrf.mxu0
      %v1191 = vadd.f32 %v1162, %v1190
      %1192 = vmatmul.f32.gmra.mxu0 %v898
      %v1193 = vpop.f32.mrf.mxu0
      %v1194 = vadd.f32 %v1165, %v1193
      %1195 = vmatmul.f32.gmra.mxu0 %v906
      %v1196 = vpop.f32.mrf.mxu0
      %v1197 = vadd.f32 %v1168, %v1196
      %1198 = vdwg.mxu0
      %1199 = vmatpush.xpose.msra.mxu0 %v1035
      %1200 = vmatpush.xpose.msra.mxu0 %v1027
      %1201 = vmatpush.xpose.msra.mxu0 %v1019
      %1202 = vmatpush.xpose.msra.mxu0 %v1011
      %1203 = vmatpush.xpose.msra.mxu0 %v1003
      %1204 = vmatpush.xpose.msra.mxu0 %v995
      %1205 = vmatpush.xpose.msra.mxu0 %v987
      %1206 = vmatpush.xpose.msra.mxu0 %v979
      %1207 = vmatpush.xpose.msra.mxu0 %v971
      %1208 = vmatpush.xpose.msra.mxu0 %v963
      %1209 = vmatpush.xpose.msra.mxu0 %v955
      %1210 = vmatpush.xpose.msra.mxu0 %v947
      %1211 = vmatpush.xpose.msra.mxu0 %v939
      %1212 = vmatpush.xpose.msra.mxu0 %v931
      %1213 = vmatpush.xpose.msra.mxu0 %v923
      %1214 = vmatpush.xpose.msra.mxu0 %v915
      %1215 = vmatmul.f32.gmra.mxu0 %v883
      %v1216 = vpop.f32.mrf.mxu0
      %v1217 = vadd.f32 %v1188, %v1216
      %1218 = vmatmul.f32.gmra.mxu0 %v891
      %v1219 = vpop.f32.mrf.mxu0
      %v1220 = vadd.f32 %v1191, %v1219
      %1221 = vmatmul.f32.gmra.mxu0 %v899
      %v1222 = vpop.f32.mrf.mxu0
      %v1223 = vadd.f32 %v1194, %v1222
      %1224 = vmatmul.f32.gmra.mxu0 %v907
      %v1225 = vpop.f32.mrf.mxu0
      %v1226 = vadd.f32 %v1197, %v1225
      %1227 = vdwg.mxu0
      %1228 = vmatpush.xpose.msra.mxu0 %v1036
      %1229 = vmatpush.xpose.msra.mxu0 %v1028
      %1230 = vmatpush.xpose.msra.mxu0 %v1020
      %1231 = vmatpush.xpose.msra.mxu0 %v1012
      %1232 = vmatpush.xpose.msra.mxu0 %v1004
      %1233 = vmatpush.xpose.msra.mxu0 %v996
      %1234 = vmatpush.xpose.msra.mxu0 %v988
      %1235 = vmatpush.xpose.msra.mxu0 %v980
      %1236 = vmatpush.xpose.msra.mxu0 %v972
      %1237 = vmatpush.xpose.msra.mxu0 %v964
      %1238 = vmatpush.xpose.msra.mxu0 %v956
      %1239 = vmatpush.xpose.msra.mxu0 %v948
      %1240 = vmatpush.xpose.msra.mxu0 %v940
      %1241 = vmatpush.xpose.msra.mxu0 %v932
      %1242 = vmatpush.xpose.msra.mxu0 %v924
      %1243 = vmatpush.xpose.msra.mxu0 %v916
      %1244 = vmatmul.f32.gmra.mxu0 %v884
      %v1245 = vpop.f32.mrf.mxu0
      %v1246 = vadd.f32 %v1217, %v1245
      %1247 = vmatmul.f32.gmra.mxu0 %v892
      %v1248 = vpop.f32.mrf.mxu0
      %v1249 = vadd.f32 %v1220, %v1248
      %1250 = vmatmul.f32.gmra.mxu0 %v900
      %v1251 = vpop.f32.mrf.mxu0
      %v1252 = vadd.f32 %v1223, %v1251
      %1253 = vmatmul.f32.gmra.mxu0 %v908
      %v1254 = vpop.f32.mrf.mxu0
      %v1255 = vadd.f32 %v1226, %v1254
      %1256 = vdwg.mxu0
      %1257 = vmatpush.xpose.msra.mxu0 %v1037
      %1258 = vmatpush.xpose.msra.mxu0 %v1029
      %1259 = vmatpush.xpose.msra.mxu0 %v1021
      %1260 = vmatpush.xpose.msra.mxu0 %v1013
      %1261 = vmatpush.xpose.msra.mxu0 %v1005
      %1262 = vmatpush.xpose.msra.mxu0 %v997
      %1263 = vmatpush.xpose.msra.mxu0 %v989
      %1264 = vmatpush.xpose.msra.mxu0 %v981
      %1265 = vmatpush.xpose.msra.mxu0 %v973
      %1266 = vmatpush.xpose.msra.mxu0 %v965
      %1267 = vmatpush.xpose.msra.mxu0 %v957
      %1268 = vmatpush.xpose.msra.mxu0 %v949
      %1269 = vmatpush.xpose.msra.mxu0 %v941
      %1270 = vmatpush.xpose.msra.mxu0 %v933
      %1271 = vmatpush.xpose.msra.mxu0 %v925
      %1272 = vmatpush.xpose.msra.mxu0 %v917
      %1273 = vmatmul.f32.gmra.mxu0 %v885
      %v1274 = vpop.f32.mrf.mxu0
      %v1275 = vadd.f32 %v1246, %v1274
      %1276 = vmatmul.f32.gmra.mxu0 %v893
      %v1277 = vpop.f32.mrf.mxu0
      %v1278 = vadd.f32 %v1249, %v1277
      %1279 = vmatmul.f32.gmra.mxu0 %v901
      %v1280 = vpop.f32.mrf.mxu0
      %v1281 = vadd.f32 %v1252, %v1280
      %1282 = vmatmul.f32.gmra.mxu0 %v909
      %v1283 = vpop.f32.mrf.mxu0
      %v1284 = vadd.f32 %v1255, %v1283
      %1285 = vdwg.mxu0
      %1286 = vmatpush.xpose.msra.mxu0 0.0
      %1287 = vmatpush.xpose.msra.mxu0 0.0
      %1288 = vmatpush.xpose.msra.mxu0 0.0
      %1289 = vmatpush.xpose.msra.mxu0 0.0
      %1290 = vmatpush.xpose.msra.mxu0 0.0
      %1291 = vmatpush.xpose.msra.mxu0 0.0
      %1292 = vmatpush.xpose.msra.mxu0 0.0
      %1293 = vmatpush.xpose.msra.mxu0 0.0
      %1294 = vmatpush.xpose.msra.mxu0 0.0
      %1295 = vmatpush.xpose.msra.mxu0 0.0
      %1296 = vmatpush.xpose.msra.mxu0 0.0
      %1297 = vmatpush.xpose.msra.mxu0 0.0
      %1298 = vmatpush.xpose.msra.mxu0 0.0
      %1299 = vmatpush.xpose.msra.mxu0 0.0
      %1300 = vmatpush.xpose.msra.mxu0 %v1046
      %1301 = vmatpush.xpose.msra.mxu0 %v1038
      %1302 = vmatmul.f32.gmra.mxu0 %v878
      %v1303 = vpop.f32.mrf.mxu0
      %v1304 = vadd.f32 0.0, %v1303
      %1305 = vmatmul.f32.gmra.mxu0 %v886
      %v1306 = vpop.f32.mrf.mxu0
      %v1307 = vadd.f32 0.0, %v1306
      %1308 = vmatmul.f32.gmra.mxu0 %v894
      %v1309 = vpop.f32.mrf.mxu0
      %v1310 = vadd.f32 0.0, %v1309
      %1311 = vmatmul.f32.gmra.mxu0 %v902
      %v1312 = vpop.f32.mrf.mxu0
      %v1313 = vadd.f32 0.0, %v1312
      %1314 = vdwg.mxu0
      %1315 = vmatpush.xpose.msra.mxu0 0.0
      %1316 = vmatpush.xpose.msra.mxu0 0.0
      %1317 = vmatpush.xpose.msra.mxu0 0.0
      %1318 = vmatpush.xpose.msra.mxu0 0.0
      %1319 = vmatpush.xpose.msra.mxu0 0.0
      %1320 = vmatpush.xpose.msra.mxu0 0.0
      %1321 = vmatpush.xpose.msra.mxu0 0.0
      %1322 = vmatpush.xpose.msra.mxu0 0.0
      %1323 = vmatpush.xpose.msra.mxu0 0.0
      %1324 = vmatpush.xpose.msra.mxu0 0.0
      %1325 = vmatpush.xpose.msra.mxu0 0.0
      %1326 = vmatpush.xpose.msra.mxu0 0.0
      %1327 = vmatpush.xpose.msra.mxu0 0.0
      %1328 = vmatpush.xpose.msra.mxu0 0.0
      %1329 = vmatpush.xpose.msra.mxu0 %v1047
      %1330 = vmatpush.xpose.msra.mxu0 %v1039
      %1331 = vmatmul.f32.gmra.mxu0 %v879
      %v1332 = vpop.f32.mrf.mxu0
      %v1333 = vadd.f32 %v1304, %v1332
      %1334 = vmatmul.f32.gmra.mxu0 %v887
      %v1335 = vpop.f32.mrf.mxu0
      %v1336 = vadd.f32 %v1307, %v1335
      %1337 = vmatmul.f32.gmra.mxu0 %v895
      %v1338 = vpop.f32.mrf.mxu0
      %v1339 = vadd.f32 %v1310, %v1338
      %1340 = vmatmul.f32.gmra.mxu0 %v903
      %v1341 = vpop.f32.mrf.mxu0
      %v1342 = vadd.f32 %v1313, %v1341
      %1343 = vdwg.mxu0
      %1344 = vmatpush.xpose.msra.mxu0 0.0
      %1345 = vmatpush.xpose.msra.mxu0 0.0
      %1346 = vmatpush.xpose.msra.mxu0 0.0
      %1347 = vmatpush.xpose.msra.mxu0 0.0
      %1348 = vmatpush.xpose.msra.mxu0 0.0
      %1349 = vmatpush.xpose.msra.mxu0 0.0
      %1350 = vmatpush.xpose.msra.mxu0 0.0
      %1351 = vmatpush.xpose.msra.mxu0 0.0
      %1352 = vmatpush.xpose.msra.mxu0 0.0
      %1353 = vmatpush.xpose.msra.mxu0 0.0
      %1354 = vmatpush.xpose.msra.mxu0 0.0
      %1355 = vmatpush.xpose.msra.mxu0 0.0
      %1356 = vmatpush.xpose.msra.mxu0 0.0
      %1357 = vmatpush.xpose.msra.mxu0 0.0
      %1358 = vmatpush.xpose.msra.mxu0 %v1048
      %1359 = vmatpush.xpose.msra.mxu0 %v1040
      %1360 = vmatmul.f32.gmra.mxu0 %v880
      %v1361 = vpop.f32.mrf.mxu0
      %v1362 = vadd.f32 %v1333, %v1361
      %1363 = vmatmul.f32.gmra.mxu0 %v888
      %v1364 = vpop.f32.mrf.mxu0
      %v1365 = vadd.f32 %v1336, %v1364
      %1366 = vmatmul.f32.gmra.mxu0 %v896
      %v1367 = vpop.f32.mrf.mxu0
      %v1368 = vadd.f32 %v1339, %v1367
      %1369 = vmatmul.f32.gmra.mxu0 %v904
      %v1370 = vpop.f32.mrf.mxu0
      %v1371 = vadd.f32 %v1342, %v1370
      %1372 = vdwg.mxu0
      %1373 = vmatpush.xpose.msra.mxu0 0.0
      %1374 = vmatpush.xpose.msra.mxu0 0.0
      %1375 = vmatpush.xpose.msra.mxu0 0.0
      %1376 = vmatpush.xpose.msra.mxu0 0.0
      %1377 = vmatpush.xpose.msra.mxu0 0.0
      %1378 = vmatpush.xpose.msra.mxu0 0.0
      %1379 = vmatpush.xpose.msra.mxu0 0.0
      %1380 = vmatpush.xpose.msra.mxu0 0.0
      %1381 = vmatpush.xpose.msra.mxu0 0.0
      %1382 = vmatpush.xpose.msra.mxu0 0.0
      %1383 = vmatpush.xpose.msra.mxu0 0.0
      %1384 = vmatpush.xpose.msra.mxu0 0.0
      %1385 = vmatpush.xpose.msra.mxu0 0.0
      %1386 = vmatpush.xpose.msra.mxu0 0.0
      %1387 = vmatpush.xpose.msra.mxu0 %v1049
      %1388 = vmatpush.xpose.msra.mxu0 %v1041
      %1389 = vmatmul.f32.gmra.mxu0 %v881
      %v1390 = vpop.f32.mrf.mxu0
      %v1391 = vadd.f32 %v1362, %v1390
      %1392 = vmatmul.f32.gmra.mxu0 %v889
      %v1393 = vpop.f32.mrf.mxu0
      %v1394 = vadd.f32 %v1365, %v1393
      %1395 = vmatmul.f32.gmra.mxu0 %v897
      %v1396 = vpop.f32.mrf.mxu0
      %v1397 = vadd.f32 %v1368, %v1396
      %1398 = vmatmul.f32.gmra.mxu0 %v905
      %v1399 = vpop.f32.mrf.mxu0
      %v1400 = vadd.f32 %v1371, %v1399
      %1401 = vdwg.mxu0
      %1402 = vmatpush.xpose.msra.mxu0 0.0
      %1403 = vmatpush.xpose.msra.mxu0 0.0
      %1404 = vmatpush.xpose.msra.mxu0 0.0
      %1405 = vmatpush.xpose.msra.mxu0 0.0
      %1406 = vmatpush.xpose.msra.mxu0 0.0
      %1407 = vmatpush.xpose.msra.mxu0 0.0
      %1408 = vmatpush.xpose.msra.mxu0 0.0
      %1409 = vmatpush.xpose.msra.mxu0 0.0
      %1410 = vmatpush.xpose.msra.mxu0 0.0
      %1411 = vmatpush.xpose.msra.mxu0 0.0
      %1412 = vmatpush.xpose.msra.mxu0 0.0
      %1413 = vmatpush.xpose.msra.mxu0 0.0
      %1414 = vmatpush.xpose.msra.mxu0 0.0
      %1415 = vmatpush.xpose.msra.mxu0 0.0
      %1416 = vmatpush.xpose.msra.mxu0 %v1050
      %1417 = vmatpush.xpose.msra.mxu0 %v1042
      %1418 = vmatmul.f32.gmra.mxu0 %v882
      %v1419 = vpop.f32.mrf.mxu0
      %v1420 = vadd.f32 %v1391, %v1419
      %1421 = vmatmul.f32.gmra.mxu0 %v890
      %v1422 = vpop.f32.mrf.mxu0
      %v1423 = vadd.f32 %v1394, %v1422
      %1424 = vmatmul.f32.gmra.mxu0 %v898
      %v1425 = vpop.f32.mrf.mxu0
      %v1426 = vadd.f32 %v1397, %v1425
      %1427 = vmatmul.f32.gmra.mxu0 %v906
      %v1428 = vpop.f32.mrf.mxu0
      %v1429 = vadd.f32 %v1400, %v1428
      %1430 = vdwg.mxu0
      %1431 = vmatpush.xpose.msra.mxu0 0.0
      %1432 = vmatpush.xpose.msra.mxu0 0.0
      %1433 = vmatpush.xpose.msra.mxu0 0.0
      %1434 = vmatpush.xpose.msra.mxu0 0.0
      %1435 = vmatpush.xpose.msra.mxu0 0.0
      %1436 = vmatpush.xpose.msra.mxu0 0.0
      %1437 = vmatpush.xpose.msra.mxu0 0.0
      %1438 = vmatpush.xpose.msra.mxu0 0.0
      %1439 = vmatpush.xpose.msra.mxu0 0.0
      %1440 = vmatpush.xpose.msra.mxu0 0.0
      %1441 = vmatpush.xpose.msra.mxu0 0.0
      %1442 = vmatpush.xpose.msra.mxu0 0.0
      %1443 = vmatpush.xpose.msra.mxu0 0.0
      %1444 = vmatpush.xpose.msra.mxu0 0.0
      %1445 = vmatpush.xpose.msra.mxu0 %v1051
      %1446 = vmatpush.xpose.msra.mxu0 %v1043
      %1447 = vmatmul.f32.gmra.mxu0 %v883
      %v1448 = vpop.f32.mrf.mxu0
      %v1449 = vadd.f32 %v1420, %v1448
      %1450 = vmatmul.f32.gmra.mxu0 %v891
      %v1451 = vpop.f32.mrf.mxu0
      %v1452 = vadd.f32 %v1423, %v1451
      %1453 = vmatmul.f32.gmra.mxu0 %v899
      %v1454 = vpop.f32.mrf.mxu0
      %v1455 = vadd.f32 %v1426, %v1454
      %1456 = vmatmul.f32.gmra.mxu0 %v907
      %v1457 = vpop.f32.mrf.mxu0
      %v1458 = vadd.f32 %v1429, %v1457
      %1459 = vdwg.mxu0
      %1460 = vmatpush.xpose.msra.mxu0 0.0
      %1461 = vmatpush.xpose.msra.mxu0 0.0
      %1462 = vmatpush.xpose.msra.mxu0 0.0
      %1463 = vmatpush.xpose.msra.mxu0 0.0
      %1464 = vmatpush.xpose.msra.mxu0 0.0
      %1465 = vmatpush.xpose.msra.mxu0 0.0
      %1466 = vmatpush.xpose.msra.mxu0 0.0
      %1467 = vmatpush.xpose.msra.mxu0 0.0
      %1468 = vmatpush.xpose.msra.mxu0 0.0
      %1469 = vmatpush.xpose.msra.mxu0 0.0
      %1470 = vmatpush.xpose.msra.mxu0 0.0
      %1471 = vmatpush.xpose.msra.mxu0 0.0
      %1472 = vmatpush.xpose.msra.mxu0 0.0
      %1473 = vmatpush.xpose.msra.mxu0 0.0
      %1474 = vmatpush.xpose.msra.mxu0 %v1052
      %1475 = vmatpush.xpose.msra.mxu0 %v1044
      %1476 = vmatmul.f32.gmra.mxu0 %v884
      %v1477 = vpop.f32.mrf.mxu0
      %v1478 = vadd.f32 %v1449, %v1477
      %1479 = vmatmul.f32.gmra.mxu0 %v892
      %v1480 = vpop.f32.mrf.mxu0
      %v1481 = vadd.f32 %v1452, %v1480
      %1482 = vmatmul.f32.gmra.mxu0 %v900
      %v1483 = vpop.f32.mrf.mxu0
      %v1484 = vadd.f32 %v1455, %v1483
      %1485 = vmatmul.f32.gmra.mxu0 %v908
      %v1486 = vpop.f32.mrf.mxu0
      %v1487 = vadd.f32 %v1458, %v1486
      %1488 = vdwg.mxu0
      %1489 = vmatpush.xpose.msra.mxu0 0.0
      %1490 = vmatpush.xpose.msra.mxu0 0.0
      %1491 = vmatpush.xpose.msra.mxu0 0.0
      %1492 = vmatpush.xpose.msra.mxu0 0.0
      %1493 = vmatpush.xpose.msra.mxu0 0.0
      %1494 = vmatpush.xpose.msra.mxu0 0.0
      %1495 = vmatpush.xpose.msra.mxu0 0.0
      %1496 = vmatpush.xpose.msra.mxu0 0.0
      %1497 = vmatpush.xpose.msra.mxu0 0.0
      %1498 = vmatpush.xpose.msra.mxu0 0.0
      %1499 = vmatpush.xpose.msra.mxu0 0.0
      %1500 = vmatpush.xpose.msra.mxu0 0.0
      %1501 = vmatpush.xpose.msra.mxu0 0.0
      %1502 = vmatpush.xpose.msra.mxu0 0.0
      %1503 = vmatpush.xpose.msra.mxu0 %v1053
      %1504 = vmatpush.xpose.msra.mxu0 %v1045
      %1505 = vmatmul.f32.gmra.mxu0 %v885
      %v1506 = vpop.f32.mrf.mxu0
      %v1507 = vadd.f32 %v1478, %v1506
      %1508 = vmatmul.f32.gmra.mxu0 %v893
      %v1509 = vpop.f32.mrf.mxu0
      %v1510 = vadd.f32 %v1481, %v1509
      %1511 = vmatmul.f32.gmra.mxu0 %v901
      %v1512 = vpop.f32.mrf.mxu0
      %v1513 = vadd.f32 %v1484, %v1512
      %1514 = vmatmul.f32.gmra.mxu0 %v909
      %v1515 = vpop.f32.mrf.mxu0
      %v1516 = vadd.f32 %v1487, %v1515
      %1517 = vdwg.mxu0
      %v1518 = vmul.f32 %v1275, 0.0625
      %v1519 = vmul.f32 %v1507, 0.0625
      %v1520 = vmul.f32 %v1278, 0.0625
      %v1521 = vmul.f32 %v1510, 0.0625
      %v1522 = vmul.f32 %v1281, 0.0625
      %v1523 = vmul.f32 %v1513, 0.0625
      %v1524 = vmul.f32 %v1284, 0.0625
      %v1525 = vmul.f32 %v1516, 0.0625
      %v1526 = vld [vmem:[#allocation7] sm:$0xff]
      %v1527 = vld [vmem:[#allocation7 + $0x8] sm:$0xff]
      %v1528 = vld [vmem:[#allocation7 + $0x10] sm:$0xff]
      %v1529 = vld [vmem:[#allocation7 + $0x18] sm:$0xff]
      %v1530 = vld [vmem:[#allocation7 + $0x20] sm:$0xff]
      %v1531 = vld [vmem:[#allocation7 + $0x28] sm:$0xff]
      %v1532 = vld [vmem:[#allocation7 + $0x30] sm:$0xff]
      %v1533 = vld [vmem:[#allocation7 + $0x38] sm:$0xff]
      %v1534 = vld [vmem:[#allocation7 + $0x40] sm:$0xff]
      %v1535 = vld [vmem:[#allocation7 + $0x48] sm:$0xff]
      %v1536 = vld [vmem:[#allocation7 + $0x50] sm:$0xff]
      %v1537 = vld [vmem:[#allocation7 + $0x58] sm:$0xff]
      %v1538 = vld [vmem:[#allocation7 + $0x60] sm:$0xff]
      %v1539 = vld [vmem:[#allocation7 + $0x68] sm:$0xff]
      %v1540 = vld [vmem:[#allocation7 + $0x70] sm:$0xff]
      %v1541 = vld [vmem:[#allocation7 + $0x78] sm:$0xff]
      %v1542 = vld [vmem:[#allocation7 + $0x80] sm:$0xff]
      %v1543 = vld [vmem:[#allocation7 + $0x88] sm:$0xff]
      %v1544 = vld [vmem:[#allocation7 + $0x90] sm:$0xff]
      %v1545 = vld [vmem:[#allocation7 + $0x98] sm:$0xff]
      %v1546 = vld [vmem:[#allocation7 + $0xa0] sm:$0xff]
      %v1547 = vld [vmem:[#allocation7 + $0xa8] sm:$0xff]
      %v1548 = vld [vmem:[#allocation7 + $0xb0] sm:$0xff]
      %v1549 = vld [vmem:[#allocation7 + $0xb8] sm:$0xff]
      %v1550 = vld [vmem:[#allocation7 + $0xc0] sm:$0xff]
      %v1551 = vld [vmem:[#allocation7 + $0xc8] sm:$0xff]
      %v1552 = vld [vmem:[#allocation7 + $0xd0] sm:$0xff]
      %v1553 = vld [vmem:[#allocation7 + $0xd8] sm:$0xff]
      %v1554 = vld [vmem:[#allocation7 + $0xe0] sm:$0xff]
      %v1555 = vld [vmem:[#allocation7 + $0xe8] sm:$0xff]
      %v1556 = vld [vmem:[#allocation7 + $0xf0] sm:$0xff]
      %v1557 = vld [vmem:[#allocation7 + $0xf8] sm:$0xff]
      %v1558 = vld [vmem:[#allocation7 + $0x100] sm:$0xff]
      %v1559 = vld [vmem:[#allocation7 + $0x108] sm:$0xff]
      %v1560 = vld [vmem:[#allocation7 + $0x110] sm:$0xff]
      %v1561 = vld [vmem:[#allocation7 + $0x118] sm:$0xff]
      %v1562 = vld [vmem:[#allocation8] ss:$8 sm:$0xf]
      %v1564 = vperm.slane %v1562, 0
      %v1565 = vperm.slane %v1562, 1
      %v1566 = vperm.slane %v1562, 2
      %v1567 = vperm.slane %v1562, 3
      %v1608 = vunpack.c.l.b16 %v1526
      %v1609 = vunpack.c.h.b16 %v1526
      %v1610 = vunpack.c.l.b16 %v1527
      %v1611 = vunpack.c.h.b16 %v1527
      %v1612 = vunpack.c.l.b16 %v1528
      %v1613 = vunpack.c.h.b16 %v1528
      %v1614 = vunpack.c.l.b16 %v1529
      %v1615 = vunpack.c.h.b16 %v1529
      %v1616 = vunpack.c.l.b16 %v1530
      %v1617 = vunpack.c.h.b16 %v1530
      %v1618 = vunpack.c.l.b16 %v1531
      %v1619 = vunpack.c.h.b16 %v1531
      %v1620 = vunpack.c.l.b16 %v1532
      %v1621 = vunpack.c.h.b16 %v1532
      %v1622 = vunpack.c.l.b16 %v1533
      %v1623 = vunpack.c.h.b16 %v1533
      %v1624 = vunpack.c.l.b16 %v1534
      %v1625 = vunpack.c.h.b16 %v1534
      %v1626 = vunpack.c.l.b16 %v1535
      %v1627 = vunpack.c.h.b16 %v1535
      %v1628 = vunpack.c.l.b16 %v1536
      %v1629 = vunpack.c.h.b16 %v1536
      %v1630 = vunpack.c.l.b16 %v1537
      %v1631 = vunpack.c.h.b16 %v1537
      %v1632 = vunpack.c.l.b16 %v1538
      %v1633 = vunpack.c.h.b16 %v1538
      %v1634 = vunpack.c.l.b16 %v1539
      %v1635 = vunpack.c.h.b16 %v1539
      %v1636 = vunpack.c.l.b16 %v1540
      %v1637 = vunpack.c.h.b16 %v1540
      %v1638 = vunpack.c.l.b16 %v1541
      %v1639 = vunpack.c.h.b16 %v1541
      %v1640 = vunpack.c.l.b16 %v1542
      %v1641 = vunpack.c.h.b16 %v1542
      %v1642 = vunpack.c.l.b16 %v1543
      %v1643 = vunpack.c.h.b16 %v1543
      %v1644 = vunpack.c.l.b16 %v1544
      %v1645 = vunpack.c.h.b16 %v1544
      %v1646 = vunpack.c.l.b16 %v1545
      %v1647 = vunpack.c.h.b16 %v1545
      %v1648 = vunpack.c.l.b16 %v1546
      %v1649 = vunpack.c.h.b16 %v1546
      %v1650 = vunpack.c.l.b16 %v1547
      %v1651 = vunpack.c.h.b16 %v1547
      %v1652 = vunpack.c.l.b16 %v1548
      %v1653 = vunpack.c.h.b16 %v1548
      %v1654 = vunpack.c.l.b16 %v1549
      %v1655 = vunpack.c.h.b16 %v1549
      %v1656 = vunpack.c.l.b16 %v1550
      %v1657 = vunpack.c.h.b16 %v1550
      %v1658 = vunpack.c.l.b16 %v1551
      %v1659 = vunpack.c.h.b16 %v1551
      %v1660 = vunpack.c.l.b16 %v1552
      %v1661 = vunpack.c.h.b16 %v1552
      %v1662 = vunpack.c.l.b16 %v1553
      %v1663 = vunpack.c.h.b16 %v1553
      %v1664 = vunpack.c.l.b16 %v1554
      %v1665 = vunpack.c.h.b16 %v1554
      %v1666 = vunpack.c.l.b16 %v1555
      %v1667 = vunpack.c.h.b16 %v1555
      %v1668 = vunpack.c.l.b16 %v1556
      %v1669 = vunpack.c.h.b16 %v1556
      %v1670 = vunpack.c.l.b16 %v1557
      %v1671 = vunpack.c.h.b16 %v1557
      %v1672 = vunpack.c.l.b16 %v1558
      %v1673 = vunpack.c.h.b16 %v1558
      %v1674 = vunpack.c.l.b16 %v1559
      %v1675 = vunpack.c.h.b16 %v1559
      %v1676 = vunpack.c.l.b16 %v1560
      %v1677 = vunpack.c.h.b16 %v1560
      %v1678 = vunpack.c.l.b16 %v1561
      %v1679 = vunpack.c.h.b16 %v1561
      %v1680 = vpack.c.b16 %v1612, %v1608
      %v1681 = vpack.c.b16 %v1613, %v1609
      %v1682 = vpack.c.b16 %v1614, %v1610
      %v1683 = vpack.c.b16 %v1615, %v1611
      %v1684 = vpack.c.b16 %v1620, %v1616
      %v1685 = vpack.c.b16 %v1621, %v1617
      %v1686 = vpack.c.b16 %v1622, %v1618
      %v1687 = vpack.c.b16 %v1623, %v1619
      %v1688 = vpack.c.b16 %v1628, %v1624
      %v1689 = vpack.c.b16 %v1629, %v1625
      %v1690 = vpack.c.b16 %v1630, %v1626
      %v1691 = vpack.c.b16 %v1631, %v1627
      %v1692 = vpack.c.b16 %v1636, %v1632
      %v1693 = vpack.c.b16 %v1637, %v1633
      %v1694 = vpack.c.b16 %v1638, %v1634
      %v1695 = vpack.c.b16 %v1639, %v1635
      %v1696 = vpack.c.b16 %v1644, %v1640
      %v1697 = vpack.c.b16 %v1645, %v1641
      %v1698 = vpack.c.b16 %v1646, %v1642
      %v1699 = vpack.c.b16 %v1647, %v1643
      %v1700 = vpack.c.b16 %v1652, %v1648
      %v1701 = vpack.c.b16 %v1653, %v1649
      %v1702 = vpack.c.b16 %v1654, %v1650
      %v1703 = vpack.c.b16 %v1655, %v1651
      %v1704 = vpack.c.b16 %v1660, %v1656
      %v1705 = vpack.c.b16 %v1661, %v1657
      %v1706 = vpack.c.b16 %v1662, %v1658
      %v1707 = vpack.c.b16 %v1663, %v1659
      %v1708 = vpack.c.b16 %v1668, %v1664
      %v1709 = vpack.c.b16 %v1669, %v1665
      %v1710 = vpack.c.b16 %v1670, %v1666
      %v1711 = vpack.c.b16 %v1671, %v1667
      %v1712 = vpack.c.b16 %v1676, %v1672
      %v1713 = vpack.c.b16 %v1677, %v1673
      %v1714 = vpack.c.b16 %v1678, %v1674
      %v1715 = vpack.c.b16 %v1679, %v1675
      %vm1752 = vcmask 130048
      %v1754 = vsel %vm1752, %v1519, 0
      %v1757 = vsel %vm1752, %v1521, 0
      %v1760 = vsel %vm1752, %v1523, 0
      %v1763 = vsel %vm1752, %v1525, 0
      %1765 = vmatpush.bf16.msra.mxu0 %v1708
      %1766 = vmatpush.bf16.msra.mxu0 %v1704
      %1767 = vmatpush.bf16.msra.mxu0 %v1700
      %1768 = vmatpush.bf16.msra.mxu0 %v1696
      %1769 = vmatpush.bf16.msra.mxu0 %v1692
      %1770 = vmatpush.bf16.msra.mxu0 %v1688
      %1771 = vmatpush.bf16.msra.mxu0 %v1684
      %1772 = vmatpush.bf16.msra.mxu0 %v1680
      %1773 = vmatmul.f32.gmra.mxu0 %v1518
      %v1774 = vpop.f32.mrf.mxu0
      %v1775 = vadd.f32 %v1564, %v1774
      %1776 = vmatmul.f32.gmra.mxu0 %v1520
      %v1777 = vpop.f32.mrf.mxu0
      %v1778 = vadd.f32 %v1564, %v1777
      %1779 = vmatmul.f32.gmra.mxu0 %v1522
      %v1780 = vpop.f32.mrf.mxu0
      %v1781 = vadd.f32 %v1564, %v1780
      %1782 = vmatmul.f32.gmra.mxu0 %v1524
      %v1783 = vpop.f32.mrf.mxu0
      %v1784 = vadd.f32 %v1564, %v1783
      %1785 = vdwg.mxu0
      %1786 = vmatpush.bf16.msra.mxu0 0
      %1787 = vmatpush.bf16.msra.mxu0 0
      %1788 = vmatpush.bf16.msra.mxu0 0
      %1789 = vmatpush.bf16.msra.mxu0 0
      %1790 = vmatpush.bf16.msra.mxu0 0
      %1791 = vmatpush.bf16.msra.mxu0 0
      %1792 = vmatpush.bf16.msra.mxu0 0
      %1793 = vmatpush.bf16.msra.mxu0 %v1712
      %1794 = vmatmul.f32.gmra.mxu0 %v1754
      %v1795 = vpop.f32.mrf.mxu0
      %v1796 = vadd.f32 %v1775, %v1795
      %1797 = vmatmul.f32.gmra.mxu0 %v1757
      %v1798 = vpop.f32.mrf.mxu0
      %v1799 = vadd.f32 %v1778, %v1798
      %1800 = vmatmul.f32.gmra.mxu0 %v1760
      %v1801 = vpop.f32.mrf.mxu0
      %v1802 = vadd.f32 %v1781, %v1801
      %1803 = vmatmul.f32.gmra.mxu0 %v1763
      %v1804 = vpop.f32.mrf.mxu0
      %v1805 = vadd.f32 %v1784, %v1804
      %1806 = vdwg.mxu0
      %1807 = vmatpush.bf16.msra.mxu0 %v1709
      %1808 = vmatpush.bf16.msra.mxu0 %v1705
      %1809 = vmatpush.bf16.msra.mxu0 %v1701
      %1810 = vmatpush.bf16.msra.mxu0 %v1697
      %1811 = vmatpush.bf16.msra.mxu0 %v1693
      %1812 = vmatpush.bf16.msra.mxu0 %v1689
      %1813 = vmatpush.bf16.msra.mxu0 %v1685
      %1814 = vmatpush.bf16.msra.mxu0 %v1681
      %1815 = vmatmul.f32.gmra.mxu0 %v1518
      %v1816 = vpop.f32.mrf.mxu0
      %v1817 = vadd.f32 %v1565, %v1816
      %1818 = vmatmul.f32.gmra.mxu0 %v1520
      %v1819 = vpop.f32.mrf.mxu0
      %v1820 = vadd.f32 %v1565, %v1819
      %1821 = vmatmul.f32.gmra.mxu0 %v1522
      %v1822 = vpop.f32.mrf.mxu0
      %v1823 = vadd.f32 %v1565, %v1822
      %1824 = vmatmul.f32.gmra.mxu0 %v1524
      %v1825 = vpop.f32.mrf.mxu0
      %v1826 = vadd.f32 %v1565, %v1825
      %1827 = vdwg.mxu0
      %1828 = vmatpush.bf16.msra.mxu0 0
      %1829 = vmatpush.bf16.msra.mxu0 0
      %1830 = vmatpush.bf16.msra.mxu0 0
      %1831 = vmatpush.bf16.msra.mxu0 0
      %1832 = vmatpush.bf16.msra.mxu0 0
      %1833 = vmatpush.bf16.msra.mxu0 0
      %1834 = vmatpush.bf16.msra.mxu0 0
      %1835 = vmatpush.bf16.msra.mxu0 %v1713
      %1836 = vmatmul.f32.gmra.mxu0 %v1754
      %v1837 = vpop.f32.mrf.mxu0
      %v1838 = vadd.f32 %v1817, %v1837
      %1839 = vmatmul.f32.gmra.mxu0 %v1757
      %v1840 = vpop.f32.mrf.mxu0
      %v1841 = vadd.f32 %v1820, %v1840
      %1842 = vmatmul.f32.gmra.mxu0 %v1760
      %v1843 = vpop.f32.mrf.mxu0
      %v1844 = vadd.f32 %v1823, %v1843
      %1845 = vmatmul.f32.gmra.mxu0 %v1763
      %v1846 = vpop.f32.mrf.mxu0
      %v1847 = vadd.f32 %v1826, %v1846
      %1848 = vdwg.mxu0
      %1849 = vmatpush.bf16.msra.mxu0 %v1710
      %1850 = vmatpush.bf16.msra.mxu0 %v1706
      %1851 = vmatpush.bf16.msra.mxu0 %v1702
      %1852 = vmatpush.bf16.msra.mxu0 %v1698
      %1853 = vmatpush.bf16.msra.mxu0 %v1694
      %1854 = vmatpush.bf16.msra.mxu0 %v1690
      %1855 = vmatpush.bf16.msra.mxu0 %v1686
      %1856 = vmatpush.bf16.msra.mxu0 %v1682
      %1857 = vmatmul.f32.gmra.mxu0 %v1518
      %v1858 = vpop.f32.mrf.mxu0
      %v1859 = vadd.f32 %v1566, %v1858
      %1860 = vmatmul.f32.gmra.mxu0 %v1520
      %v1861 = vpop.f32.mrf.mxu0
      %v1862 = vadd.f32 %v1566, %v1861
      %1863 = vmatmul.f32.gmra.mxu0 %v1522
      %v1864 = vpop.f32.mrf.mxu0
      %v1865 = vadd.f32 %v1566, %v1864
      %1866 = vmatmul.f32.gmra.mxu0 %v1524
      %v1867 = vpop.f32.mrf.mxu0
      %v1868 = vadd.f32 %v1566, %v1867
      %1869 = vdwg.mxu0
      %1870 = vmatpush.bf16.msra.mxu0 0
      %1871 = vmatpush.bf16.msra.mxu0 0
      %1872 = vmatpush.bf16.msra.mxu0 0
      %1873 = vmatpush.bf16.msra.mxu0 0
      %1874 = vmatpush.bf16.msra.mxu0 0
      %1875 = vmatpush.bf16.msra.mxu0 0
      %1876 = vmatpush.bf16.msra.mxu0 0
      %1877 = vmatpush.bf16.msra.mxu0 %v1714
      %1878 = vmatmul.f32.gmra.mxu0 %v1754
      %v1879 = vpop.f32.mrf.mxu0
      %v1880 = vadd.f32 %v1859, %v1879
      %1881 = vmatmul.f32.gmra.mxu0 %v1757
      %v1882 = vpop.f32.mrf.mxu0
      %v1883 = vadd.f32 %v1862, %v1882
      %1884 = vmatmul.f32.gmra.mxu0 %v1760
      %v1885 = vpop.f32.mrf.mxu0
      %v1886 = vadd.f32 %v1865, %v1885
      %1887 = vmatmul.f32.gmra.mxu0 %v1763
      %v1888 = vpop.f32.mrf.mxu0
      %v1889 = vadd.f32 %v1868, %v1888
      %1890 = vdwg.mxu0
      %1891 = vmatpush.bf16.msra.mxu0 %v1711
      %1892 = vmatpush.bf16.msra.mxu0 %v1707
      %1893 = vmatpush.bf16.msra.mxu0 %v1703
      %1894 = vmatpush.bf16.msra.mxu0 %v1699
      %1895 = vmatpush.bf16.msra.mxu0 %v1695
      %1896 = vmatpush.bf16.msra.mxu0 %v1691
      %1897 = vmatpush.bf16.msra.mxu0 %v1687
      %1898 = vmatpush.bf16.msra.mxu0 %v1683
      %1899 = vmatmul.f32.gmra.mxu0 %v1518
      %v1900 = vpop.f32.mrf.mxu0
      %v1901 = vadd.f32 %v1567, %v1900
      %1902 = vmatmul.f32.gmra.mxu0 %v1520
      %v1903 = vpop.f32.mrf.mxu0
      %v1904 = vadd.f32 %v1567, %v1903
      %1905 = vmatmul.f32.gmra.mxu0 %v1522
      %v1906 = vpop.f32.mrf.mxu0
      %v1907 = vadd.f32 %v1567, %v1906
      %1908 = vmatmul.f32.gmra.mxu0 %v1524
      %v1909 = vpop.f32.mrf.mxu0
      %v1910 = vadd.f32 %v1567, %v1909
      %1911 = vdwg.mxu0
      %1912 = vmatpush.bf16.msra.mxu0 0
      %1913 = vmatpush.bf16.msra.mxu0 0
      %1914 = vmatpush.bf16.msra.mxu0 0
      %1915 = vmatpush.bf16.msra.mxu0 0
      %1916 = vmatpush.bf16.msra.mxu0 0
      %1917 = vmatpush.bf16.msra.mxu0 0
      %1918 = vmatpush.bf16.msra.mxu0 0
      %1919 = vmatpush.bf16.msra.mxu0 %v1715
      %1920 = vmatmul.f32.gmra.mxu0 %v1754
      %v1921 = vpop.f32.mrf.mxu0
      %v1922 = vadd.f32 %v1901, %v1921
      %1923 = vmatmul.f32.gmra.mxu0 %v1757
      %v1924 = vpop.f32.mrf.mxu0
      %v1925 = vadd.f32 %v1904, %v1924
      %1926 = vmatmul.f32.gmra.mxu0 %v1760
      %v1927 = vpop.f32.mrf.mxu0
      %v1928 = vadd.f32 %v1907, %v1927
      %1929 = vmatmul.f32.gmra.mxu0 %v1763
      %v1930 = vpop.f32.mrf.mxu0
      %v1931 = vadd.f32 %v1910, %v1930
      %1932 = vdwg.mxu0
      %v1933 = vmax.f32 %v1796, 0.0
      %v1934 = vmax.f32 %v1838, 0.0
      %v1935 = vmax.f32 %v1880, 0.0
      %v1936 = vmax.f32 %v1922, 0.0
      %v1937 = vmax.f32 %v1799, 0.0
      %v1938 = vmax.f32 %v1841, 0.0
      %v1939 = vmax.f32 %v1883, 0.0
      %v1940 = vmax.f32 %v1925, 0.0
      %v1941 = vmax.f32 %v1802, 0.0
      %v1942 = vmax.f32 %v1844, 0.0
      %v1943 = vmax.f32 %v1886, 0.0
      %v1944 = vmax.f32 %v1928, 0.0
      %v1945 = vmax.f32 %v1805, 0.0
      %v1946 = vmax.f32 %v1847, 0.0
      %v1947 = vmax.f32 %v1889, 0.0
      %v1948 = vmax.f32 %v1931, 0.0
      %v1949 = vld [vmem:[#allocation7 + $0x120] sm:$0xff]
      %v1950 = vld [vmem:[#allocation7 + $0x130] sm:$0xff]
      %v1951 = vld [vmem:[#allocation7 + $0x140] sm:$0xff]
      %v1952 = vld [vmem:[#allocation7 + $0x150] sm:$0xff]
      %v1953 = vld [vmem:[#allocation7 + $0x160] sm:$0xff]
      %v1954 = vld [vmem:[#allocation7 + $0x170] sm:$0xff]
      %v1955 = vld [vmem:[#allocation7 + $0x180] sm:$0xff]
      %v1956 = vld [vmem:[#allocation7 + $0x190] sm:$0xff]
      %v1957 = vld [vmem:[#allocation7 + $0x1a0] sm:$0xff]
      %v1958 = vld [vmem:[#allocation7 + $0x1b0] sm:$0xff]
      %v1959 = vld [vmem:[#allocation7 + $0x1c0] sm:$0xff]
      %v1960 = vld [vmem:[#allocation7 + $0x1d0] sm:$0xff]
      %v1961 = vld [vmem:[#allocation7 + $0x1e0] sm:$0xff]
      %v1962 = vld [vmem:[#allocation7 + $0x1f0] sm:$0xff]
      %v1963 = vld [vmem:[#allocation7 + $0x200] sm:$0xff]
      %v1964 = vld [vmem:[#allocation7 + $0x210] sm:$0xff]
      %v1965 = vld [vmem:[#allocation7 + $0x220] sm:$0xff]
      %v1966 = vld [vmem:[#allocation7 + $0x230] sm:$0xff]
      %v1967 = vld [vmem:[#allocation7 + $0x240] sm:$0xff]
      %v1968 = vld [vmem:[#allocation7 + $0x250] sm:$0xff]
      %v1969 = vld [vmem:[#allocation7 + $0x260] sm:$0xff]
      %v1970 = vld [vmem:[#allocation7 + $0x270] sm:$0xff]
      %v1971 = vld [vmem:[#allocation7 + $0x280] sm:$0xff]
      %v1972 = vld [vmem:[#allocation7 + $0x290] sm:$0xff]
      %v1973 = vld [vmem:[#allocation7 + $0x2a0] sm:$0xff]
      %v1974 = vld [vmem:[#allocation7 + $0x2b0] sm:$0xff]
      %v1975 = vld [vmem:[#allocation7 + $0x2c0] sm:$0xff]
      %v1976 = vld [vmem:[#allocation7 + $0x2d0] sm:$0xff]
      %v1977 = vld [vmem:[#allocation7 + $0x2e0] sm:$0xff]
      %v1978 = vld [vmem:[#allocation7 + $0x2f0] sm:$0xff]
      %v1979 = vld [vmem:[#allocation7 + $0x300] sm:$0xff]
      %v1980 = vld [vmem:[#allocation7 + $0x310] sm:$0xff]
      %v1981 = vld [vmem:[#allocation7 + $0x320] sm:$0xff]
      %v1982 = vld [vmem:[#allocation7 + $0x330] sm:$0xff]
      %v1983 = vld [vmem:[#allocation7 + $0x340] sm:$0xff]
      %v1984 = vld [vmem:[#allocation7 + $0x350] sm:$0xff]
      %v1985 = vld [vmem:[#allocation7 + $0x360] sm:$0xff]
      %v1986 = vld [vmem:[#allocation7 + $0x370] sm:$0xff]
      %v1987 = vld [vmem:[#allocation7 + $0x380] sm:$0xff]
      %v1988 = vld [vmem:[#allocation7 + $0x390] sm:$0xff]
      %v1989 = vld [vmem:[#allocation7 + $0x3a0] sm:$0xff]
      %v1990 = vld [vmem:[#allocation7 + $0x3b0] sm:$0xff]
      %v1991 = vld [vmem:[#allocation7 + $0x3c0] sm:$0xff]
      %v1992 = vld [vmem:[#allocation7 + $0x3d0] sm:$0xff]
      %v1993 = vld [vmem:[#allocation7 + $0x3e0] sm:$0xff]
      %v1994 = vld [vmem:[#allocation7 + $0x3f0] sm:$0xff]
      %v1995 = vld [vmem:[#allocation7 + $0x400] sm:$0xff]
      %v1996 = vld [vmem:[#allocation7 + $0x410] sm:$0xff]
      %v1997 = vld [vmem:[#allocation7 + $0x420] sm:$0xff]
      %v1998 = vld [vmem:[#allocation7 + $0x430] sm:$0xff]
      %v1999 = vld [vmem:[#allocation7 + $0x440] sm:$0xff]
      %v2000 = vld [vmem:[#allocation7 + $0x450] sm:$0xff]
      %v2001 = vld [vmem:[#allocation7 + $0x460] sm:$0xff]
      %v2002 = vld [vmem:[#allocation7 + $0x470] sm:$0xff]
      %v2003 = vld [vmem:[#allocation7 + $0x480] sm:$0xff]
      %v2004 = vld [vmem:[#allocation7 + $0x490] sm:$0xff]
      %v2005 = vld [vmem:[#allocation7 + $0x4a0] sm:$0xff]
      %v2006 = vld [vmem:[#allocation7 + $0x4b0] sm:$0xff]
      %v2007 = vld [vmem:[#allocation7 + $0x4c0] sm:$0xff]
      %v2008 = vld [vmem:[#allocation7 + $0x4d0] sm:$0xff]
      %v2009 = vld [vmem:[#allocation7 + $0x4e0] sm:$0xff]
      %v2010 = vld [vmem:[#allocation7 + $0x4f0] sm:$0xff]
      %v2011 = vld [vmem:[#allocation7 + $0x500] sm:$0xff]
      %v2012 = vld [vmem:[#allocation7 + $0x510] sm:$0xff]
      %s2013 = scalar_lea.vmem [#allocation8], 1
      %v2014 = vld [vmem:[%s2013] ss:$8 sm:$0x3]
      %v2016 = vperm.slane %v2014, 0
      %v2017 = vperm.slane %v2014, 1
      %v2084 = vunpack.c.l.b16 %v1949
      %v2085 = vunpack.c.h.b16 %v1949
      %v2086 = vunpack.c.l.b16 %v1950
      %v2087 = vunpack.c.h.b16 %v1950
      %v2088 = vunpack.c.l.b16 %v1951
      %v2089 = vunpack.c.h.b16 %v1951
      %v2090 = vunpack.c.l.b16 %v1952
      %v2091 = vunpack.c.h.b16 %v1952
      %v2092 = vunpack.c.l.b16 %v1953
      %v2093 = vunpack.c.h.b16 %v1953
      %v2094 = vunpack.c.l.b16 %v1954
      %v2095 = vunpack.c.h.b16 %v1954
      %v2096 = vunpack.c.l.b16 %v1955
      %v2097 = vunpack.c.h.b16 %v1955
      %v2098 = vunpack.c.l.b16 %v1956
      %v2099 = vunpack.c.h.b16 %v1956
      %v2100 = vunpack.c.l.b16 %v1957
      %v2101 = vunpack.c.h.b16 %v1957
      %v2102 = vunpack.c.l.b16 %v1958
      %v2103 = vunpack.c.h.b16 %v1958
      %v2104 = vunpack.c.l.b16 %v1959
      %v2105 = vunpack.c.h.b16 %v1959
      %v2106 = vunpack.c.l.b16 %v1960
      %v2107 = vunpack.c.h.b16 %v1960
      %v2108 = vunpack.c.l.b16 %v1961
      %v2109 = vunpack.c.h.b16 %v1961
      %v2110 = vunpack.c.l.b16 %v1962
      %v2111 = vunpack.c.h.b16 %v1962
      %v2112 = vunpack.c.l.b16 %v1963
      %v2113 = vunpack.c.h.b16 %v1963
      %v2114 = vunpack.c.l.b16 %v1964
      %v2115 = vunpack.c.h.b16 %v1964
      %v2116 = vunpack.c.l.b16 %v1965
      %v2117 = vunpack.c.h.b16 %v1965
      %v2118 = vunpack.c.l.b16 %v1966
      %v2119 = vunpack.c.h.b16 %v1966
      %v2120 = vunpack.c.l.b16 %v1967
      %v2121 = vunpack.c.h.b16 %v1967
      %v2122 = vunpack.c.l.b16 %v1968
      %v2123 = vunpack.c.h.b16 %v1968
      %v2124 = vunpack.c.l.b16 %v1969
      %v2125 = vunpack.c.h.b16 %v1969
      %v2126 = vunpack.c.l.b16 %v1970
      %v2127 = vunpack.c.h.b16 %v1970
      %v2128 = vunpack.c.l.b16 %v1971
      %v2129 = vunpack.c.h.b16 %v1971
      %v2130 = vunpack.c.l.b16 %v1972
      %v2131 = vunpack.c.h.b16 %v1972
      %v2132 = vunpack.c.l.b16 %v1973
      %v2133 = vunpack.c.h.b16 %v1973
      %v2134 = vunpack.c.l.b16 %v1974
      %v2135 = vunpack.c.h.b16 %v1974
      %v2136 = vunpack.c.l.b16 %v1975
      %v2137 = vunpack.c.h.b16 %v1975
      %v2138 = vunpack.c.l.b16 %v1976
      %v2139 = vunpack.c.h.b16 %v1976
      %v2140 = vunpack.c.l.b16 %v1977
      %v2141 = vunpack.c.h.b16 %v1977
      %v2142 = vunpack.c.l.b16 %v1978
      %v2143 = vunpack.c.h.b16 %v1978
      %v2144 = vunpack.c.l.b16 %v1979
      %v2145 = vunpack.c.h.b16 %v1979
      %v2146 = vunpack.c.l.b16 %v1980
      %v2147 = vunpack.c.h.b16 %v1980
      %v2148 = vunpack.c.l.b16 %v1981
      %v2149 = vunpack.c.h.b16 %v1981
      %v2150 = vunpack.c.l.b16 %v1982
      %v2151 = vunpack.c.h.b16 %v1982
      %v2152 = vunpack.c.l.b16 %v1983
      %v2153 = vunpack.c.h.b16 %v1983
      %v2154 = vunpack.c.l.b16 %v1984
      %v2155 = vunpack.c.h.b16 %v1984
      %v2156 = vunpack.c.l.b16 %v1985
      %v2157 = vunpack.c.h.b16 %v1985
      %v2158 = vunpack.c.l.b16 %v1986
      %v2159 = vunpack.c.h.b16 %v1986
      %v2160 = vunpack.c.l.b16 %v1987
      %v2161 = vunpack.c.h.b16 %v1987
      %v2162 = vunpack.c.l.b16 %v1988
      %v2163 = vunpack.c.h.b16 %v1988
      %v2164 = vunpack.c.l.b16 %v1989
      %v2165 = vunpack.c.h.b16 %v1989
      %v2166 = vunpack.c.l.b16 %v1990
      %v2167 = vunpack.c.h.b16 %v1990
      %v2168 = vunpack.c.l.b16 %v1991
      %v2169 = vunpack.c.h.b16 %v1991
      %v2170 = vunpack.c.l.b16 %v1992
      %v2171 = vunpack.c.h.b16 %v1992
      %v2172 = vunpack.c.l.b16 %v1993
      %v2173 = vunpack.c.h.b16 %v1993
      %v2174 = vunpack.c.l.b16 %v1994
      %v2175 = vunpack.c.h.b16 %v1994
      %v2176 = vunpack.c.l.b16 %v1995
      %v2177 = vunpack.c.h.b16 %v1995
      %v2178 = vunpack.c.l.b16 %v1996
      %v2179 = vunpack.c.h.b16 %v1996
      %v2180 = vunpack.c.l.b16 %v1997
      %v2181 = vunpack.c.h.b16 %v1997
      %v2182 = vunpack.c.l.b16 %v1998
      %v2183 = vunpack.c.h.b16 %v1998
      %v2184 = vunpack.c.l.b16 %v1999
      %v2185 = vunpack.c.h.b16 %v1999
      %v2186 = vunpack.c.l.b16 %v2000
      %v2187 = vunpack.c.h.b16 %v2000
      %v2188 = vunpack.c.l.b16 %v2001
      %v2189 = vunpack.c.h.b16 %v2001
      %v2190 = vunpack.c.l.b16 %v2002
      %v2191 = vunpack.c.h.b16 %v2002
      %v2192 = vunpack.c.l.b16 %v2003
      %v2193 = vunpack.c.h.b16 %v2003
      %v2194 = vunpack.c.l.b16 %v2004
      %v2195 = vunpack.c.h.b16 %v2004
      %v2196 = vunpack.c.l.b16 %v2005
      %v2197 = vunpack.c.h.b16 %v2005
      %v2198 = vunpack.c.l.b16 %v2006
      %v2199 = vunpack.c.h.b16 %v2006
      %v2200 = vunpack.c.l.b16 %v2007
      %v2201 = vunpack.c.h.b16 %v2007
      %v2202 = vunpack.c.l.b16 %v2008
      %v2203 = vunpack.c.h.b16 %v2008
      %v2204 = vunpack.c.l.b16 %v2009
      %v2205 = vunpack.c.h.b16 %v2009
      %v2206 = vunpack.c.l.b16 %v2010
      %v2207 = vunpack.c.h.b16 %v2010
      %v2208 = vunpack.c.l.b16 %v2011
      %v2209 = vunpack.c.h.b16 %v2011
      %v2210 = vunpack.c.l.b16 %v2012
      %v2211 = vunpack.c.h.b16 %v2012
      %v2212 = vpack.c.b16 %v2086, %v2084
      %v2213 = vpack.c.b16 %v2087, %v2085
      %v2214 = vpack.c.b16 %v2090, %v2088
      %v2215 = vpack.c.b16 %v2091, %v2089
      %v2216 = vpack.c.b16 %v2094, %v2092
      %v2217 = vpack.c.b16 %v2095, %v2093
      %v2218 = vpack.c.b16 %v2098, %v2096
      %v2219 = vpack.c.b16 %v2099, %v2097
      %v2220 = vpack.c.b16 %v2102, %v2100
      %v2221 = vpack.c.b16 %v2103, %v2101
      %v2222 = vpack.c.b16 %v2106, %v2104
      %v2223 = vpack.c.b16 %v2107, %v2105
      %v2224 = vpack.c.b16 %v2110, %v2108
      %v2225 = vpack.c.b16 %v2111, %v2109
      %v2226 = vpack.c.b16 %v2114, %v2112
      %v2227 = vpack.c.b16 %v2115, %v2113
      %v2228 = vpack.c.b16 %v2118, %v2116
      %v2229 = vpack.c.b16 %v2119, %v2117
      %v2230 = vpack.c.b16 %v2122, %v2120
      %v2231 = vpack.c.b16 %v2123, %v2121
      %v2232 = vpack.c.b16 %v2126, %v2124
      %v2233 = vpack.c.b16 %v2127, %v2125
      %v2234 = vpack.c.b16 %v2130, %v2128
      %v2235 = vpack.c.b16 %v2131, %v2129
      %v2236 = vpack.c.b16 %v2134, %v2132
      %v2237 = vpack.c.b16 %v2135, %v2133
      %v2238 = vpack.c.b16 %v2138, %v2136
      %v2239 = vpack.c.b16 %v2139, %v2137
      %v2240 = vpack.c.b16 %v2142, %v2140
      %v2241 = vpack.c.b16 %v2143, %v2141
      %v2242 = vpack.c.b16 %v2146, %v2144
      %v2243 = vpack.c.b16 %v2147, %v2145
      %v2244 = vpack.c.b16 %v2150, %v2148
      %v2245 = vpack.c.b16 %v2151, %v2149
      %v2246 = vpack.c.b16 %v2154, %v2152
      %v2247 = vpack.c.b16 %v2155, %v2153
      %v2248 = vpack.c.b16 %v2158, %v2156
      %v2249 = vpack.c.b16 %v2159, %v2157
      %v2250 = vpack.c.b16 %v2162, %v2160
      %v2251 = vpack.c.b16 %v2163, %v2161
      %v2252 = vpack.c.b16 %v2166, %v2164
      %v2253 = vpack.c.b16 %v2167, %v2165
      %v2254 = vpack.c.b16 %v2170, %v2168
      %v2255 = vpack.c.b16 %v2171, %v2169
      %v2256 = vpack.c.b16 %v2174, %v2172
      %v2257 = vpack.c.b16 %v2175, %v2173
      %v2258 = vpack.c.b16 %v2178, %v2176
      %v2259 = vpack.c.b16 %v2179, %v2177
      %v2260 = vpack.c.b16 %v2182, %v2180
      %v2261 = vpack.c.b16 %v2183, %v2181
      %v2262 = vpack.c.b16 %v2186, %v2184
      %v2263 = vpack.c.b16 %v2187, %v2185
      %v2264 = vpack.c.b16 %v2190, %v2188
      %v2265 = vpack.c.b16 %v2191, %v2189
      %v2266 = vpack.c.b16 %v2194, %v2192
      %v2267 = vpack.c.b16 %v2195, %v2193
      %v2268 = vpack.c.b16 %v2198, %v2196
      %v2269 = vpack.c.b16 %v2199, %v2197
      %v2270 = vpack.c.b16 %v2202, %v2200
      %v2271 = vpack.c.b16 %v2203, %v2201
      %v2272 = vpack.c.b16 %v2206, %v2204
      %v2273 = vpack.c.b16 %v2207, %v2205
      %v2274 = vpack.c.b16 %v2210, %v2208
      %v2275 = vpack.c.b16 %v2211, %v2209
      %2340 = vmatpush.bf16.msra.mxu0 %v2226
      %2341 = vmatpush.bf16.msra.mxu0 %v2224
      %2342 = vmatpush.bf16.msra.mxu0 %v2222
      %2343 = vmatpush.bf16.msra.mxu0 %v2220
      %2344 = vmatpush.bf16.msra.mxu0 %v2218
      %2345 = vmatpush.bf16.msra.mxu0 %v2216
      %2346 = vmatpush.bf16.msra.mxu0 %v2214
      %2347 = vmatpush.bf16.msra.mxu0 %v2212
      %2348 = vmatmul.f32.gmra.mxu0 %v1933
      %v2349 = vpop.f32.mrf.mxu0
      %v2350 = vadd.f32 %v2016, %v2349
      %2351 = vmatmul.f32.gmra.mxu0 %v1937
      %v2352 = vpop.f32.mrf.mxu0
      %v2353 = vadd.f32 %v2016, %v2352
      %2354 = vmatmul.f32.gmra.mxu0 %v1941
      %v2355 = vpop.f32.mrf.mxu0
      %v2356 = vadd.f32 %v2016, %v2355
      %2357 = vmatmul.f32.gmra.mxu0 %v1945
      %v2358 = vpop.f32.mrf.mxu0
      %v2359 = vadd.f32 %v2016, %v2358
      %2360 = vdwg.mxu0
      %2361 = vmatpush.bf16.msra.mxu0 %v2242
      %2362 = vmatpush.bf16.msra.mxu0 %v2240
      %2363 = vmatpush.bf16.msra.mxu0 %v2238
      %2364 = vmatpush.bf16.msra.mxu0 %v2236
      %2365 = vmatpush.bf16.msra.mxu0 %v2234
      %2366 = vmatpush.bf16.msra.mxu0 %v2232
      %2367 = vmatpush.bf16.msra.mxu0 %v2230
      %2368 = vmatpush.bf16.msra.mxu0 %v2228
      %2369 = vmatmul.f32.gmra.mxu0 %v1934
      %v2370 = vpop.f32.mrf.mxu0
      %v2371 = vadd.f32 %v2350, %v2370
      %2372 = vmatmul.f32.gmra.mxu0 %v1938
      %v2373 = vpop.f32.mrf.mxu0
      %v2374 = vadd.f32 %v2353, %v2373
      %2375 = vmatmul.f32.gmra.mxu0 %v1942
      %v2376 = vpop.f32.mrf.mxu0
      %v2377 = vadd.f32 %v2356, %v2376
      %2378 = vmatmul.f32.gmra.mxu0 %v1946
      %v2379 = vpop.f32.mrf.mxu0
      %v2380 = vadd.f32 %v2359, %v2379
      %2381 = vdwg.mxu0
      %2382 = vmatpush.bf16.msra.mxu0 %v2258
      %2383 = vmatpush.bf16.msra.mxu0 %v2256
      %2384 = vmatpush.bf16.msra.mxu0 %v2254
      %2385 = vmatpush.bf16.msra.mxu0 %v2252
      %2386 = vmatpush.bf16.msra.mxu0 %v2250
      %2387 = vmatpush.bf16.msra.mxu0 %v2248
      %2388 = vmatpush.bf16.msra.mxu0 %v2246
      %2389 = vmatpush.bf16.msra.mxu0 %v2244
      %2390 = vmatmul.f32.gmra.mxu0 %v1935
      %v2391 = vpop.f32.mrf.mxu0
      %v2392 = vadd.f32 %v2371, %v2391
      %2393 = vmatmul.f32.gmra.mxu0 %v1939
      %v2394 = vpop.f32.mrf.mxu0
      %v2395 = vadd.f32 %v2374, %v2394
      %2396 = vmatmul.f32.gmra.mxu0 %v1943
      %v2397 = vpop.f32.mrf.mxu0
      %v2398 = vadd.f32 %v2377, %v2397
      %2399 = vmatmul.f32.gmra.mxu0 %v1947
      %v2400 = vpop.f32.mrf.mxu0
      %v2401 = vadd.f32 %v2380, %v2400
      %2402 = vdwg.mxu0
      %2403 = vmatpush.bf16.msra.mxu0 %v2274
      %2404 = vmatpush.bf16.msra.mxu0 %v2272
      %2405 = vmatpush.bf16.msra.mxu0 %v2270
      %2406 = vmatpush.bf16.msra.mxu0 %v2268
      %2407 = vmatpush.bf16.msra.mxu0 %v2266
      %2408 = vmatpush.bf16.msra.mxu0 %v2264
      %2409 = vmatpush.bf16.msra.mxu0 %v2262
      %2410 = vmatpush.bf16.msra.mxu0 %v2260
      %2411 = vmatmul.f32.gmra.mxu0 %v1936
      %v2412 = vpop.f32.mrf.mxu0
      %v2413 = vadd.f32 %v2392, %v2412
      %2414 = vmatmul.f32.gmra.mxu0 %v1940
      %v2415 = vpop.f32.mrf.mxu0
      %v2416 = vadd.f32 %v2395, %v2415
      %2417 = vmatmul.f32.gmra.mxu0 %v1944
      %v2418 = vpop.f32.mrf.mxu0
      %v2419 = vadd.f32 %v2398, %v2418
      %2420 = vmatmul.f32.gmra.mxu0 %v1948
      %v2421 = vpop.f32.mrf.mxu0
      %v2422 = vadd.f32 %v2401, %v2421
      %2423 = vdwg.mxu0
      %2424 = vmatpush.bf16.msra.mxu0 %v2227
      %2425 = vmatpush.bf16.msra.mxu0 %v2225
      %2426 = vmatpush.bf16.msra.mxu0 %v2223
      %2427 = vmatpush.bf16.msra.mxu0 %v2221
      %2428 = vmatpush.bf16.msra.mxu0 %v2219
      %2429 = vmatpush.bf16.msra.mxu0 %v2217
      %2430 = vmatpush.bf16.msra.mxu0 %v2215
      %2431 = vmatpush.bf16.msra.mxu0 %v2213
      %2432 = vmatmul.f32.gmra.mxu0 %v1933
      %v2433 = vpop.f32.mrf.mxu0
      %v2434 = vadd.f32 %v2017, %v2433
      %2435 = vmatmul.f32.gmra.mxu0 %v1937
      %v2436 = vpop.f32.mrf.mxu0
      %v2437 = vadd.f32 %v2017, %v2436
      %2438 = vmatmul.f32.gmra.mxu0 %v1941
      %v2439 = vpop.f32.mrf.mxu0
      %v2440 = vadd.f32 %v2017, %v2439
      %2441 = vmatmul.f32.gmra.mxu0 %v1945
      %v2442 = vpop.f32.mrf.mxu0
      %v2443 = vadd.f32 %v2017, %v2442
      %2444 = vdwg.mxu0
      %2445 = vmatpush.bf16.msra.mxu0 %v2243
      %2446 = vmatpush.bf16.msra.mxu0 %v2241
      %2447 = vmatpush.bf16.msra.mxu0 %v2239
      %2448 = vmatpush.bf16.msra.mxu0 %v2237
      %2449 = vmatpush.bf16.msra.mxu0 %v2235
      %2450 = vmatpush.bf16.msra.mxu0 %v2233
      %2451 = vmatpush.bf16.msra.mxu0 %v2231
      %2452 = vmatpush.bf16.msra.mxu0 %v2229
      %2453 = vmatmul.f32.gmra.mxu0 %v1934
      %v2454 = vpop.f32.mrf.mxu0
      %v2455 = vadd.f32 %v2434, %v2454
      %2456 = vmatmul.f32.gmra.mxu0 %v1938
      %v2457 = vpop.f32.mrf.mxu0
      %v2458 = vadd.f32 %v2437, %v2457
      %2459 = vmatmul.f32.gmra.mxu0 %v1942
      %v2460 = vpop.f32.mrf.mxu0
      %v2461 = vadd.f32 %v2440, %v2460
      %2462 = vmatmul.f32.gmra.mxu0 %v1946
      %v2463 = vpop.f32.mrf.mxu0
      %v2464 = vadd.f32 %v2443, %v2463
      %2465 = vdwg.mxu0
      %2466 = vmatpush.bf16.msra.mxu0 %v2259
      %2467 = vmatpush.bf16.msra.mxu0 %v2257
      %2468 = vmatpush.bf16.msra.mxu0 %v2255
      %2469 = vmatpush.bf16.msra.mxu0 %v2253
      %2470 = vmatpush.bf16.msra.mxu0 %v2251
      %2471 = vmatpush.bf16.msra.mxu0 %v2249
      %2472 = vmatpush.bf16.msra.mxu0 %v2247
      %2473 = vmatpush.bf16.msra.mxu0 %v2245
      %2474 = vmatmul.f32.gmra.mxu0 %v1935
      %v2475 = vpop.f32.mrf.mxu0
      %v2476 = vadd.f32 %v2455, %v2475
      %2477 = vmatmul.f32.gmra.mxu0 %v1939
      %v2478 = vpop.f32.mrf.mxu0
      %v2479 = vadd.f32 %v2458, %v2478
      %2480 = vmatmul.f32.gmra.mxu0 %v1943
      %v2481 = vpop.f32.mrf.mxu0
      %v2482 = vadd.f32 %v2461, %v2481
      %2483 = vmatmul.f32.gmra.mxu0 %v1947
      %v2484 = vpop.f32.mrf.mxu0
      %v2485 = vadd.f32 %v2464, %v2484
      %2486 = vdwg.mxu0
      %2487 = vmatpush.bf16.msra.mxu0 %v2275
      %2488 = vmatpush.bf16.msra.mxu0 %v2273
      %2489 = vmatpush.bf16.msra.mxu0 %v2271
      %2490 = vmatpush.bf16.msra.mxu0 %v2269
      %2491 = vmatpush.bf16.msra.mxu0 %v2267
      %2492 = vmatpush.bf16.msra.mxu0 %v2265
      %2493 = vmatpush.bf16.msra.mxu0 %v2263
      %2494 = vmatpush.bf16.msra.mxu0 %v2261
      %2495 = vmatmul.f32.gmra.mxu0 %v1936
      %v2496 = vpop.f32.mrf.mxu0
      %v2497 = vadd.f32 %v2476, %v2496
      %2498 = vmatmul.f32.gmra.mxu0 %v1940
      %v2499 = vpop.f32.mrf.mxu0
      %v2500 = vadd.f32 %v2479, %v2499
      %2501 = vmatmul.f32.gmra.mxu0 %v1944
      %v2502 = vpop.f32.mrf.mxu0
      %v2503 = vadd.f32 %v2482, %v2502
      %2504 = vmatmul.f32.gmra.mxu0 %v1948
      %v2505 = vpop.f32.mrf.mxu0
      %v2506 = vadd.f32 %v2485, %v2505
      %2507 = vdwg.mxu0
      %v2508 = vmax.f32 %v2413, 0.0
      %v2509 = vmax.f32 %v2497, 0.0
      %v2510 = vmax.f32 %v2416, 0.0
      %v2511 = vmax.f32 %v2500, 0.0
      %v2512 = vmax.f32 %v2419, 0.0
      %v2513 = vmax.f32 %v2503, 0.0
      %v2514 = vmax.f32 %v2422, 0.0
      %v2515 = vmax.f32 %v2506, 0.0
      %v2516 = vld [vmem:[#allocation7 + $0x520] sm:$0xf]
      %v2517 = vld [vmem:[#allocation7 + $0x530] sm:$0xf]
      %v2518 = vld [vmem:[#allocation7 + $0x540] sm:$0xf]
      %v2519 = vld [vmem:[#allocation7 + $0x550] sm:$0xf]
      %v2520 = vld [vmem:[#allocation7 + $0x560] sm:$0xf]
      %v2521 = vld [vmem:[#allocation7 + $0x570] sm:$0xf]
      %v2522 = vld [vmem:[#allocation7 + $0x580] sm:$0xf]
      %v2523 = vld [vmem:[#allocation7 + $0x590] sm:$0xf]
      %v2524 = vld [vmem:[#allocation7 + $0x5a0] sm:$0xf]
      %v2525 = vld [vmem:[#allocation7 + $0x5b0] sm:$0xf]
      %v2526 = vld [vmem:[#allocation7 + $0x5c0] sm:$0xf]
      %v2527 = vld [vmem:[#allocation7 + $0x5d0] sm:$0xf]
      %v2528 = vld [vmem:[#allocation7 + $0x5e0] sm:$0xf]
      %v2529 = vld [vmem:[#allocation7 + $0x5f0] sm:$0xf]
      %v2530 = vld [vmem:[#allocation7 + $0x600] sm:$0xf]
      %v2531 = vld [vmem:[#allocation7 + $0x610] sm:$0xf]
      %v2532 = vld [vmem:[#allocation7 + $0x620] sm:$0xf]
      %v2533 = vld [vmem:[#allocation7 + $0x630] sm:$0xf]
      %v2534 = vld [vmem:[#allocation7 + $0x640] sm:$0xf]
      %v2535 = vld [vmem:[#allocation7 + $0x650] sm:$0xf]
      %v2536 = vld [vmem:[#allocation7 + $0x660] sm:$0xf]
      %v2537 = vld [vmem:[#allocation7 + $0x670] sm:$0xf]
      %v2538 = vld [vmem:[#allocation7 + $0x680] sm:$0xf]
      %v2539 = vld [vmem:[#allocation7 + $0x690] sm:$0xf]
      %v2540 = vld [vmem:[#allocation7 + $0x6a0] sm:$0xf]
      %v2541 = vld [vmem:[#allocation7 + $0x6b0] sm:$0xf]
      %v2542 = vld [vmem:[#allocation7 + $0x6c0] sm:$0xf]
      %v2543 = vld [vmem:[#allocation7 + $0x6d0] sm:$0xf]
      %v2544 = vld [vmem:[#allocation7 + $0x6e0] sm:$0xf]
      %v2545 = vld [vmem:[#allocation7 + $0x6f0] sm:$0xf]
      %v2546 = vld [vmem:[#allocation7 + $0x700] sm:$0xf]
      %v2547 = vld [vmem:[#allocation7 + $0x710] sm:$0xf]
      %v2548 = vld [vmem:[#allocation8 + $0x2] ss:$0 sm:$0xff]
      %v2581 = vunpack.c.l.b16 %v2516
      %v2582 = vunpack.c.l.b16 %v2517
      %v2583 = vunpack.c.l.b16 %v2518
      %v2584 = vunpack.c.l.b16 %v2519
      %v2585 = vunpack.c.l.b16 %v2520
      %v2586 = vunpack.c.l.b16 %v2521
      %v2587 = vunpack.c.l.b16 %v2522
      %v2588 = vunpack.c.l.b16 %v2523
      %v2589 = vunpack.c.l.b16 %v2524
      %v2590 = vunpack.c.l.b16 %v2525
      %v2591 = vunpack.c.l.b16 %v2526
      %v2592 = vunpack.c.l.b16 %v2527
      %v2593 = vunpack.c.l.b16 %v2528
      %v2594 = vunpack.c.l.b16 %v2529
      %v2595 = vunpack.c.l.b16 %v2530
      %v2596 = vunpack.c.l.b16 %v2531
      %v2597 = vunpack.c.l.b16 %v2532
      %v2598 = vunpack.c.l.b16 %v2533
      %v2599 = vunpack.c.l.b16 %v2534
      %v2600 = vunpack.c.l.b16 %v2535
      %v2601 = vunpack.c.l.b16 %v2536
      %v2602 = vunpack.c.l.b16 %v2537
      %v2603 = vunpack.c.l.b16 %v2538
      %v2604 = vunpack.c.l.b16 %v2539
      %v2605 = vunpack.c.l.b16 %v2540
      %v2606 = vunpack.c.l.b16 %v2541
      %v2607 = vunpack.c.l.b16 %v2542
      %v2608 = vunpack.c.l.b16 %v2543
      %v2609 = vunpack.c.l.b16 %v2544
      %v2610 = vunpack.c.l.b16 %v2545
      %v2611 = vunpack.c.l.b16 %v2546
      %v2612 = vunpack.c.l.b16 %v2547
      %v2613 = vpack.c.b16 %v2582, %v2581
      %v2614 = vpack.c.b16 %v2584, %v2583
      %v2615 = vpack.c.b16 %v2586, %v2585
      %v2616 = vpack.c.b16 %v2588, %v2587
      %v2617 = vpack.c.b16 %v2590, %v2589
      %v2618 = vpack.c.b16 %v2592, %v2591
      %v2619 = vpack.c.b16 %v2594, %v2593
      %v2620 = vpack.c.b16 %v2596, %v2595
      %v2621 = vpack.c.b16 %v2598, %v2597
      %v2622 = vpack.c.b16 %v2600, %v2599
      %v2623 = vpack.c.b16 %v2602, %v2601
      %v2624 = vpack.c.b16 %v2604, %v2603
      %v2625 = vpack.c.b16 %v2606, %v2605
      %v2626 = vpack.c.b16 %v2608, %v2607
      %v2627 = vpack.c.b16 %v2610, %v2609
      %v2628 = vpack.c.b16 %v2612, %v2611
      %2645 = vmatpush.bf16.msra.mxu0 %v2620
      %2646 = vmatpush.bf16.msra.mxu0 %v2619
      %2647 = vmatpush.bf16.msra.mxu0 %v2618
      %2648 = vmatpush.bf16.msra.mxu0 %v2617
      %2649 = vmatpush.bf16.msra.mxu0 %v2616
      %2650 = vmatpush.bf16.msra.mxu0 %v2615
      %2651 = vmatpush.bf16.msra.mxu0 %v2614
      %2652 = vmatpush.bf16.msra.mxu0 %v2613
      %2653 = vmatmul.f32.gmra.mxu0 %v2508
      %v2654 = vpop.f32.mrf.mxu0
      %v2655 = vadd.f32 %v2548, %v2654
      %2656 = vmatmul.f32.gmra.mxu0 %v2510
      %v2657 = vpop.f32.mrf.mxu0
      %v2658 = vadd.f32 %v2548, %v2657
      %2659 = vmatmul.f32.gmra.mxu0 %v2512
      %v2660 = vpop.f32.mrf.mxu0
      %v2661 = vadd.f32 %v2548, %v2660
      %2662 = vmatmul.f32.gmra.mxu0 %v2514
      %v2663 = vpop.f32.mrf.mxu0
      %v2664 = vadd.f32 %v2548, %v2663
      %2665 = vdwg.mxu0
      %2666 = vmatpush.bf16.msra.mxu0 %v2628
      %2667 = vmatpush.bf16.msra.mxu0 %v2627
      %2668 = vmatpush.bf16.msra.mxu0 %v2626
      %2669 = vmatpush.bf16.msra.mxu0 %v2625
      %2670 = vmatpush.bf16.msra.mxu0 %v2624
      %2671 = vmatpush.bf16.msra.mxu0 %v2623
      %2672 = vmatpush.bf16.msra.mxu0 %v2622
      %2673 = vmatpush.bf16.msra.mxu0 %v2621
      %2674 = vmatmul.f32.gmra.mxu0 %v2509
      %v2675 = vpop.f32.mrf.mxu0
      %v2676 = vadd.f32 %v2655, %v2675
      %2677 = vmatmul.f32.gmra.mxu0 %v2511
      %v2678 = vpop.f32.mrf.mxu0
      %v2679 = vadd.f32 %v2658, %v2678
      %2680 = vmatmul.f32.gmra.mxu0 %v2513
      %v2681 = vpop.f32.mrf.mxu0
      %v2682 = vadd.f32 %v2661, %v2681
      %2683 = vmatmul.f32.gmra.mxu0 %v2515
      %v2684 = vpop.f32.mrf.mxu0
      %v2685 = vadd.f32 %v2664, %v2684
      %2686 = vdwg.mxu0
      %v2687 = vmax.f32 %v2676, 0.0
      %v2688 = vmax.f32 %v2679, 0.0
      %v2689 = vmax.f32 %v2682, 0.0
      %v2690 = vmax.f32 %v2685, 0.0
      %v2691 = vld [vmem:[#allocation7 + $0x720] sm:$0xf]
      %v2692 = vld [vmem:[#allocation7 + $0x730] sm:$0xf]
      %v2693 = vld [vmem:[#allocation7 + $0x740] sm:$0xf]
      %v2694 = vld [vmem:[#allocation7 + $0x750] sm:$0xf]
      %v2695 = vld [vmem:[#allocation7 + $0x760] sm:$0xf]
      %v2696 = vld [vmem:[#allocation7 + $0x770] sm:$0xf]
      %v2697 = vld [vmem:[#allocation7 + $0x780] sm:$0xf]
      %v2698 = vld [vmem:[#allocation7 + $0x790] sm:$0xf]
      %v2699 = vld [vmem:[#allocation7 + $0x7a0] sm:$0xf]
      %v2700 = vld [vmem:[#allocation7 + $0x7b0] sm:$0xf]
      %v2701 = vld [vmem:[#allocation7 + $0x7c0] sm:$0xf]
      %v2702 = vld [vmem:[#allocation7 + $0x7d0] sm:$0xf]
      %v2703 = vld [vmem:[#allocation7 + $0x7e0] sm:$0xf]
      %v2704 = vld [vmem:[#allocation7 + $0x7f0] sm:$0xf]
      %v2705 = vld [vmem:[#allocation7 + $0x800] sm:$0xf]
      %v2706 = vld [vmem:[#allocation7 + $0x810] sm:$0xf]
      %v2707 = vld [vmem:[#allocation8 + $0x3] ss:$0 sm:$0xff]
      %v2724 = vunpack.c.l.b16 %v2691
      %v2725 = vunpack.c.l.b16 %v2692
      %v2726 = vunpack.c.l.b16 %v2693
      %v2727 = vunpack.c.l.b16 %v2694
      %v2728 = vunpack.c.l.b16 %v2695
      %v2729 = vunpack.c.l.b16 %v2696
      %v2730 = vunpack.c.l.b16 %v2697
      %v2731 = vunpack.c.l.b16 %v2698
      %v2732 = vunpack.c.l.b16 %v2699
      %v2733 = vunpack.c.l.b16 %v2700
      %v2734 = vunpack.c.l.b16 %v2701
      %v2735 = vunpack.c.l.b16 %v2702
      %v2736 = vunpack.c.l.b16 %v2703
      %v2737 = vunpack.c.l.b16 %v2704
      %v2738 = vunpack.c.l.b16 %v2705
      %v2739 = vunpack.c.l.b16 %v2706
      %v2740 = vpack.c.b16 %v2725, %v2724
      %v2741 = vpack.c.b16 %v2727, %v2726
      %v2742 = vpack.c.b16 %v2729, %v2728
      %v2743 = vpack.c.b16 %v2731, %v2730
      %v2744 = vpack.c.b16 %v2733, %v2732
      %v2745 = vpack.c.b16 %v2735, %v2734
      %v2746 = vpack.c.b16 %v2737, %v2736
      %v2747 = vpack.c.b16 %v2739, %v2738
      %2756 = vmatpush.bf16.msra.mxu0 %v2747
      %2757 = vmatpush.bf16.msra.mxu0 %v2746
      %2758 = vmatpush.bf16.msra.mxu0 %v2745
      %2759 = vmatpush.bf16.msra.mxu0 %v2744
      %2760 = vmatpush.bf16.msra.mxu0 %v2743
      %2761 = vmatpush.bf16.msra.mxu0 %v2742
      %2762 = vmatpush.bf16.msra.mxu0 %v2741
      %2763 = vmatpush.bf16.msra.mxu0 %v2740
      %2764 = vmatmul.f32.gmra.mxu0 %v2687
      %v2765 = vpop.f32.mrf.mxu0
      %v2766 = vadd.f32 %v2707, %v2765
      %2767 = vmatmul.f32.gmra.mxu0 %v2688
      %v2768 = vpop.f32.mrf.mxu0
      %v2769 = vadd.f32 %v2707, %v2768
      %2770 = vmatmul.f32.gmra.mxu0 %v2689
      %v2771 = vpop.f32.mrf.mxu0
      %v2772 = vadd.f32 %v2707, %v2771
      %2773 = vmatmul.f32.gmra.mxu0 %v2690
      %v2774 = vpop.f32.mrf.mxu0
      %v2775 = vadd.f32 %v2707, %v2774
      %2776 = vdwg.mxu0
      %v2777 = vmax.f32 %v2766, 0.0
      %v2778 = vmax.f32 %v2769, 0.0
      %v2779 = vmax.f32 %v2772, 0.0
      %v2780 = vmax.f32 %v2775, 0.0
      %v2781 = vld [vmem:[#allocation7 + $0x820] sm:$0xf]
      %v2782 = vld [vmem:[#allocation7 + $0x830] sm:$0xf]
      %v2783 = vld [vmem:[#allocation7 + $0x840] sm:$0xf]
      %v2784 = vld [vmem:[#allocation7 + $0x850] sm:$0xf]
      %v2785 = vld [vmem:[#allocation7 + $0x860] sm:$0xf]
      %v2786 = vld [vmem:[#allocation7 + $0x870] sm:$0xf]
      %v2787 = vld [vmem:[#allocation7 + $0x880] sm:$0xf]
      %v2788 = vld [vmem:[#allocation7 + $0x890] sm:$0xf]
      %v2789 = vld [vmem:[#allocation8 + $0x4] ss:$0 sm:$0xff]
      %v2798 = vunpack.c.l.b16 %v2781
      %v2799 = vunpack.c.l.b16 %v2782
      %v2800 = vunpack.c.l.b16 %v2783
      %v2801 = vunpack.c.l.b16 %v2784
      %v2802 = vunpack.c.l.b16 %v2785
      %v2803 = vunpack.c.l.b16 %v2786
      %v2804 = vunpack.c.l.b16 %v2787
      %v2805 = vunpack.c.l.b16 %v2788
      %v2806 = vpack.c.b16 %v2799, %v2798
      %v2807 = vpack.c.b16 %v2801, %v2800
      %v2808 = vpack.c.b16 %v2803, %v2802
      %v2809 = vpack.c.b16 %v2805, %v2804
      %vm2814 = vcmask 523264
      %v2816 = vsel %vm2814, %v2777, 0
      %v2819 = vsel %vm2814, %v2778, 0
      %v2822 = vsel %vm2814, %v2779, 0
      %v2825 = vsel %vm2814, %v2780, 0
      %2827 = vmatpush.bf16.msra.mxu0 0
      %2828 = vmatpush.bf16.msra.mxu0 0
      %2829 = vmatpush.bf16.msra.mxu0 0
      %2830 = vmatpush.bf16.msra.mxu0 0
      %2831 = vmatpush.bf16.msra.mxu0 %v2809
      %2832 = vmatpush.bf16.msra.mxu0 %v2808
      %2833 = vmatpush.bf16.msra.mxu0 %v2807
      %2834 = vmatpush.bf16.msra.mxu0 %v2806
      %2835 = vmatmul.f32.gmra.mxu0 %v2816
      %v2836 = vpop.f32.mrf.mxu0
      %v2837 = vadd.f32 %v2789, %v2836
      %2838 = vmatmul.f32.gmra.mxu0 %v2819
      %v2839 = vpop.f32.mrf.mxu0
      %v2840 = vadd.f32 %v2789, %v2839
      %2841 = vmatmul.f32.gmra.mxu0 %v2822
      %v2842 = vpop.f32.mrf.mxu0
      %v2843 = vadd.f32 %v2789, %v2842
      %2844 = vmatmul.f32.gmra.mxu0 %v2825
      %v2845 = vpop.f32.mrf.mxu0
      %v2846 = vadd.f32 %v2789, %v2845
      %2847 = vdwg.mxu0
      %v2848 = vmax.f32 %v2837, 0.0
      %v2849 = vmax.f32 %v2840, 0.0
      %v2850 = vmax.f32 %v2843, 0.0
      %v2851 = vmax.f32 %v2846, 0.0
      %v2852 = vld [vmem:[#allocation7 + $0x8a0] sm:$0xf]
      %v2853 = vld [vmem:[#allocation7 + $0x8b0] sm:$0xf]
      %v2854 = vld [vmem:[#allocation7 + $0x8c0] sm:$0xf]
      %v2855 = vld [vmem:[#allocation7 + $0x8d0] sm:$0xf]
      %v2856 = vld [vmem:[#allocation8 + $0x5] ss:$0 sm:$0xff]
      %v2861 = vunpack.c.l.b16 %v2852
      %v2862 = vunpack.c.l.b16 %v2853
      %v2863 = vunpack.c.l.b16 %v2854
      %v2864 = vunpack.c.l.b16 %v2855
      %v2865 = vpack.c.b16 %v2862, %v2861
      %v2866 = vpack.c.b16 %v2864, %v2863
      %vm2869 = vcmask 261120
      %v2871 = vsel %vm2869, %v2848, 0
      %v2874 = vsel %vm2869, %v2849, 0
      %v2877 = vsel %vm2869, %v2850, 0
      %v2880 = vsel %vm2869, %v2851, 0
      %2882 = vmatpush.bf16.msra.mxu0 0
      %2883 = vmatpush.bf16.msra.mxu0 0
      %2884 = vmatpush.bf16.msra.mxu0 0
      %2885 = vmatpush.bf16.msra.mxu0 0
      %2886 = vmatpush.bf16.msra.mxu0 0
      %2887 = vmatpush.bf16.msra.mxu0 0
      %2888 = vmatpush.bf16.msra.mxu0 %v2866
      %2889 = vmatpush.bf16.msra.mxu0 %v2865
      %2890 = vmatmul.f32.gmra.mxu0 %v2871
      %v2891 = vpop.f32.mrf.mxu0
      %v2892 = vadd.f32 %v2856, %v2891
      %2893 = vmatmul.f32.gmra.mxu0 %v2874
      %v2894 = vpop.f32.mrf.mxu0
      %v2895 = vadd.f32 %v2856, %v2894
      %2896 = vmatmul.f32.gmra.mxu0 %v2877
      %v2897 = vpop.f32.mrf.mxu0
      %v2898 = vadd.f32 %v2856, %v2897
      %2899 = vmatmul.f32.gmra.mxu0 %v2880
      %v2900 = vpop.f32.mrf.mxu0
      %v2901 = vadd.f32 %v2856, %v2900
      %2902 = vdwg.mxu0
      %vm2903 = vcmask 7168
      %2904 = vst.msk [vmem:[%s4] sm:$0xff] %vm2903, %v2892
      %2905 = vst.msk [vmem:[%s4 + $0x8] sm:$0xff] %vm2903, %v2895
      %2906 = vst.msk [vmem:[%s4 + $0x10] sm:$0xff] %vm2903, %v2898
      %2907 = vst.msk [vmem:[%s4 + $0x18] sm:$0xff] %vm2903, %v2901
    $region41: #{tpu_custom_call.1} parent=1 // pred_fallthru
      _
    // Predicated region
    $region42: #{tpu_custom_call.1} parent=1 // pred_check
      _
    $region43: #{tpu_custom_call.1} parent=1 // pred_check_branch
      %2909 = sbr.rel (0) target = $region45
    $region44: #{tpu_custom_call.1} parent=1 // pred_region
      _
    $region45: #{tpu_custom_call.1} parent=1 // pred_fallthru
      _
    // Predicated region
    $region46: #{tpu_custom_call.1} parent=1 // pred_check
      _
    $region47: #{tpu_custom_call.1} parent=1 // pred_check_branch
      %2911 = sbr.rel (0) target = $region49
    $region48: #{tpu_custom_call.1} parent=1 // pred_region
      _
    $region49: #{tpu_custom_call.1} parent=1 // pred_fallthru
      _
    %2912 = vsyncpa [#allocation4], 1
    %2913 = vsyncpa [#allocation6], 1
    %2914 = vsyncpa [#allocation9], 1

</llo_original>
